<compile_context>
chip_gen: v7x
topology: tpu7x:2x2x1
jax: 0.10.0
libtpu: 0.0.40
codegen_flags: <defaults>
</compile_context>

<pallas_src>
import jax
import jax.numpy as jnp
from jax.experimental import pallas as pl
from jax.experimental.pallas import tpu as pltpu


def make_decoder_call(N, Cf, Cc, Co, H, W, TH, dtype):
    """Builds the fused decoder pallas_call for static shapes."""
    Cin = Co + Cc
    Wp = W + 2          # source width + 1-col zero halo on each side
    EW = 8 * Wp         # width of the x8-upsampled (halo included) rows
    OW = 8 * W          # final output width

    def kernel(x0, x1, x2, c0, c1, c2,
               w1_ref, b1_ref, w2_ref, b2_ref, um_ref, o_ref):
        t = pl.program_id(1)                      # row-tile index
        w1 = w1_ref[...]                          # (Co, Cf)
        b1 = b1_ref[...]                          # (Co, 1)
        w2 = w2_ref[...]                          # (Co, 9*Cin)
        b2 = b2_ref[...]                          # (Co, 1)
        um = um_ref[...]                          # (Wp, EW)  0/1 upsample op

        # Valid padded columns are 1..W (cols 0 and W+1 are the zero halo of
        # the 3x3 conv in the upsampled domain -> conv1x1 output must be 0).
        col = jax.lax.broadcasted_iota(jnp.int32, (1, Wp), 1)
        col_mask = jnp.logical_and(col >= 1, col <= W).astype(jnp.float32)

        xb = (x0, x1, x2)
        cb = (c0, c1, c2)

        # E[j]: x8 width-upsampled (with halo) concat([conv1x1(x), code]) row
        # for padded source row (t*TH + j).  Built with an MXU matmul against
        # the constant 0/1 matrix `um` (no in-VMEM repeat/relayout needed).
        E = []
        for j in range(TH + 2):
            blk, row = j // TH, j % TH
            xr = xb[blk][0, row]                  # (Cf, Wp)
            cr = cb[blk][0, row]                  # (Cc, Wp)
            low = jnp.dot(w1, xr, preferred_element_type=jnp.float32) + b1
            p = t * TH + j                        # padded row == source row+1
            rv = jnp.logical_and(p >= 1, p <= H).astype(jnp.float32)
            low = low * col_mask * rv             # zero outside the image
            cat = jnp.concatenate([low, cr], axis=0)        # (Cin, Wp)
            E.append(jnp.dot(cat, um, preferred_element_type=jnp.float32))

        # Each source row -> 4 conv rows (x4 upsample phases) -> 8 output rows
        # (final x2 upsample = store each conv row twice).
        for lr in range(TH):
            for py in range(4):
                blocks = []
                for ky in range(3):
                    s = (py + ky - 1) // 4        # -1, 0 or +1 (floor div)
                    e = E[lr + s + 1]
                    for kx in range(3):
                        # fold the column tap into the x8-upsampled grid:
                        # column (Z + 8 + 2*(kx-1)) of E is exactly the source
                        # pixel the tap needs at final output column Z.
                        start = 8 + 2 * (kx - 1)
                        blocks.append(e[:, start:start + OW])
                pt = jnp.concatenate(blocks, axis=0)          # (9*Cin, OW)
                row8 = jnp.dot(w2, pt, preferred_element_type=jnp.float32) + b2
                row8 = row8.astype(o_ref.dtype)               # (Co, OW)
                r0 = 8 * lr + 2 * py
                o_ref[0, :, r0:r0 + 2, :] = jnp.broadcast_to(
                    row8[:, None, :], (Co, 2, OW))

    def xspec(d):
        return pl.BlockSpec((1, TH, Cf, Wp),
                            lambda n, t, d=d: (n, t + d, 0, 0))

    def cspec(d):
        return pl.BlockSpec((1, TH, Cc, Wp),
                            lambda n, t, d=d: (n, t + d, 0, 0))

    def cst(shape):
        return pl.BlockSpec(shape, lambda n, t: (0, 0))

    return pl.pallas_call(
        kernel,
        out_shape=jax.ShapeDtypeStruct((N, Co, 8 * H, 8 * W), dtype),
        grid_spec=pl.GridSpec(
            grid=(N, H // TH),
            in_specs=[xspec(0), xspec(1), xspec(2),
                      cspec(0), cspec(1), cspec(2),
                      cst((Co, Cf)), cst((Co, 1)),
                      cst((Co, 9 * Cin)), cst((Co, 1)),
                      cst((Wp, EW))],
            out_specs=pl.BlockSpec((1, Co, 8 * TH, 8 * W),
                                   lambda n, t: (n, 0, t, 0)),
        ),
        compiler_params=pltpu.CompilerParams(
            dimension_semantics=("parallel", "parallel")),
    )


def decoder_forward(x, code, params, rows_per_step=None):
    """Fused Pallas decoder.  x: (N, Cf, H, W), code: (N, Cc, H, W) NCHW."""
    N, Cf, H, W = x.shape
    Cc = code.shape[1]
    Co = params["b1"].shape[0]
    Cin = Co + Cc

    if rows_per_step is None:
        rows_per_step = next(th for th in (4, 2, 1) if H % th == 0)
    TH = rows_per_step
    assert H % TH == 0

    # Rows-major layout (N, rows, C, W) so each source row is a natural
    # (C, W) VMEM tile; 1 zero row/col of halo (the "same" padding of the 3x3
    # conv in the upsampled domain) plus extra zero rows so the shifted
    # row-block specs stay in bounds.  These pads touch only the SMALL
    # un-upsampled inputs.
    def prep(a):
        a = jnp.transpose(a, (0, 2, 1, 3)).astype(jnp.float32)
        return jnp.pad(a, ((0, 0), (1, 2 * TH - 1), (0, 0), (1, 1)))

    xr = prep(x)
    cr = prep(code)

    w1 = params["w1"].astype(jnp.float32)                       # (Co, Cf)
    b1 = params["b1"].reshape(Co, 1).astype(jnp.float32)
    # (3, 3, Cin, Co) HWIO -> (Co, 9*Cin), row-major over (ky, kx, ci): must
    # match the im2col block ordering inside the kernel.
    w2 = jnp.transpose(params["w2"], (3, 0, 1, 2)).reshape(
        Co, 9 * Cin).astype(jnp.float32)
    b2 = params["b2"].reshape(Co, 1).astype(jnp.float32)

    # 0/1 "nearest x8 width upsample with halo" operator: um[c, j] = (j//8==c)
    Wp = W + 2
    um = (jnp.arange(8 * Wp)[None, :] // 8
          == jnp.arange(Wp)[:, None]).astype(jnp.float32)

    call = make_decoder_call(N, Cf, Cc, Co, H, W, TH, jnp.float32)
    return call(xr, xr, xr, cr, cr, cr, w1, b1, w2, b2, um)


# ---------------------------------------------------------------------------
# Pure-JAX reference (no Pallas) for correctness checking.
# ---------------------------------------------------------------------------
def decoder_forward_ref(x, code, params):
    Co = params["b1"].shape[0]
    Cf = x.shape[1]

    def up(a, s):
        return jnp.repeat(jnp.repeat(a, s, axis=2), s, axis=3)

    w1 = params["w1"].reshape(Co, Cf, 1, 1)                     # OIHW
    low = jax.lax.conv_general_dilated(
        x, w1, (1, 1), "VALID",
        dimension_numbers=("NCHW", "OIHW", "NCHW"))
    low = low + params["b1"][None, :, None, None]
    cat = jnp.concatenate([up(low, 4), up(code, 4)], axis=1)
    w2 = jnp.transpose(params["w2"], (3, 2, 0, 1))              # HWIO -> OIHW
    out = jax.lax.conv_general_dilated(
        cat, w2, (1, 1), [(1, 1), (1, 1)],
        dimension_numbers=("NCHW", "OIHW", "NCHW"))
    out = out + params["b2"][None, :, None, None]
    return up(out, 2)


if __name__ == "__main__":
    # Small shapes: N=2, feature_in=6, code_in=4, out=8, spatial 8x8.
    N, Cf, Cc, Co, H, W = 2, 6, 4, 8, 8, 8

    key = jax.random.PRNGKey(0)
    k1, k2, k3, k4, k5, k6 = jax.random.split(key, 6)
    params = {
        "w1": 0.1 * jax.random.normal(k1, (Co, Cf), jnp.float32),
        "b1": 0.1 * jax.random.normal(k2, (Co,), jnp.float32),
        "w2": 0.1 * jax.random.normal(k3, (3, 3, Cc + Co, Co), jnp.float32),
        "b2": 0.1 * jax.random.normal(k4, (Co,), jnp.float32),
    }
    x = jax.random.normal(k5, (N, Cf, H, W), jnp.float32)
    code = jax.random.normal(k6, (N, Cc, H, W), jnp.float32)

    out = jax.block_until_ready(decoder_forward(x, code, params))
    assert out.shape == (N, Co, 8 * H, 8 * W), out.shape

    ref = jax.block_until_ready(decoder_forward_ref(x, code, params))
    max_err = float(jnp.max(jnp.abs(out - ref)))
    if not jnp.allclose(out, ref, atol=1e-3, rtol=1e-3):
        raise AssertionError(
            f"Pallas decoder output mismatch vs reference (max abs err {max_err})")

    print("KERNEL_OK")
</pallas_src>

<mosaic_0001>
module attributes {stable_mosaic.version = 11 : i64} {
  func.func @kernel(%arg0: i32, %arg1: i32, %arg2: memref<1x4x6x10xf32, #tpu.memory_space<vmem>>, %arg3: memref<1x4x6x10xf32, #tpu.memory_space<vmem>>, %arg4: memref<1x4x6x10xf32, #tpu.memory_space<vmem>>, %arg5: memref<1x4x4x10xf32, #tpu.memory_space<vmem>>, %arg6: memref<1x4x4x10xf32, #tpu.memory_space<vmem>>, %arg7: memref<1x4x4x10xf32, #tpu.memory_space<vmem>>, %arg8: memref<8x6xf32, #tpu.memory_space<vmem>>, %arg9: memref<8x1xf32, #tpu.memory_space<vmem>>, %arg10: memref<8x108xf32, #tpu.memory_space<vmem>>, %arg11: memref<8x1xf32, #tpu.memory_space<vmem>>, %arg12: memref<10x80xf32, #tpu.memory_space<vmem>>, %arg13: memref<1x8x32x64xf32, #tpu.memory_space<vmem>>) attributes {dimension_semantics = [#tpu.dimension_semantics<parallel>, #tpu.dimension_semantics<parallel>], iteration_bounds = array<i64: 2, 2>, scalar_prefetch = 0 : i64, scratch_operands = 0 : i64, tpu.core_type = #tpu.core_type<tc>, window_params = [{transform_indices = @transform_0, window_bounds = array<i64: 1, 4, 6, 10>}, {transform_indices = @transform_1, window_bounds = array<i64: 1, 4, 6, 10>}, {transform_indices = @transform_2, window_bounds = array<i64: 1, 4, 6, 10>}, {transform_indices = @transform_3, window_bounds = array<i64: 1, 4, 4, 10>}, {transform_indices = @transform_4, window_bounds = array<i64: 1, 4, 4, 10>}, {transform_indices = @transform_5, window_bounds = array<i64: 1, 4, 4, 10>}, {pipeline_mode = #tpu.pipeline_mode<synchronous>, transform_indices = @transform_6, window_bounds = array<i64: 8, 6>}, {pipeline_mode = #tpu.pipeline_mode<synchronous>, transform_indices = @transform_7, window_bounds = array<i64: 8, 1>}, {pipeline_mode = #tpu.pipeline_mode<synchronous>, transform_indices = @transform_8, window_bounds = array<i64: 8, 108>}, {pipeline_mode = #tpu.pipeline_mode<synchronous>, transform_indices = @transform_9, window_bounds = array<i64: 8, 1>}, {pipeline_mode = #tpu.pipeline_mode<synchronous>, transform_indices = @transform_10, window_bounds = array<i64: 10, 80>}, {transform_indices = @transform_11, window_bounds = array<i64: 1, 8, 32, 64>}]} {
    %c0 = arith.constant 0 : index
    %c0_0 = arith.constant 0 : index
    %0 = vector.load %arg8[%c0, %c0_0] : memref<8x6xf32, #tpu.memory_space<vmem>>, vector<8x6xf32>
    %c0_1 = arith.constant 0 : index
    %c0_2 = arith.constant 0 : index
    %1 = vector.load %arg9[%c0_1, %c0_2] : memref<8x1xf32, #tpu.memory_space<vmem>>, vector<8x1xf32>
    %c0_3 = arith.constant 0 : index
    %c0_4 = arith.constant 0 : index
    %2 = vector.load %arg10[%c0_3, %c0_4] : memref<8x108xf32, #tpu.memory_space<vmem>>, vector<8x108xf32>
    %c0_5 = arith.constant 0 : index
    %c0_6 = arith.constant 0 : index
    %3 = vector.load %arg11[%c0_5, %c0_6] : memref<8x1xf32, #tpu.memory_space<vmem>>, vector<8x1xf32>
    %c0_7 = arith.constant 0 : index
    %c0_8 = arith.constant 0 : index
    %4 = vector.load %arg12[%c0_7, %c0_8] : memref<10x80xf32, #tpu.memory_space<vmem>>, vector<10x80xf32>
    %5 = tpu.iota {dimensions = array<i32: 1>} : vector<1x10xi32>
    %c1_i32 = arith.constant 1 : i32
    %6 = vector.broadcast %c1_i32 : i32 to vector<1x10xi32>
    %7 = arith.cmpi sge, %5, %6 : vector<1x10xi32>
    %c8_i32 = arith.constant 8 : i32
    %8 = vector.broadcast %c8_i32 : i32 to vector<1x10xi32>
    %9 = arith.cmpi sle, %5, %8 : vector<1x10xi32>
    %10 = arith.andi %7, %9 : vector<1x10xi1>
    %11 = arith.extui %10 : vector<1x10xi1> to vector<1x10xi32>
    %12 = arith.sitofp %11 : vector<1x10xi32> to vector<1x10xf32>
    %c0_9 = arith.constant 0 : index
    %c0_10 = arith.constant 0 : index
    %c0_11 = arith.constant 0 : index
    %c0_12 = arith.constant 0 : index
    %13 = vector.load %arg2[%c0_9, %c0_10, %c0_11, %c0_12] : memref<1x4x6x10xf32, #tpu.memory_space<vmem>>, vector<1x1x6x10xf32>
    %14 = vector.shape_cast %13 : vector<1x1x6x10xf32> to vector<6x10xf32>
    %c0_13 = arith.constant 0 : index
    %c0_14 = arith.constant 0 : index
    %c0_15 = arith.constant 0 : index
    %c0_16 = arith.constant 0 : index
    %15 = vector.load %arg5[%c0_13, %c0_14, %c0_15, %c0_16] : memref<1x4x4x10xf32, #tpu.memory_space<vmem>>, vector<1x1x4x10xf32>
    %16 = vector.shape_cast %15 : vector<1x1x4x10xf32> to vector<4x10xf32>
    %cst = arith.constant dense<0.000000e+00> : vector<8x10xf32>
    %17 = tpu.matmul %0, %14, %cst {dimension_numbers = #tpu.dot_dimension_numbers<[1], [0], [0], [1], [0, 0, 1, 1], [], []>} : vector<8x6xf32>, vector<6x10xf32>, vector<8x10xf32> -> vector<8x10xf32>
    %18 = vector.broadcast %1 : vector<8x1xf32> to vector<8x10xf32>
    %19 = arith.addf %17, %18 : vector<8x10xf32>
    %c4_i32 = arith.constant 4 : i32
    %20 = arith.muli %arg1, %c4_i32 : i32
    %c0_i32 = arith.constant 0 : i32
    %21 = arith.addi %20, %c0_i32 : i32
    %c1_i32_17 = arith.constant 1 : i32
    %22 = arith.cmpi sge, %21, %c1_i32_17 : i32
    %c8_i32_18 = arith.constant 8 : i32
    %23 = arith.cmpi sle, %21, %c8_i32_18 : i32
    %24 = arith.andi %22, %23 : i1
    %25 = arith.extui %24 : i1 to i32
    %26 = arith.sitofp %25 : i32 to f32
    %27 = vector.broadcast %12 : vector<1x10xf32> to vector<8x10xf32>
    %28 = arith.mulf %19, %27 : vector<8x10xf32>
    %29 = vector.broadcast %26 : f32 to vector<8x10xf32>
    %30 = arith.mulf %28, %29 : vector<8x10xf32>
    %31 = tpu.concatenate %30, %16 in 0 : vector<8x10xf32>, vector<4x10xf32> -> vector<12x10xf32>
    %cst_19 = arith.constant dense<0.000000e+00> : vector<12x80xf32>
    %32 = tpu.matmul %31, %4, %cst_19 {dimension_numbers = #tpu.dot_dimension_numbers<[1], [0], [0], [1], [0, 0, 1, 1], [], []>} : vector<12x10xf32>, vector<10x80xf32>, vector<12x80xf32> -> vector<12x80xf32>
    %c0_20 = arith.constant 0 : index
    %c1 = arith.constant 1 : index
    %c0_21 = arith.constant 0 : index
    %c0_22 = arith.constant 0 : index
    %33 = vector.load %arg2[%c0_20, %c1, %c0_21, %c0_22] : memref<1x4x6x10xf32, #tpu.memory_space<vmem>>, vector<1x1x6x10xf32>
    %34 = vector.shape_cast %33 : vector<1x1x6x10xf32> to vector<6x10xf32>
    %c0_23 = arith.constant 0 : index
    %c1_24 = arith.constant 1 : index
    %c0_25 = arith.constant 0 : index
    %c0_26 = arith.constant 0 : index
    %35 = vector.load %arg5[%c0_23, %c1_24, %c0_25, %c0_26] : memref<1x4x4x10xf32, #tpu.memory_space<vmem>>, vector<1x1x4x10xf32>
    %36 = vector.shape_cast %35 : vector<1x1x4x10xf32> to vector<4x10xf32>
    %cst_27 = arith.constant dense<0.000000e+00> : vector<8x10xf32>
    %37 = tpu.matmul %0, %34, %cst_27 {dimension_numbers = #tpu.dot_dimension_numbers<[1], [0], [0], [1], [0, 0, 1, 1], [], []>} : vector<8x6xf32>, vector<6x10xf32>, vector<8x10xf32> -> vector<8x10xf32>
    %38 = vector.broadcast %1 : vector<8x1xf32> to vector<8x10xf32>
    %39 = arith.addf %37, %38 : vector<8x10xf32>
    %c4_i32_28 = arith.constant 4 : i32
    %40 = arith.muli %arg1, %c4_i32_28 : i32
    %c1_i32_29 = arith.constant 1 : i32
    %41 = arith.addi %40, %c1_i32_29 : i32
    %c1_i32_30 = arith.constant 1 : i32
    %42 = arith.cmpi sge, %41, %c1_i32_30 : i32
    %c8_i32_31 = arith.constant 8 : i32
    %43 = arith.cmpi sle, %41, %c8_i32_31 : i32
    %44 = arith.andi %42, %43 : i1
    %45 = arith.extui %44 : i1 to i32
    %46 = arith.sitofp %45 : i32 to f32
    %47 = vector.broadcast %12 : vector<1x10xf32> to vector<8x10xf32>
    %48 = arith.mulf %39, %47 : vector<8x10xf32>
    %49 = vector.broadcast %46 : f32 to vector<8x10xf32>
    %50 = arith.mulf %48, %49 : vector<8x10xf32>
    %51 = tpu.concatenate %50, %36 in 0 : vector<8x10xf32>, vector<4x10xf32> -> vector<12x10xf32>
    %cst_32 = arith.constant dense<0.000000e+00> : vector<12x80xf32>
    %52 = tpu.matmul %51, %4, %cst_32 {dimension_numbers = #tpu.dot_dimension_numbers<[1], [0], [0], [1], [0, 0, 1, 1], [], []>} : vector<12x10xf32>, vector<10x80xf32>, vector<12x80xf32> -> vector<12x80xf32>
    %c0_33 = arith.constant 0 : index
    %c2 = arith.constant 2 : index
    %c0_34 = arith.constant 0 : index
    %c0_35 = arith.constant 0 : index
    %53 = vector.load %arg2[%c0_33, %c2, %c0_34, %c0_35] : memref<1x4x6x10xf32, #tpu.memory_space<vmem>>, vector<1x1x6x10xf32>
    %54 = vector.shape_cast %53 : vector<1x1x6x10xf32> to vector<6x10xf32>
    %c0_36 = arith.constant 0 : index
    %c2_37 = arith.constant 2 : index
    %c0_38 = arith.constant 0 : index
    %c0_39 = arith.constant 0 : index
    %55 = vector.load %arg5[%c0_36, %c2_37, %c0_38, %c0_39] : memref<1x4x4x10xf32, #tpu.memory_space<vmem>>, vector<1x1x4x10xf32>
    %56 = vector.shape_cast %55 : vector<1x1x4x10xf32> to vector<4x10xf32>
    %cst_40 = arith.constant dense<0.000000e+00> : vector<8x10xf32>
    %57 = tpu.matmul %0, %54, %cst_40 {dimension_numbers = #tpu.dot_dimension_numbers<[1], [0], [0], [1], [0, 0, 1, 1], [], []>} : vector<8x6xf32>, vector<6x10xf32>, vector<8x10xf32> -> vector<8x10xf32>
    %58 = vector.broadcast %1 : vector<8x1xf32> to vector<8x10xf32>
    %59 = arith.addf %57, %58 : vector<8x10xf32>
    %c4_i32_41 = arith.constant 4 : i32
    %60 = arith.muli %arg1, %c4_i32_41 : i32
    %c2_i32 = arith.constant 2 : i32
    %61 = arith.addi %60, %c2_i32 : i32
    %c1_i32_42 = arith.constant 1 : i32
    %62 = arith.cmpi sge, %61, %c1_i32_42 : i32
    %c8_i32_43 = arith.constant 8 : i32
    %63 = arith.cmpi sle, %61, %c8_i32_43 : i32
    %64 = arith.andi %62, %63 : i1
    %65 = arith.extui %64 : i1 to i32
    %66 = arith.sitofp %65 : i32 to f32
    %67 = vector.broadcast %12 : vector<1x10xf32> to vector<8x10xf32>
    %68 = arith.mulf %59, %67 : vector<8x10xf32>
    %69 = vector.broadcast %66 : f32 to vector<8x10xf32>
    %70 = arith.mulf %68, %69 : vector<8x10xf32>
    %71 = tpu.concatenate %70, %56 in 0 : vector<8x10xf32>, vector<4x10xf32> -> vector<12x10xf32>
    %cst_44 = arith.constant dense<0.000000e+00> : vector<12x80xf32>
    %72 = tpu.matmul %71, %4, %cst_44 {dimension_numbers = #tpu.dot_dimension_numbers<[1], [0], [0], [1], [0, 0, 1, 1], [], []>} : vector<12x10xf32>, vector<10x80xf32>, vector<12x80xf32> -> vector<12x80xf32>
    %c0_45 = arith.constant 0 : index
    %c3 = arith.constant 3 : index
    %c0_46 = arith.constant 0 : index
    %c0_47 = arith.constant 0 : index
    %73 = vector.load %arg2[%c0_45, %c3, %c0_46, %c0_47] : memref<1x4x6x10xf32, #tpu.memory_space<vmem>>, vector<1x1x6x10xf32>
    %74 = vector.shape_cast %73 : vector<1x1x6x10xf32> to vector<6x10xf32>
    %c0_48 = arith.constant 0 : index
    %c3_49 = arith.constant 3 : index
    %c0_50 = arith.constant 0 : index
    %c0_51 = arith.constant 0 : index
    %75 = vector.load %arg5[%c0_48, %c3_49, %c0_50, %c0_51] : memref<1x4x4x10xf32, #tpu.memory_space<vmem>>, vector<1x1x4x10xf32>
    %76 = vector.shape_cast %75 : vector<1x1x4x10xf32> to vector<4x10xf32>
    %cst_52 = arith.constant dense<0.000000e+00> : vector<8x10xf32>
    %77 = tpu.matmul %0, %74, %cst_52 {dimension_numbers = #tpu.dot_dimension_numbers<[1], [0], [0], [1], [0, 0, 1, 1], [], []>} : vector<8x6xf32>, vector<6x10xf32>, vector<8x10xf32> -> vector<8x10xf32>
    %78 = vector.broadcast %1 : vector<8x1xf32> to vector<8x10xf32>
    %79 = arith.addf %77, %78 : vector<8x10xf32>
    %c4_i32_53 = arith.constant 4 : i32
    %80 = arith.muli %arg1, %c4_i32_53 : i32
    %c3_i32 = arith.constant 3 : i32
    %81 = arith.addi %80, %c3_i32 : i32
    %c1_i32_54 = arith.constant 1 : i32
    %82 = arith.cmpi sge, %81, %c1_i32_54 : i32
    %c8_i32_55 = arith.constant 8 : i32
    %83 = arith.cmpi sle, %81, %c8_i32_55 : i32
    %84 = arith.andi %82, %83 : i1
    %85 = arith.extui %84 : i1 to i32
    %86 = arith.sitofp %85 : i32 to f32
    %87 = vector.broadcast %12 : vector<1x10xf32> to vector<8x10xf32>
    %88 = arith.mulf %79, %87 : vector<8x10xf32>
    %89 = vector.broadcast %86 : f32 to vector<8x10xf32>
    %90 = arith.mulf %88, %89 : vector<8x10xf32>
    %91 = tpu.concatenate %90, %76 in 0 : vector<8x10xf32>, vector<4x10xf32> -> vector<12x10xf32>
    %cst_56 = arith.constant dense<0.000000e+00> : vector<12x80xf32>
    %92 = tpu.matmul %91, %4, %cst_56 {dimension_numbers = #tpu.dot_dimension_numbers<[1], [0], [0], [1], [0, 0, 1, 1], [], []>} : vector<12x10xf32>, vector<10x80xf32>, vector<12x80xf32> -> vector<12x80xf32>
    %c0_57 = arith.constant 0 : index
    %c0_58 = arith.constant 0 : index
    %c0_59 = arith.constant 0 : index
    %c0_60 = arith.constant 0 : index
    %93 = vector.load %arg3[%c0_57, %c0_58, %c0_59, %c0_60] : memref<1x4x6x10xf32, #tpu.memory_space<vmem>>, vector<1x1x6x10xf32>
    %94 = vector.shape_cast %93 : vector<1x1x6x10xf32> to vector<6x10xf32>
    %c0_61 = arith.constant 0 : index
    %c0_62 = arith.constant 0 : index
    %c0_63 = arith.constant 0 : index
    %c0_64 = arith.constant 0 : index
    %95 = vector.load %arg6[%c0_61, %c0_62, %c0_63, %c0_64] : memref<1x4x4x10xf32, #tpu.memory_space<vmem>>, vector<1x1x4x10xf32>
    %96 = vector.shape_cast %95 : vector<1x1x4x10xf32> to vector<4x10xf32>
    %cst_65 = arith.constant dense<0.000000e+00> : vector<8x10xf32>
    %97 = tpu.matmul %0, %94, %cst_65 {dimension_numbers = #tpu.dot_dimension_numbers<[1], [0], [0], [1], [0, 0, 1, 1], [], []>} : vector<8x6xf32>, vector<6x10xf32>, vector<8x10xf32> -> vector<8x10xf32>
    %98 = vector.broadcast %1 : vector<8x1xf32> to vector<8x10xf32>
    %99 = arith.addf %97, %98 : vector<8x10xf32>
    %c4_i32_66 = arith.constant 4 : i32
    %100 = arith.muli %arg1, %c4_i32_66 : i32
    %c4_i32_67 = arith.constant 4 : i32
    %101 = arith.addi %100, %c4_i32_67 : i32
    %c1_i32_68 = arith.constant 1 : i32
    %102 = arith.cmpi sge, %101, %c1_i32_68 : i32
    %c8_i32_69 = arith.constant 8 : i32
    %103 = arith.cmpi sle, %101, %c8_i32_69 : i32
    %104 = arith.andi %102, %103 : i1
    %105 = arith.extui %104 : i1 to i32
    %106 = arith.sitofp %105 : i32 to f32
    %107 = vector.broadcast %12 : vector<1x10xf32> to vector<8x10xf32>
    %108 = arith.mulf %99, %107 : vector<8x10xf32>
    %109 = vector.broadcast %106 : f32 to vector<8x10xf32>
    %110 = arith.mulf %108, %109 : vector<8x10xf32>
    %111 = tpu.concatenate %110, %96 in 0 : vector<8x10xf32>, vector<4x10xf32> -> vector<12x10xf32>
    %cst_70 = arith.constant dense<0.000000e+00> : vector<12x80xf32>
    %112 = tpu.matmul %111, %4, %cst_70 {dimension_numbers = #tpu.dot_dimension_numbers<[1], [0], [0], [1], [0, 0, 1, 1], [], []>} : vector<12x10xf32>, vector<10x80xf32>, vector<12x80xf32> -> vector<12x80xf32>
    %c0_71 = arith.constant 0 : index
    %c1_72 = arith.constant 1 : index
    %c0_73 = arith.constant 0 : index
    %c0_74 = arith.constant 0 : index
    %113 = vector.load %arg3[%c0_71, %c1_72, %c0_73, %c0_74] : memref<1x4x6x10xf32, #tpu.memory_space<vmem>>, vector<1x1x6x10xf32>
    %114 = vector.shape_cast %113 : vector<1x1x6x10xf32> to vector<6x10xf32>
    %c0_75 = arith.constant 0 : index
    %c1_76 = arith.constant 1 : index
    %c0_77 = arith.constant 0 : index
    %c0_78 = arith.constant 0 : index
    %115 = vector.load %arg6[%c0_75, %c1_76, %c0_77, %c0_78] : memref<1x4x4x10xf32, #tpu.memory_space<vmem>>, vector<1x1x4x10xf32>
    %116 = vector.shape_cast %115 : vector<1x1x4x10xf32> to vector<4x10xf32>
    %cst_79 = arith.constant dense<0.000000e+00> : vector<8x10xf32>
    %117 = tpu.matmul %0, %114, %cst_79 {dimension_numbers = #tpu.dot_dimension_numbers<[1], [0], [0], [1], [0, 0, 1, 1], [], []>} : vector<8x6xf32>, vector<6x10xf32>, vector<8x10xf32> -> vector<8x10xf32>
    %118 = vector.broadcast %1 : vector<8x1xf32> to vector<8x10xf32>
    %119 = arith.addf %117, %118 : vector<8x10xf32>
    %c4_i32_80 = arith.constant 4 : i32
    %120 = arith.muli %arg1, %c4_i32_80 : i32
    %c5_i32 = arith.constant 5 : i32
    %121 = arith.addi %120, %c5_i32 : i32
    %c1_i32_81 = arith.constant 1 : i32
    %122 = arith.cmpi sge, %121, %c1_i32_81 : i32
    %c8_i32_82 = arith.constant 8 : i32
    %123 = arith.cmpi sle, %121, %c8_i32_82 : i32
    %124 = arith.andi %122, %123 : i1
    %125 = arith.extui %124 : i1 to i32
    %126 = arith.sitofp %125 : i32 to f32
    %127 = vector.broadcast %12 : vector<1x10xf32> to vector<8x10xf32>
    %128 = arith.mulf %119, %127 : vector<8x10xf32>
    %129 = vector.broadcast %126 : f32 to vector<8x10xf32>
    %130 = arith.mulf %128, %129 : vector<8x10xf32>
    %131 = tpu.concatenate %130, %116 in 0 : vector<8x10xf32>, vector<4x10xf32> -> vector<12x10xf32>
    %cst_83 = arith.constant dense<0.000000e+00> : vector<12x80xf32>
    %132 = tpu.matmul %131, %4, %cst_83 {dimension_numbers = #tpu.dot_dimension_numbers<[1], [0], [0], [1], [0, 0, 1, 1], [], []>} : vector<12x10xf32>, vector<10x80xf32>, vector<12x80xf32> -> vector<12x80xf32>
    %133 = vector.extract_strided_slice %32 {offsets = [0, 6], sizes = [12, 64], strides = [1, 1]} : vector<12x80xf32> to vector<12x64xf32>
    %134 = vector.extract_strided_slice %32 {offsets = [0, 8], sizes = [12, 64], strides = [1, 1]} : vector<12x80xf32> to vector<12x64xf32>
    %135 = vector.extract_strided_slice %32 {offsets = [0, 10], sizes = [12, 64], strides = [1, 1]} : vector<12x80xf32> to vector<12x64xf32>
    %136 = vector.extract_strided_slice %52 {offsets = [0, 6], sizes = [12, 64], strides = [1, 1]} : vector<12x80xf32> to vector<12x64xf32>
    %137 = vector.extract_strided_slice %52 {offsets = [0, 8], sizes = [12, 64], strides = [1, 1]} : vector<12x80xf32> to vector<12x64xf32>
    %138 = vector.extract_strided_slice %52 {offsets = [0, 10], sizes = [12, 64], strides = [1, 1]} : vector<12x80xf32> to vector<12x64xf32>
    %139 = vector.extract_strided_slice %52 {offsets = [0, 6], sizes = [12, 64], strides = [1, 1]} : vector<12x80xf32> to vector<12x64xf32>
    %140 = vector.extract_strided_slice %52 {offsets = [0, 8], sizes = [12, 64], strides = [1, 1]} : vector<12x80xf32> to vector<12x64xf32>
    %141 = vector.extract_strided_slice %52 {offsets = [0, 10], sizes = [12, 64], strides = [1, 1]} : vector<12x80xf32> to vector<12x64xf32>
    %142 = tpu.concatenate %133, %134, %135, %136, %137, %138, %139, %140, %141 in 0 : vector<12x64xf32>, vector<12x64xf32>, vector<12x64xf32>, vector<12x64xf32>, vector<12x64xf32>, vector<12x64xf32>, vector<12x64xf32>, vector<12x64xf32>, vector<12x64xf32> -> vector<108x64xf32>
    %cst_84 = arith.constant dense<0.000000e+00> : vector<8x64xf32>
    %143 = tpu.matmul %2, %142, %cst_84 {dimension_numbers = #tpu.dot_dimension_numbers<[1], [0], [0], [1], [0, 0, 1, 1], [], []>} : vector<8x108xf32>, vector<108x64xf32>, vector<8x64xf32> -> vector<8x64xf32>
    %144 = vector.broadcast %3 : vector<8x1xf32> to vector<8x64xf32>
    %145 = arith.addf %143, %144 : vector<8x64xf32>
    %146 = vector.shape_cast %145 : vector<8x64xf32> to vector<8x1x64xf32>
    %147 = vector.shape_cast %146 : vector<8x1x64xf32> to vector<8x1x64xf32>
    %148 = vector.broadcast %147 : vector<8x1x64xf32> to vector<8x2x64xf32>
    %c0_85 = arith.constant 0 : index
    %c0_86 = arith.constant 0 : index
    %c0_87 = arith.constant 0 : index
    %c0_88 = arith.constant 0 : index
    %149 = vector.load %arg13[%c0_85, %c0_86, %c0_87, %c0_88] : memref<1x8x32x64xf32, #tpu.memory_space<vmem>>, vector<1x8x2x64xf32>
    %150 = vector.shape_cast %149 : vector<1x8x2x64xf32> to vector<8x2x64xf32>
    %151 = vector.shape_cast %148 : vector<8x2x64xf32> to vector<1x8x2x64xf32>
    tpu.vector_store %arg13[%c0_85, %c0_86, %c0_87, %c0_88], %151 {strides = array<i32>} : memref<1x8x32x64xf32, #tpu.memory_space<vmem>>, vector<1x8x2x64xf32>,
    %152 = vector.extract_strided_slice %52 {offsets = [0, 6], sizes = [12, 64], strides = [1, 1]} : vector<12x80xf32> to vector<12x64xf32>
    %153 = vector.extract_strided_slice %52 {offsets = [0, 8], sizes = [12, 64], strides = [1, 1]} : vector<12x80xf32> to vector<12x64xf32>
    %154 = vector.extract_strided_slice %52 {offsets = [0, 10], sizes = [12, 64], strides = [1, 1]} : vector<12x80xf32> to vector<12x64xf32>
    %155 = vector.extract_strided_slice %52 {offsets = [0, 6], sizes = [12, 64], strides = [1, 1]} : vector<12x80xf32> to vector<12x64xf32>
    %156 = vector.extract_strided_slice %52 {offsets = [0, 8], sizes = [12, 64], strides = [1, 1]} : vector<12x80xf32> to vector<12x64xf32>
    %157 = vector.extract_strided_slice %52 {offsets = [0, 10], sizes = [12, 64], strides = [1, 1]} : vector<12x80xf32> to vector<12x64xf32>
    %158 = vector.extract_strided_slice %52 {offsets = [0, 6], sizes = [12, 64], strides = [1, 1]} : vector<12x80xf32> to vector<12x64xf32>
    %159 = vector.extract_strided_slice %52 {offsets = [0, 8], sizes = [12, 64], strides = [1, 1]} : vector<12x80xf32> to vector<12x64xf32>
    %160 = vector.extract_strided_slice %52 {offsets = [0, 10], sizes = [12, 64], strides = [1, 1]} : vector<12x80xf32> to vector<12x64xf32>
    %161 = tpu.concatenate %152, %153, %154, %155, %156, %157, %158, %159, %160 in 0 : vector<12x64xf32>, vector<12x64xf32>, vector<12x64xf32>, vector<12x64xf32>, vector<12x64xf32>, vector<12x64xf32>, vector<12x64xf32>, vector<12x64xf32>, vector<12x64xf32> -> vector<108x64xf32>
    %cst_89 = arith.constant dense<0.000000e+00> : vector<8x64xf32>
    %162 = tpu.matmul %2, %161, %cst_89 {dimension_numbers = #tpu.dot_dimension_numbers<[1], [0], [0], [1], [0, 0, 1, 1], [], []>} : vector<8x108xf32>, vector<108x64xf32>, vector<8x64xf32> -> vector<8x64xf32>
    %163 = vector.broadcast %3 : vector<8x1xf32> to vector<8x64xf32>
    %164 = arith.addf %162, %163 : vector<8x64xf32>
    %165 = vector.shape_cast %164 : vector<8x64xf32> to vector<8x1x64xf32>
    %166 = vector.shape_cast %165 : vector<8x1x64xf32> to vector<8x1x64xf32>
    %167 = vector.broadcast %166 : vector<8x1x64xf32> to vector<8x2x64xf32>
    %c0_90 = arith.constant 0 : index
    %c0_91 = arith.constant 0 : index
    %c2_92 = arith.constant 2 : index
    %c0_93 = arith.constant 0 : index
    %168 = vector.load %arg13[%c0_90, %c0_91, %c2_92, %c0_93] : memref<1x8x32x64xf32, #tpu.memory_space<vmem>>, vector<1x8x2x64xf32>
    %169 = vector.shape_cast %168 : vector<1x8x2x64xf32> to vector<8x2x64xf32>
    %170 = vector.shape_cast %167 : vector<8x2x64xf32> to vector<1x8x2x64xf32>
    tpu.vector_store %arg13[%c0_90, %c0_91, %c2_92, %c0_93], %170 {strides = array<i32>} : memref<1x8x32x64xf32, #tpu.memory_space<vmem>>, vector<1x8x2x64xf32>,
    %171 = vector.extract_strided_slice %52 {offsets = [0, 6], sizes = [12, 64], strides = [1, 1]} : vector<12x80xf32> to vector<12x64xf32>
    %172 = vector.extract_strided_slice %52 {offsets = [0, 8], sizes = [12, 64], strides = [1, 1]} : vector<12x80xf32> to vector<12x64xf32>
    %173 = vector.extract_strided_slice %52 {offsets = [0, 10], sizes = [12, 64], strides = [1, 1]} : vector<12x80xf32> to vector<12x64xf32>
    %174 = vector.extract_strided_slice %52 {offsets = [0, 6], sizes = [12, 64], strides = [1, 1]} : vector<12x80xf32> to vector<12x64xf32>
    %175 = vector.extract_strided_slice %52 {offsets = [0, 8], sizes = [12, 64], strides = [1, 1]} : vector<12x80xf32> to vector<12x64xf32>
    %176 = vector.extract_strided_slice %52 {offsets = [0, 10], sizes = [12, 64], strides = [1, 1]} : vector<12x80xf32> to vector<12x64xf32>
    %177 = vector.extract_strided_slice %52 {offsets = [0, 6], sizes = [12, 64], strides = [1, 1]} : vector<12x80xf32> to vector<12x64xf32>
    %178 = vector.extract_strided_slice %52 {offsets = [0, 8], sizes = [12, 64], strides = [1, 1]} : vector<12x80xf32> to vector<12x64xf32>
    %179 = vector.extract_strided_slice %52 {offsets = [0, 10], sizes = [12, 64], strides = [1, 1]} : vector<12x80xf32> to vector<12x64xf32>
    %180 = tpu.concatenate %171, %172, %173, %174, %175, %176, %177, %178, %179 in 0 : vector<12x64xf32>, vector<12x64xf32>, vector<12x64xf32>, vector<12x64xf32>, vector<12x64xf32>, vector<12x64xf32>, vector<12x64xf32>, vector<12x64xf32>, vector<12x64xf32> -> vector<108x64xf32>
    %cst_94 = arith.constant dense<0.000000e+00> : vector<8x64xf32>
    %181 = tpu.matmul %2, %180, %cst_94 {dimension_numbers = #tpu.dot_dimension_numbers<[1], [0], [0], [1], [0, 0, 1, 1], [], []>} : vector<8x108xf32>, vector<108x64xf32>, vector<8x64xf32> -> vector<8x64xf32>
    %182 = vector.broadcast %3 : vector<8x1xf32> to vector<8x64xf32>
    %183 = arith.addf %181, %182 : vector<8x64xf32>
    %184 = vector.shape_cast %183 : vector<8x64xf32> to vector<8x1x64xf32>
    %185 = vector.shape_cast %184 : vector<8x1x64xf32> to vector<8x1x64xf32>
    %186 = vector.broadcast %185 : vector<8x1x64xf32> to vector<8x2x64xf32>
    %c0_95 = arith.constant 0 : index
    %c0_96 = arith.constant 0 : index
    %c4 = arith.constant 4 : index
    %c0_97 = arith.constant 0 : index
    %187 = vector.load %arg13[%c0_95, %c0_96, %c4, %c0_97] : memref<1x8x32x64xf32, #tpu.memory_space<vmem>>, vector<1x8x2x64xf32>
    %188 = vector.shape_cast %187 : vector<1x8x2x64xf32> to vector<8x2x64xf32>
    %189 = vector.shape_cast %186 : vector<8x2x64xf32> to vector<1x8x2x64xf32>
    tpu.vector_store %arg13[%c0_95, %c0_96, %c4, %c0_97], %189 {strides = array<i32>} : memref<1x8x32x64xf32, #tpu.memory_space<vmem>>, vector<1x8x2x64xf32>,
    %190 = vector.extract_strided_slice %52 {offsets = [0, 6], sizes = [12, 64], strides = [1, 1]} : vector<12x80xf32> to vector<12x64xf32>
    %191 = vector.extract_strided_slice %52 {offsets = [0, 8], sizes = [12, 64], strides = [1, 1]} : vector<12x80xf32> to vector<12x64xf32>
    %192 = vector.extract_strided_slice %52 {offsets = [0, 10], sizes = [12, 64], strides = [1, 1]} : vector<12x80xf32> to vector<12x64xf32>
    %193 = vector.extract_strided_slice %52 {offsets = [0, 6], sizes = [12, 64], strides = [1, 1]} : vector<12x80xf32> to vector<12x64xf32>
    %194 = vector.extract_strided_slice %52 {offsets = [0, 8], sizes = [12, 64], strides = [1, 1]} : vector<12x80xf32> to vector<12x64xf32>
    %195 = vector.extract_strided_slice %52 {offsets = [0, 10], sizes = [12, 64], strides = [1, 1]} : vector<12x80xf32> to vector<12x64xf32>
    %196 = vector.extract_strided_slice %72 {offsets = [0, 6], sizes = [12, 64], strides = [1, 1]} : vector<12x80xf32> to vector<12x64xf32>
    %197 = vector.extract_strided_slice %72 {offsets = [0, 8], sizes = [12, 64], strides = [1, 1]} : vector<12x80xf32> to vector<12x64xf32>
    %198 = vector.extract_strided_slice %72 {offsets = [0, 10], sizes = [12, 64], strides = [1, 1]} : vector<12x80xf32> to vector<12x64xf32>
    %199 = tpu.concatenate %190, %191, %192, %193, %194, %195, %196, %197, %198 in 0 : vector<12x64xf32>, vector<12x64xf32>, vector<12x64xf32>, vector<12x64xf32>, vector<12x64xf32>, vector<12x64xf32>, vector<12x64xf32>, vector<12x64xf32>, vector<12x64xf32> -> vector<108x64xf32>
    %cst_98 = arith.constant dense<0.000000e+00> : vector<8x64xf32>
    %200 = tpu.matmul %2, %199, %cst_98 {dimension_numbers = #tpu.dot_dimension_numbers<[1], [0], [0], [1], [0, 0, 1, 1], [], []>} : vector<8x108xf32>, vector<108x64xf32>, vector<8x64xf32> -> vector<8x64xf32>
    %201 = vector.broadcast %3 : vector<8x1xf32> to vector<8x64xf32>
    %202 = arith.addf %200, %201 : vector<8x64xf32>
    %203 = vector.shape_cast %202 : vector<8x64xf32> to vector<8x1x64xf32>
    %204 = vector.shape_cast %203 : vector<8x1x64xf32> to vector<8x1x64xf32>
    %205 = vector.broadcast %204 : vector<8x1x64xf32> to vector<8x2x64xf32>
    %c0_99 = arith.constant 0 : index
    %c0_100 = arith.constant 0 : index
    %c6 = arith.constant 6 : index
    %c0_101 = arith.constant 0 : index
    %206 = vector.load %arg13[%c0_99, %c0_100, %c6, %c0_101] : memref<1x8x32x64xf32, #tpu.memory_space<vmem>>, vector<1x8x2x64xf32>
    %207 = vector.shape_cast %206 : vector<1x8x2x64xf32> to vector<8x2x64xf32>
    %208 = vector.shape_cast %205 : vector<8x2x64xf32> to vector<1x8x2x64xf32>
    tpu.vector_store %arg13[%c0_99, %c0_100, %c6, %c0_101], %208 {strides = array<i32>} : memref<1x8x32x64xf32, #tpu.memory_space<vmem>>, vector<1x8x2x64xf32>,
    %209 = vector.extract_strided_slice %52 {offsets = [0, 6], sizes = [12, 64], strides = [1, 1]} : vector<12x80xf32> to vector<12x64xf32>
    %210 = vector.extract_strided_slice %52 {offsets = [0, 8], sizes = [12, 64], strides = [1, 1]} : vector<12x80xf32> to vector<12x64xf32>
    %211 = vector.extract_strided_slice %52 {offsets = [0, 10], sizes = [12, 64], strides = [1, 1]} : vector<12x80xf32> to vector<12x64xf32>
    %212 = vector.extract_strided_slice %72 {offsets = [0, 6], sizes = [12, 64], strides = [1, 1]} : vector<12x80xf32> to vector<12x64xf32>
    %213 = vector.extract_strided_slice %72 {offsets = [0, 8], sizes = [12, 64], strides = [1, 1]} : vector<12x80xf32> to vector<12x64xf32>
    %214 = vector.extract_strided_slice %72 {offsets = [0, 10], sizes = [12, 64], strides = [1, 1]} : vector<12x80xf32> to vector<12x64xf32>
    %215 = vector.extract_strided_slice %72 {offsets = [0, 6], sizes = [12, 64], strides = [1, 1]} : vector<12x80xf32> to vector<12x64xf32>
    %216 = vector.extract_strided_slice %72 {offsets = [0, 8], sizes = [12, 64], strides = [1, 1]} : vector<12x80xf32> to vector<12x64xf32>
    %217 = vector.extract_strided_slice %72 {offsets = [0, 10], sizes = [12, 64], strides = [1, 1]} : vector<12x80xf32> to vector<12x64xf32>
    %218 = tpu.concatenate %209, %210, %211, %212, %213, %214, %215, %216, %217 in 0 : vector<12x64xf32>, vector<12x64xf32>, vector<12x64xf32>, vector<12x64xf32>, vector<12x64xf32>, vector<12x64xf32>, vector<12x64xf32>, vector<12x64xf32>, vector<12x64xf32> -> vector<108x64xf32>
    %cst_102 = arith.constant dense<0.000000e+00> : vector<8x64xf32>
    %219 = tpu.matmul %2, %218, %cst_102 {dimension_numbers = #tpu.dot_dimension_numbers<[1], [0], [0], [1], [0, 0, 1, 1], [], []>} : vector<8x108xf32>, vector<108x64xf32>, vector<8x64xf32> -> vector<8x64xf32>
    %220 = vector.broadcast %3 : vector<8x1xf32> to vector<8x64xf32>
    %221 = arith.addf %219, %220 : vector<8x64xf32>
    %222 = vector.shape_cast %221 : vector<8x64xf32> to vector<8x1x64xf32>
    %223 = vector.shape_cast %222 : vector<8x1x64xf32> to vector<8x1x64xf32>
    %224 = vector.broadcast %223 : vector<8x1x64xf32> to vector<8x2x64xf32>
    %c0_103 = arith.constant 0 : index
    %c0_104 = arith.constant 0 : index
    %c8 = arith.constant 8 : index
    %c0_105 = arith.constant 0 : index
    %225 = vector.load %arg13[%c0_103, %c0_104, %c8, %c0_105] : memref<1x8x32x64xf32, #tpu.memory_space<vmem>>, vector<1x8x2x64xf32>
    %226 = vector.shape_cast %225 : vector<1x8x2x64xf32> to vector<8x2x64xf32>
    %227 = vector.shape_cast %224 : vector<8x2x64xf32> to vector<1x8x2x64xf32>
    tpu.vector_store %arg13[%c0_103, %c0_104, %c8, %c0_105], %227 {strides = array<i32>} : memref<1x8x32x64xf32, #tpu.memory_space<vmem>>, vector<1x8x2x64xf32>,
    %228 = vector.extract_strided_slice %72 {offsets = [0, 6], sizes = [12, 64], strides = [1, 1]} : vector<12x80xf32> to vector<12x64xf32>
    %229 = vector.extract_strided_slice %72 {offsets = [0, 8], sizes = [12, 64], strides = [1, 1]} : vector<12x80xf32> to vector<12x64xf32>
    %230 = vector.extract_strided_slice %72 {offsets = [0, 10], sizes = [12, 64], strides = [1, 1]} : vector<12x80xf32> to vector<12x64xf32>
    %231 = vector.extract_strided_slice %72 {offsets = [0, 6], sizes = [12, 64], strides = [1, 1]} : vector<12x80xf32> to vector<12x64xf32>
    %232 = vector.extract_strided_slice %72 {offsets = [0, 8], sizes = [12, 64], strides = [1, 1]} : vector<12x80xf32> to vector<12x64xf32>
    %233 = vector.extract_strided_slice %72 {offsets = [0, 10], sizes = [12, 64], strides = [1, 1]} : vector<12x80xf32> to vector<12x64xf32>
    %234 = vector.extract_strided_slice %72 {offsets = [0, 6], sizes = [12, 64], strides = [1, 1]} : vector<12x80xf32> to vector<12x64xf32>
    %235 = vector.extract_strided_slice %72 {offsets = [0, 8], sizes = [12, 64], strides = [1, 1]} : vector<12x80xf32> to vector<12x64xf32>
    %236 = vector.extract_strided_slice %72 {offsets = [0, 10], sizes = [12, 64], strides = [1, 1]} : vector<12x80xf32> to vector<12x64xf32>
    %237 = tpu.concatenate %228, %229, %230, %231, %232, %233, %234, %235, %236 in 0 : vector<12x64xf32>, vector<12x64xf32>, vector<12x64xf32>, vector<12x64xf32>, vector<12x64xf32>, vector<12x64xf32>, vector<12x64xf32>, vector<12x64xf32>, vector<12x64xf32> -> vector<108x64xf32>
    %cst_106 = arith.constant dense<0.000000e+00> : vector<8x64xf32>
    %238 = tpu.matmul %2, %237, %cst_106 {dimension_numbers = #tpu.dot_dimension_numbers<[1], [0], [0], [1], [0, 0, 1, 1], [], []>} : vector<8x108xf32>, vector<108x64xf32>, vector<8x64xf32> -> vector<8x64xf32>
    %239 = vector.broadcast %3 : vector<8x1xf32> to vector<8x64xf32>
    %240 = arith.addf %238, %239 : vector<8x64xf32>
    %241 = vector.shape_cast %240 : vector<8x64xf32> to vector<8x1x64xf32>
    %242 = vector.shape_cast %241 : vector<8x1x64xf32> to vector<8x1x64xf32>
    %243 = vector.broadcast %242 : vector<8x1x64xf32> to vector<8x2x64xf32>
    %c0_107 = arith.constant 0 : index
    %c0_108 = arith.constant 0 : index
    %c10 = arith.constant 10 : index
    %c0_109 = arith.constant 0 : index
    %244 = vector.load %arg13[%c0_107, %c0_108, %c10, %c0_109] : memref<1x8x32x64xf32, #tpu.memory_space<vmem>>, vector<1x8x2x64xf32>
    %245 = vector.shape_cast %244 : vector<1x8x2x64xf32> to vector<8x2x64xf32>
    %246 = vector.shape_cast %243 : vector<8x2x64xf32> to vector<1x8x2x64xf32>
    tpu.vector_store %arg13[%c0_107, %c0_108, %c10, %c0_109], %246 {strides = array<i32>} : memref<1x8x32x64xf32, #tpu.memory_space<vmem>>, vector<1x8x2x64xf32>,
    %247 = vector.extract_strided_slice %72 {offsets = [0, 6], sizes = [12, 64], strides = [1, 1]} : vector<12x80xf32> to vector<12x64xf32>
    %248 = vector.extract_strided_slice %72 {offsets = [0, 8], sizes = [12, 64], strides = [1, 1]} : vector<12x80xf32> to vector<12x64xf32>
    %249 = vector.extract_strided_slice %72 {offsets = [0, 10], sizes = [12, 64], strides = [1, 1]} : vector<12x80xf32> to vector<12x64xf32>
    %250 = vector.extract_strided_slice %72 {offsets = [0, 6], sizes = [12, 64], strides = [1, 1]} : vector<12x80xf32> to vector<12x64xf32>
    %251 = vector.extract_strided_slice %72 {offsets = [0, 8], sizes = [12, 64], strides = [1, 1]} : vector<12x80xf32> to vector<12x64xf32>
    %252 = vector.extract_strided_slice %72 {offsets = [0, 10], sizes = [12, 64], strides = [1, 1]} : vector<12x80xf32> to vector<12x64xf32>
    %253 = vector.extract_strided_slice %72 {offsets = [0, 6], sizes = [12, 64], strides = [1, 1]} : vector<12x80xf32> to vector<12x64xf32>
    %254 = vector.extract_strided_slice %72 {offsets = [0, 8], sizes = [12, 64], strides = [1, 1]} : vector<12x80xf32> to vector<12x64xf32>
    %255 = vector.extract_strided_slice %72 {offsets = [0, 10], sizes = [12, 64], strides = [1, 1]} : vector<12x80xf32> to vector<12x64xf32>
    %256 = tpu.concatenate %247, %248, %249, %250, %251, %252, %253, %254, %255 in 0 : vector<12x64xf32>, vector<12x64xf32>, vector<12x64xf32>, vector<12x64xf32>, vector<12x64xf32>, vector<12x64xf32>, vector<12x64xf32>, vector<12x64xf32>, vector<12x64xf32> -> vector<108x64xf32>
    %cst_110 = arith.constant dense<0.000000e+00> : vector<8x64xf32>
    %257 = tpu.matmul %2, %256, %cst_110 {dimension_numbers = #tpu.dot_dimension_numbers<[1], [0], [0], [1], [0, 0, 1, 1], [], []>} : vector<8x108xf32>, vector<108x64xf32>, vector<8x64xf32> -> vector<8x64xf32>
    %258 = vector.broadcast %3 : vector<8x1xf32> to vector<8x64xf32>
    %259 = arith.addf %257, %258 : vector<8x64xf32>
    %260 = vector.shape_cast %259 : vector<8x64xf32> to vector<8x1x64xf32>
    %261 = vector.shape_cast %260 : vector<8x1x64xf32> to vector<8x1x64xf32>
    %262 = vector.broadcast %261 : vector<8x1x64xf32> to vector<8x2x64xf32>
    %c0_111 = arith.constant 0 : index
    %c0_112 = arith.constant 0 : index
    %c12 = arith.constant 12 : index
    %c0_113 = arith.constant 0 : index
    %263 = vector.load %arg13[%c0_111, %c0_112, %c12, %c0_113] : memref<1x8x32x64xf32, #tpu.memory_space<vmem>>, vector<1x8x2x64xf32>
    %264 = vector.shape_cast %263 : vector<1x8x2x64xf32> to vector<8x2x64xf32>
    %265 = vector.shape_cast %262 : vector<8x2x64xf32> to vector<1x8x2x64xf32>
    tpu.vector_store %arg13[%c0_111, %c0_112, %c12, %c0_113], %265 {strides = array<i32>} : memref<1x8x32x64xf32, #tpu.memory_space<vmem>>, vector<1x8x2x64xf32>,
    %266 = vector.extract_strided_slice %72 {offsets = [0, 6], sizes = [12, 64], strides = [1, 1]} : vector<12x80xf32> to vector<12x64xf32>
    %267 = vector.extract_strided_slice %72 {offsets = [0, 8], sizes = [12, 64], strides = [1, 1]} : vector<12x80xf32> to vector<12x64xf32>
    %268 = vector.extract_strided_slice %72 {offsets = [0, 10], sizes = [12, 64], strides = [1, 1]} : vector<12x80xf32> to vector<12x64xf32>
    %269 = vector.extract_strided_slice %72 {offsets = [0, 6], sizes = [12, 64], strides = [1, 1]} : vector<12x80xf32> to vector<12x64xf32>
    %270 = vector.extract_strided_slice %72 {offsets = [0, 8], sizes = [12, 64], strides = [1, 1]} : vector<12x80xf32> to vector<12x64xf32>
    %271 = vector.extract_strided_slice %72 {offsets = [0, 10], sizes = [12, 64], strides = [1, 1]} : vector<12x80xf32> to vector<12x64xf32>
    %272 = vector.extract_strided_slice %92 {offsets = [0, 6], sizes = [12, 64], strides = [1, 1]} : vector<12x80xf32> to vector<12x64xf32>
    %273 = vector.extract_strided_slice %92 {offsets = [0, 8], sizes = [12, 64], strides = [1, 1]} : vector<12x80xf32> to vector<12x64xf32>
    %274 = vector.extract_strided_slice %92 {offsets = [0, 10], sizes = [12, 64], strides = [1, 1]} : vector<12x80xf32> to vector<12x64xf32>
    %275 = tpu.concatenate %266, %267, %268, %269, %270, %271, %272, %273, %274 in 0 : vector<12x64xf32>, vector<12x64xf32>, vector<12x64xf32>, vector<12x64xf32>, vector<12x64xf32>, vector<12x64xf32>, vector<12x64xf32>, vector<12x64xf32>, vector<12x64xf32> -> vector<108x64xf32>
    %cst_114 = arith.constant dense<0.000000e+00> : vector<8x64xf32>
    %276 = tpu.matmul %2, %275, %cst_114 {dimension_numbers = #tpu.dot_dimension_numbers<[1], [0], [0], [1], [0, 0, 1, 1], [], []>} : vector<8x108xf32>, vector<108x64xf32>, vector<8x64xf32> -> vector<8x64xf32>
    %277 = vector.broadcast %3 : vector<8x1xf32> to vector<8x64xf32>
    %278 = arith.addf %276, %277 : vector<8x64xf32>
    %279 = vector.shape_cast %278 : vector<8x64xf32> to vector<8x1x64xf32>
    %280 = vector.shape_cast %279 : vector<8x1x64xf32> to vector<8x1x64xf32>
    %281 = vector.broadcast %280 : vector<8x1x64xf32> to vector<8x2x64xf32>
    %c0_115 = arith.constant 0 : index
    %c0_116 = arith.constant 0 : index
    %c14 = arith.constant 14 : index
    %c0_117 = arith.constant 0 : index
    %282 = vector.load %arg13[%c0_115, %c0_116, %c14, %c0_117] : memref<1x8x32x64xf32, #tpu.memory_space<vmem>>, vector<1x8x2x64xf32>
    %283 = vector.shape_cast %282 : vector<1x8x2x64xf32> to vector<8x2x64xf32>
    %284 = vector.shape_cast %281 : vector<8x2x64xf32> to vector<1x8x2x64xf32>
    tpu.vector_store %arg13[%c0_115, %c0_116, %c14, %c0_117], %284 {strides = array<i32>} : memref<1x8x32x64xf32, #tpu.memory_space<vmem>>, vector<1x8x2x64xf32>,
    %285 = vector.extract_strided_slice %72 {offsets = [0, 6], sizes = [12, 64], strides = [1, 1]} : vector<12x80xf32> to vector<12x64xf32>
    %286 = vector.extract_strided_slice %72 {offsets = [0, 8], sizes = [12, 64], strides = [1, 1]} : vector<12x80xf32> to vector<12x64xf32>
    %287 = vector.extract_strided_slice %72 {offsets = [0, 10], sizes = [12, 64], strides = [1, 1]} : vector<12x80xf32> to vector<12x64xf32>
    %288 = vector.extract_strided_slice %92 {offsets = [0, 6], sizes = [12, 64], strides = [1, 1]} : vector<12x80xf32> to vector<12x64xf32>
    %289 = vector.extract_strided_slice %92 {offsets = [0, 8], sizes = [12, 64], strides = [1, 1]} : vector<12x80xf32> to vector<12x64xf32>
    %290 = vector.extract_strided_slice %92 {offsets = [0, 10], sizes = [12, 64], strides = [1, 1]} : vector<12x80xf32> to vector<12x64xf32>
    %291 = vector.extract_strided_slice %92 {offsets = [0, 6], sizes = [12, 64], strides = [1, 1]} : vector<12x80xf32> to vector<12x64xf32>
    %292 = vector.extract_strided_slice %92 {offsets = [0, 8], sizes = [12, 64], strides = [1, 1]} : vector<12x80xf32> to vector<12x64xf32>
    %293 = vector.extract_strided_slice %92 {offsets = [0, 10], sizes = [12, 64], strides = [1, 1]} : vector<12x80xf32> to vector<12x64xf32>
    %294 = tpu.concatenate %285, %286, %287, %288, %289, %290, %291, %292, %293 in 0 : vector<12x64xf32>, vector<12x64xf32>, vector<12x64xf32>, vector<12x64xf32>, vector<12x64xf32>, vector<12x64xf32>, vector<12x64xf32>, vector<12x64xf32>, vector<12x64xf32> -> vector<108x64xf32>
    %cst_118 = arith.constant dense<0.000000e+00> : vector<8x64xf32>
    %295 = tpu.matmul %2, %294, %cst_118 {dimension_numbers = #tpu.dot_dimension_numbers<[1], [0], [0], [1], [0, 0, 1, 1], [], []>} : vector<8x108xf32>, vector<108x64xf32>, vector<8x64xf32> -> vector<8x64xf32>
    %296 = vector.broadcast %3 : vector<8x1xf32> to vector<8x64xf32>
    %297 = arith.addf %295, %296 : vector<8x64xf32>
    %298 = vector.shape_cast %297 : vector<8x64xf32> to vector<8x1x64xf32>
    %299 = vector.shape_cast %298 : vector<8x1x64xf32> to vector<8x1x64xf32>
    %300 = vector.broadcast %299 : vector<8x1x64xf32> to vector<8x2x64xf32>
    %c0_119 = arith.constant 0 : index
    %c0_120 = arith.constant 0 : index
    %c16 = arith.constant 16 : index
    %c0_121 = arith.constant 0 : index
    %301 = vector.load %arg13[%c0_119, %c0_120, %c16, %c0_121] : memref<1x8x32x64xf32, #tpu.memory_space<vmem>>, vector<1x8x2x64xf32>
    %302 = vector.shape_cast %301 : vector<1x8x2x64xf32> to vector<8x2x64xf32>
    %303 = vector.shape_cast %300 : vector<8x2x64xf32> to vector<1x8x2x64xf32>
    tpu.vector_store %arg13[%c0_119, %c0_120, %c16, %c0_121], %303 {strides = array<i32>} : memref<1x8x32x64xf32, #tpu.memory_space<vmem>>, vector<1x8x2x64xf32>,
    %304 = vector.extract_strided_slice %92 {offsets = [0, 6], sizes = [12, 64], strides = [1, 1]} : vector<12x80xf32> to vector<12x64xf32>
    %305 = vector.extract_strided_slice %92 {offsets = [0, 8], sizes = [12, 64], strides = [1, 1]} : vector<12x80xf32> to vector<12x64xf32>
    %306 = vector.extract_strided_slice %92 {offsets = [0, 10], sizes = [12, 64], strides = [1, 1]} : vector<12x80xf32> to vector<12x64xf32>
    %307 = vector.extract_strided_slice %92 {offsets = [0, 6], sizes = [12, 64], strides = [1, 1]} : vector<12x80xf32> to vector<12x64xf32>
    %308 = vector.extract_strided_slice %92 {offsets = [0, 8], sizes = [12, 64], strides = [1, 1]} : vector<12x80xf32> to vector<12x64xf32>
    %309 = vector.extract_strided_slice %92 {offsets = [0, 10], sizes = [12, 64], strides = [1, 1]} : vector<12x80xf32> to vector<12x64xf32>
    %310 = vector.extract_strided_slice %92 {offsets = [0, 6], sizes = [12, 64], strides = [1, 1]} : vector<12x80xf32> to vector<12x64xf32>
    %311 = vector.extract_strided_slice %92 {offsets = [0, 8], sizes = [12, 64], strides = [1, 1]} : vector<12x80xf32> to vector<12x64xf32>
    %312 = vector.extract_strided_slice %92 {offsets = [0, 10], sizes = [12, 64], strides = [1, 1]} : vector<12x80xf32> to vector<12x64xf32>
    %313 = tpu.concatenate %304, %305, %306, %307, %308, %309, %310, %311, %312 in 0 : vector<12x64xf32>, vector<12x64xf32>, vector<12x64xf32>, vector<12x64xf32>, vector<12x64xf32>, vector<12x64xf32>, vector<12x64xf32>, vector<12x64xf32>, vector<12x64xf32> -> vector<108x64xf32>
    %cst_122 = arith.constant dense<0.000000e+00> : vector<8x64xf32>
    %314 = tpu.matmul %2, %313, %cst_122 {dimension_numbers = #tpu.dot_dimension_numbers<[1], [0], [0], [1], [0, 0, 1, 1], [], []>} : vector<8x108xf32>, vector<108x64xf32>, vector<8x64xf32> -> vector<8x64xf32>
    %315 = vector.broadcast %3 : vector<8x1xf32> to vector<8x64xf32>
    %316 = arith.addf %314, %315 : vector<8x64xf32>
    %317 = vector.shape_cast %316 : vector<8x64xf32> to vector<8x1x64xf32>
    %318 = vector.shape_cast %317 : vector<8x1x64xf32> to vector<8x1x64xf32>
    %319 = vector.broadcast %318 : vector<8x1x64xf32> to vector<8x2x64xf32>
    %c0_123 = arith.constant 0 : index
    %c0_124 = arith.constant 0 : index
    %c18 = arith.constant 18 : index
    %c0_125 = arith.constant 0 : index
    %320 = vector.load %arg13[%c0_123, %c0_124, %c18, %c0_125] : memref<1x8x32x64xf32, #tpu.memory_space<vmem>>, vector<1x8x2x64xf32>
    %321 = vector.shape_cast %320 : vector<1x8x2x64xf32> to vector<8x2x64xf32>
    %322 = vector.shape_cast %319 : vector<8x2x64xf32> to vector<1x8x2x64xf32>
    tpu.vector_store %arg13[%c0_123, %c0_124, %c18, %c0_125], %322 {strides = array<i32>} : memref<1x8x32x64xf32, #tpu.memory_space<vmem>>, vector<1x8x2x64xf32>,
    %323 = vector.extract_strided_slice %92 {offsets = [0, 6], sizes = [12, 64], strides = [1, 1]} : vector<12x80xf32> to vector<12x64xf32>
    %324 = vector.extract_strided_slice %92 {offsets = [0, 8], sizes = [12, 64], strides = [1, 1]} : vector<12x80xf32> to vector<12x64xf32>
    %325 = vector.extract_strided_slice %92 {offsets = [0, 10], sizes = [12, 64], strides = [1, 1]} : vector<12x80xf32> to vector<12x64xf32>
    %326 = vector.extract_strided_slice %92 {offsets = [0, 6], sizes = [12, 64], strides = [1, 1]} : vector<12x80xf32> to vector<12x64xf32>
    %327 = vector.extract_strided_slice %92 {offsets = [0, 8], sizes = [12, 64], strides = [1, 1]} : vector<12x80xf32> to vector<12x64xf32>
    %328 = vector.extract_strided_slice %92 {offsets = [0, 10], sizes = [12, 64], strides = [1, 1]} : vector<12x80xf32> to vector<12x64xf32>
    %329 = vector.extract_strided_slice %92 {offsets = [0, 6], sizes = [12, 64], strides = [1, 1]} : vector<12x80xf32> to vector<12x64xf32>
    %330 = vector.extract_strided_slice %92 {offsets = [0, 8], sizes = [12, 64], strides = [1, 1]} : vector<12x80xf32> to vector<12x64xf32>
    %331 = vector.extract_strided_slice %92 {offsets = [0, 10], sizes = [12, 64], strides = [1, 1]} : vector<12x80xf32> to vector<12x64xf32>
    %332 = tpu.concatenate %323, %324, %325, %326, %327, %328, %329, %330, %331 in 0 : vector<12x64xf32>, vector<12x64xf32>, vector<12x64xf32>, vector<12x64xf32>, vector<12x64xf32>, vector<12x64xf32>, vector<12x64xf32>, vector<12x64xf32>, vector<12x64xf32> -> vector<108x64xf32>
    %cst_126 = arith.constant dense<0.000000e+00> : vector<8x64xf32>
    %333 = tpu.matmul %2, %332, %cst_126 {dimension_numbers = #tpu.dot_dimension_numbers<[1], [0], [0], [1], [0, 0, 1, 1], [], []>} : vector<8x108xf32>, vector<108x64xf32>, vector<8x64xf32> -> vector<8x64xf32>
    %334 = vector.broadcast %3 : vector<8x1xf32> to vector<8x64xf32>
    %335 = arith.addf %333, %334 : vector<8x64xf32>
    %336 = vector.shape_cast %335 : vector<8x64xf32> to vector<8x1x64xf32>
    %337 = vector.shape_cast %336 : vector<8x1x64xf32> to vector<8x1x64xf32>
    %338 = vector.broadcast %337 : vector<8x1x64xf32> to vector<8x2x64xf32>
    %c0_127 = arith.constant 0 : index
    %c0_128 = arith.constant 0 : index
    %c20 = arith.constant 20 : index
    %c0_129 = arith.constant 0 : index
    %339 = vector.load %arg13[%c0_127, %c0_128, %c20, %c0_129] : memref<1x8x32x64xf32, #tpu.memory_space<vmem>>, vector<1x8x2x64xf32>
    %340 = vector.shape_cast %339 : vector<1x8x2x64xf32> to vector<8x2x64xf32>
    %341 = vector.shape_cast %338 : vector<8x2x64xf32> to vector<1x8x2x64xf32>
    tpu.vector_store %arg13[%c0_127, %c0_128, %c20, %c0_129], %341 {strides = array<i32>} : memref<1x8x32x64xf32, #tpu.memory_space<vmem>>, vector<1x8x2x64xf32>,
    %342 = vector.extract_strided_slice %92 {offsets = [0, 6], sizes = [12, 64], strides = [1, 1]} : vector<12x80xf32> to vector<12x64xf32>
    %343 = vector.extract_strided_slice %92 {offsets = [0, 8], sizes = [12, 64], strides = [1, 1]} : vector<12x80xf32> to vector<12x64xf32>
    %344 = vector.extract_strided_slice %92 {offsets = [0, 10], sizes = [12, 64], strides = [1, 1]} : vector<12x80xf32> to vector<12x64xf32>
    %345 = vector.extract_strided_slice %92 {offsets = [0, 6], sizes = [12, 64], strides = [1, 1]} : vector<12x80xf32> to vector<12x64xf32>
    %346 = vector.extract_strided_slice %92 {offsets = [0, 8], sizes = [12, 64], strides = [1, 1]} : vector<12x80xf32> to vector<12x64xf32>
    %347 = vector.extract_strided_slice %92 {offsets = [0, 10], sizes = [12, 64], strides = [1, 1]} : vector<12x80xf32> to vector<12x64xf32>
    %348 = vector.extract_strided_slice %112 {offsets = [0, 6], sizes = [12, 64], strides = [1, 1]} : vector<12x80xf32> to vector<12x64xf32>
    %349 = vector.extract_strided_slice %112 {offsets = [0, 8], sizes = [12, 64], strides = [1, 1]} : vector<12x80xf32> to vector<12x64xf32>
    %350 = vector.extract_strided_slice %112 {offsets = [0, 10], sizes = [12, 64], strides = [1, 1]} : vector<12x80xf32> to vector<12x64xf32>
    %351 = tpu.concatenate %342, %343, %344, %345, %346, %347, %348, %349, %350 in 0 : vector<12x64xf32>, vector<12x64xf32>, vector<12x64xf32>, vector<12x64xf32>, vector<12x64xf32>, vector<12x64xf32>, vector<12x64xf32>, vector<12x64xf32>, vector<12x64xf32> -> vector<108x64xf32>
    %cst_130 = arith.constant dense<0.000000e+00> : vector<8x64xf32>
    %352 = tpu.matmul %2, %351, %cst_130 {dimension_numbers = #tpu.dot_dimension_numbers<[1], [0], [0], [1], [0, 0, 1, 1], [], []>} : vector<8x108xf32>, vector<108x64xf32>, vector<8x64xf32> -> vector<8x64xf32>
    %353 = vector.broadcast %3 : vector<8x1xf32> to vector<8x64xf32>
    %354 = arith.addf %352, %353 : vector<8x64xf32>
    %355 = vector.shape_cast %354 : vector<8x64xf32> to vector<8x1x64xf32>
    %356 = vector.shape_cast %355 : vector<8x1x64xf32> to vector<8x1x64xf32>
    %357 = vector.broadcast %356 : vector<8x1x64xf32> to vector<8x2x64xf32>
    %c0_131 = arith.constant 0 : index
    %c0_132 = arith.constant 0 : index
    %c22 = arith.constant 22 : index
    %c0_133 = arith.constant 0 : index
    %358 = vector.load %arg13[%c0_131, %c0_132, %c22, %c0_133] : memref<1x8x32x64xf32, #tpu.memory_space<vmem>>, vector<1x8x2x64xf32>
    %359 = vector.shape_cast %358 : vector<1x8x2x64xf32> to vector<8x2x64xf32>
    %360 = vector.shape_cast %357 : vector<8x2x64xf32> to vector<1x8x2x64xf32>
    tpu.vector_store %arg13[%c0_131, %c0_132, %c22, %c0_133], %360 {strides = array<i32>} : memref<1x8x32x64xf32, #tpu.memory_space<vmem>>, vector<1x8x2x64xf32>,
    %361 = vector.extract_strided_slice %92 {offsets = [0, 6], sizes = [12, 64], strides = [1, 1]} : vector<12x80xf32> to vector<12x64xf32>
    %362 = vector.extract_strided_slice %92 {offsets = [0, 8], sizes = [12, 64], strides = [1, 1]} : vector<12x80xf32> to vector<12x64xf32>
    %363 = vector.extract_strided_slice %92 {offsets = [0, 10], sizes = [12, 64], strides = [1, 1]} : vector<12x80xf32> to vector<12x64xf32>
    %364 = vector.extract_strided_slice %112 {offsets = [0, 6], sizes = [12, 64], strides = [1, 1]} : vector<12x80xf32> to vector<12x64xf32>
    %365 = vector.extract_strided_slice %112 {offsets = [0, 8], sizes = [12, 64], strides = [1, 1]} : vector<12x80xf32> to vector<12x64xf32>
    %366 = vector.extract_strided_slice %112 {offsets = [0, 10], sizes = [12, 64], strides = [1, 1]} : vector<12x80xf32> to vector<12x64xf32>
    %367 = vector.extract_strided_slice %112 {offsets = [0, 6], sizes = [12, 64], strides = [1, 1]} : vector<12x80xf32> to vector<12x64xf32>
    %368 = vector.extract_strided_slice %112 {offsets = [0, 8], sizes = [12, 64], strides = [1, 1]} : vector<12x80xf32> to vector<12x64xf32>
    %369 = vector.extract_strided_slice %112 {offsets = [0, 10], sizes = [12, 64], strides = [1, 1]} : vector<12x80xf32> to vector<12x64xf32>
    %370 = tpu.concatenate %361, %362, %363, %364, %365, %366, %367, %368, %369 in 0 : vector<12x64xf32>, vector<12x64xf32>, vector<12x64xf32>, vector<12x64xf32>, vector<12x64xf32>, vector<12x64xf32>, vector<12x64xf32>, vector<12x64xf32>, vector<12x64xf32> -> vector<108x64xf32>
    %cst_134 = arith.constant dense<0.000000e+00> : vector<8x64xf32>
    %371 = tpu.matmul %2, %370, %cst_134 {dimension_numbers = #tpu.dot_dimension_numbers<[1], [0], [0], [1], [0, 0, 1, 1], [], []>} : vector<8x108xf32>, vector<108x64xf32>, vector<8x64xf32> -> vector<8x64xf32>
    %372 = vector.broadcast %3 : vector<8x1xf32> to vector<8x64xf32>
    %373 = arith.addf %371, %372 : vector<8x64xf32>
    %374 = vector.shape_cast %373 : vector<8x64xf32> to vector<8x1x64xf32>
    %375 = vector.shape_cast %374 : vector<8x1x64xf32> to vector<8x1x64xf32>
    %376 = vector.broadcast %375 : vector<8x1x64xf32> to vector<8x2x64xf32>
    %c0_135 = arith.constant 0 : index
    %c0_136 = arith.constant 0 : index
    %c24 = arith.constant 24 : index
    %c0_137 = arith.constant 0 : index
    %377 = vector.load %arg13[%c0_135, %c0_136, %c24, %c0_137] : memref<1x8x32x64xf32, #tpu.memory_space<vmem>>, vector<1x8x2x64xf32>
    %378 = vector.shape_cast %377 : vector<1x8x2x64xf32> to vector<8x2x64xf32>
    %379 = vector.shape_cast %376 : vector<8x2x64xf32> to vector<1x8x2x64xf32>
    tpu.vector_store %arg13[%c0_135, %c0_136, %c24, %c0_137], %379 {strides = array<i32>} : memref<1x8x32x64xf32, #tpu.memory_space<vmem>>, vector<1x8x2x64xf32>,
    %380 = vector.extract_strided_slice %112 {offsets = [0, 6], sizes = [12, 64], strides = [1, 1]} : vector<12x80xf32> to vector<12x64xf32>
    %381 = vector.extract_strided_slice %112 {offsets = [0, 8], sizes = [12, 64], strides = [1, 1]} : vector<12x80xf32> to vector<12x64xf32>
    %382 = vector.extract_strided_slice %112 {offsets = [0, 10], sizes = [12, 64], strides = [1, 1]} : vector<12x80xf32> to vector<12x64xf32>
    %383 = vector.extract_strided_slice %112 {offsets = [0, 6], sizes = [12, 64], strides = [1, 1]} : vector<12x80xf32> to vector<12x64xf32>
    %384 = vector.extract_strided_slice %112 {offsets = [0, 8], sizes = [12, 64], strides = [1, 1]} : vector<12x80xf32> to vector<12x64xf32>
    %385 = vector.extract_strided_slice %112 {offsets = [0, 10], sizes = [12, 64], strides = [1, 1]} : vector<12x80xf32> to vector<12x64xf32>
    %386 = vector.extract_strided_slice %112 {offsets = [0, 6], sizes = [12, 64], strides = [1, 1]} : vector<12x80xf32> to vector<12x64xf32>
    %387 = vector.extract_strided_slice %112 {offsets = [0, 8], sizes = [12, 64], strides = [1, 1]} : vector<12x80xf32> to vector<12x64xf32>
    %388 = vector.extract_strided_slice %112 {offsets = [0, 10], sizes = [12, 64], strides = [1, 1]} : vector<12x80xf32> to vector<12x64xf32>
    %389 = tpu.concatenate %380, %381, %382, %383, %384, %385, %386, %387, %388 in 0 : vector<12x64xf32>, vector<12x64xf32>, vector<12x64xf32>, vector<12x64xf32>, vector<12x64xf32>, vector<12x64xf32>, vector<12x64xf32>, vector<12x64xf32>, vector<12x64xf32> -> vector<108x64xf32>
    %cst_138 = arith.constant dense<0.000000e+00> : vector<8x64xf32>
    %390 = tpu.matmul %2, %389, %cst_138 {dimension_numbers = #tpu.dot_dimension_numbers<[1], [0], [0], [1], [0, 0, 1, 1], [], []>} : vector<8x108xf32>, vector<108x64xf32>, vector<8x64xf32> -> vector<8x64xf32>
    %391 = vector.broadcast %3 : vector<8x1xf32> to vector<8x64xf32>
    %392 = arith.addf %390, %391 : vector<8x64xf32>
    %393 = vector.shape_cast %392 : vector<8x64xf32> to vector<8x1x64xf32>
    %394 = vector.shape_cast %393 : vector<8x1x64xf32> to vector<8x1x64xf32>
    %395 = vector.broadcast %394 : vector<8x1x64xf32> to vector<8x2x64xf32>
    %c0_139 = arith.constant 0 : index
    %c0_140 = arith.constant 0 : index
    %c26 = arith.constant 26 : index
    %c0_141 = arith.constant 0 : index
    %396 = vector.load %arg13[%c0_139, %c0_140, %c26, %c0_141] : memref<1x8x32x64xf32, #tpu.memory_space<vmem>>, vector<1x8x2x64xf32>
    %397 = vector.shape_cast %396 : vector<1x8x2x64xf32> to vector<8x2x64xf32>
    %398 = vector.shape_cast %395 : vector<8x2x64xf32> to vector<1x8x2x64xf32>
    tpu.vector_store %arg13[%c0_139, %c0_140, %c26, %c0_141], %398 {strides = array<i32>} : memref<1x8x32x64xf32, #tpu.memory_space<vmem>>, vector<1x8x2x64xf32>,
    %399 = vector.extract_strided_slice %112 {offsets = [0, 6], sizes = [12, 64], strides = [1, 1]} : vector<12x80xf32> to vector<12x64xf32>
    %400 = vector.extract_strided_slice %112 {offsets = [0, 8], sizes = [12, 64], strides = [1, 1]} : vector<12x80xf32> to vector<12x64xf32>
    %401 = vector.extract_strided_slice %112 {offsets = [0, 10], sizes = [12, 64], strides = [1, 1]} : vector<12x80xf32> to vector<12x64xf32>
    %402 = vector.extract_strided_slice %112 {offsets = [0, 6], sizes = [12, 64], strides = [1, 1]} : vector<12x80xf32> to vector<12x64xf32>
    %403 = vector.extract_strided_slice %112 {offsets = [0, 8], sizes = [12, 64], strides = [1, 1]} : vector<12x80xf32> to vector<12x64xf32>
    %404 = vector.extract_strided_slice %112 {offsets = [0, 10], sizes = [12, 64], strides = [1, 1]} : vector<12x80xf32> to vector<12x64xf32>
    %405 = vector.extract_strided_slice %112 {offsets = [0, 6], sizes = [12, 64], strides = [1, 1]} : vector<12x80xf32> to vector<12x64xf32>
    %406 = vector.extract_strided_slice %112 {offsets = [0, 8], sizes = [12, 64], strides = [1, 1]} : vector<12x80xf32> to vector<12x64xf32>
    %407 = vector.extract_strided_slice %112 {offsets = [0, 10], sizes = [12, 64], strides = [1, 1]} : vector<12x80xf32> to vector<12x64xf32>
    %408 = tpu.concatenate %399, %400, %401, %402, %403, %404, %405, %406, %407 in 0 : vector<12x64xf32>, vector<12x64xf32>, vector<12x64xf32>, vector<12x64xf32>, vector<12x64xf32>, vector<12x64xf32>, vector<12x64xf32>, vector<12x64xf32>, vector<12x64xf32> -> vector<108x64xf32>
    %cst_142 = arith.constant dense<0.000000e+00> : vector<8x64xf32>
    %409 = tpu.matmul %2, %408, %cst_142 {dimension_numbers = #tpu.dot_dimension_numbers<[1], [0], [0], [1], [0, 0, 1, 1], [], []>} : vector<8x108xf32>, vector<108x64xf32>, vector<8x64xf32> -> vector<8x64xf32>
    %410 = vector.broadcast %3 : vector<8x1xf32> to vector<8x64xf32>
    %411 = arith.addf %409, %410 : vector<8x64xf32>
    %412 = vector.shape_cast %411 : vector<8x64xf32> to vector<8x1x64xf32>
    %413 = vector.shape_cast %412 : vector<8x1x64xf32> to vector<8x1x64xf32>
    %414 = vector.broadcast %413 : vector<8x1x64xf32> to vector<8x2x64xf32>
    %c0_143 = arith.constant 0 : index
    %c0_144 = arith.constant 0 : index
    %c28 = arith.constant 28 : index
    %c0_145 = arith.constant 0 : index
    %415 = vector.load %arg13[%c0_143, %c0_144, %c28, %c0_145] : memref<1x8x32x64xf32, #tpu.memory_space<vmem>>, vector<1x8x2x64xf32>
    %416 = vector.shape_cast %415 : vector<1x8x2x64xf32> to vector<8x2x64xf32>
    %417 = vector.shape_cast %414 : vector<8x2x64xf32> to vector<1x8x2x64xf32>
    tpu.vector_store %arg13[%c0_143, %c0_144, %c28, %c0_145], %417 {strides = array<i32>} : memref<1x8x32x64xf32, #tpu.memory_space<vmem>>, vector<1x8x2x64xf32>,
    %418 = vector.extract_strided_slice %112 {offsets = [0, 6], sizes = [12, 64], strides = [1, 1]} : vector<12x80xf32> to vector<12x64xf32>
    %419 = vector.extract_strided_slice %112 {offsets = [0, 8], sizes = [12, 64], strides = [1, 1]} : vector<12x80xf32> to vector<12x64xf32>
    %420 = vector.extract_strided_slice %112 {offsets = [0, 10], sizes = [12, 64], strides = [1, 1]} : vector<12x80xf32> to vector<12x64xf32>
    %421 = vector.extract_strided_slice %112 {offsets = [0, 6], sizes = [12, 64], strides = [1, 1]} : vector<12x80xf32> to vector<12x64xf32>
    %422 = vector.extract_strided_slice %112 {offsets = [0, 8], sizes = [12, 64], strides = [1, 1]} : vector<12x80xf32> to vector<12x64xf32>
    %423 = vector.extract_strided_slice %112 {offsets = [0, 10], sizes = [12, 64], strides = [1, 1]} : vector<12x80xf32> to vector<12x64xf32>
    %424 = vector.extract_strided_slice %132 {offsets = [0, 6], sizes = [12, 64], strides = [1, 1]} : vector<12x80xf32> to vector<12x64xf32>
    %425 = vector.extract_strided_slice %132 {offsets = [0, 8], sizes = [12, 64], strides = [1, 1]} : vector<12x80xf32> to vector<12x64xf32>
    %426 = vector.extract_strided_slice %132 {offsets = [0, 10], sizes = [12, 64], strides = [1, 1]} : vector<12x80xf32> to vector<12x64xf32>
    %427 = tpu.concatenate %418, %419, %420, %421, %422, %423, %424, %425, %426 in 0 : vector<12x64xf32>, vector<12x64xf32>, vector<12x64xf32>, vector<12x64xf32>, vector<12x64xf32>, vector<12x64xf32>, vector<12x64xf32>, vector<12x64xf32>, vector<12x64xf32> -> vector<108x64xf32>
    %cst_146 = arith.constant dense<0.000000e+00> : vector<8x64xf32>
    %428 = tpu.matmul %2, %427, %cst_146 {dimension_numbers = #tpu.dot_dimension_numbers<[1], [0], [0], [1], [0, 0, 1, 1], [], []>} : vector<8x108xf32>, vector<108x64xf32>, vector<8x64xf32> -> vector<8x64xf32>
    %429 = vector.broadcast %3 : vector<8x1xf32> to vector<8x64xf32>
    %430 = arith.addf %428, %429 : vector<8x64xf32>
    %431 = vector.shape_cast %430 : vector<8x64xf32> to vector<8x1x64xf32>
    %432 = vector.shape_cast %431 : vector<8x1x64xf32> to vector<8x1x64xf32>
    %433 = vector.broadcast %432 : vector<8x1x64xf32> to vector<8x2x64xf32>
    %c0_147 = arith.constant 0 : index
    %c0_148 = arith.constant 0 : index
    %c30 = arith.constant 30 : index
    %c0_149 = arith.constant 0 : index
    %434 = vector.load %arg13[%c0_147, %c0_148, %c30, %c0_149] : memref<1x8x32x64xf32, #tpu.memory_space<vmem>>, vector<1x8x2x64xf32>
    %435 = vector.shape_cast %434 : vector<1x8x2x64xf32> to vector<8x2x64xf32>
    %436 = vector.shape_cast %433 : vector<8x2x64xf32> to vector<1x8x2x64xf32>
    tpu.vector_store %arg13[%c0_147, %c0_148, %c30, %c0_149], %436 {strides = array<i32>} : memref<1x8x32x64xf32, #tpu.memory_space<vmem>>, vector<1x8x2x64xf32>,
    return
  }
  func.func @transform_0(%arg0: i32, %arg1: i32) -> (i32, i32, i32, i32) {
    %c0_i32 = arith.constant 0 : i32
    %0 = arith.addi %arg1, %c0_i32 : i32
    %c0_i32_0 = arith.constant 0 : i32
    %c0_i32_1 = arith.constant 0 : i32
    %c0_i32_2 = arith.constant 0 : i32
    return %arg0, %0, %c0_i32_0, %c0_i32_1 : i32, i32, i32, i32
  }
  func.func @transform_1(%arg0: i32, %arg1: i32) -> (i32, i32, i32, i32) {
    %c1_i32 = arith.constant 1 : i32
    %0 = arith.addi %arg1, %c1_i32 : i32
    %c0_i32 = arith.constant 0 : i32
    %c0_i32_0 = arith.constant 0 : i32
    %c0_i32_1 = arith.constant 0 : i32
    return %arg0, %0, %c0_i32, %c0_i32_0 : i32, i32, i32, i32
  }
  func.func @transform_2(%arg0: i32, %arg1: i32) -> (i32, i32, i32, i32) {
    %c2_i32 = arith.constant 2 : i32
    %0 = arith.addi %arg1, %c2_i32 : i32
    %c0_i32 = arith.constant 0 : i32
    %c0_i32_0 = arith.constant 0 : i32
    %c0_i32_1 = arith.constant 0 : i32
    return %arg0, %0, %c0_i32, %c0_i32_0 : i32, i32, i32, i32
  }
  func.func @transform_3(%arg0: i32, %arg1: i32) -> (i32, i32, i32, i32) {
    %c0_i32 = arith.constant 0 : i32
    %0 = arith.addi %arg1, %c0_i32 : i32
    %c0_i32_0 = arith.constant 0 : i32
    %c0_i32_1 = arith.constant 0 : i32
    %c0_i32_2 = arith.constant 0 : i32
    return %arg0, %0, %c0_i32_0, %c0_i32_1 : i32, i32, i32, i32
  }
  func.func @transform_4(%arg0: i32, %arg1: i32) -> (i32, i32, i32, i32) {
    %c1_i32 = arith.constant 1 : i32
    %0 = arith.addi %arg1, %c1_i32 : i32
    %c0_i32 = arith.constant 0 : i32
    %c0_i32_0 = arith.constant 0 : i32
    %c0_i32_1 = arith.constant 0 : i32
    return %arg0, %0, %c0_i32, %c0_i32_0 : i32, i32, i32, i32
  }
  func.func @transform_5(%arg0: i32, %arg1: i32) -> (i32, i32, i32, i32) {
    %c2_i32 = arith.constant 2 : i32
    %0 = arith.addi %arg1, %c2_i32 : i32
    %c0_i32 = arith.constant 0 : i32
    %c0_i32_0 = arith.constant 0 : i32
    %c0_i32_1 = arith.constant 0 : i32
    return %arg0, %0, %c0_i32, %c0_i32_0 : i32, i32, i32, i32
  }
  func.func @transform_6(%arg0: i32, %arg1: i32) -> (i32, i32) {
    %c0_i32 = arith.constant 0 : i32
    %c0_i32_0 = arith.constant 0 : i32
    %c0_i32_1 = arith.constant 0 : i32
    return %c0_i32, %c0_i32_0 : i32, i32
  }
  func.func @transform_7(%arg0: i32, %arg1: i32) -> (i32, i32) {
    %c0_i32 = arith.constant 0 : i32
    %c0_i32_0 = arith.constant 0 : i32
    %c0_i32_1 = arith.constant 0 : i32
    return %c0_i32, %c0_i32_0 : i32, i32
  }
  func.func @transform_8(%arg0: i32, %arg1: i32) -> (i32, i32) {
    %c0_i32 = arith.constant 0 : i32
    %c0_i32_0 = arith.constant 0 : i32
    %c0_i32_1 = arith.constant 0 : i32
    return %c0_i32, %c0_i32_0 : i32, i32
  }
  func.func @transform_9(%arg0: i32, %arg1: i32) -> (i32, i32) {
    %c0_i32 = arith.constant 0 : i32
    %c0_i32_0 = arith.constant 0 : i32
    %c0_i32_1 = arith.constant 0 : i32
    return %c0_i32, %c0_i32_0 : i32, i32
  }
  func.func @transform_10(%arg0: i32, %arg1: i32) -> (i32, i32) {
    %c0_i32 = arith.constant 0 : i32
    %c0_i32_0 = arith.constant 0 : i32
    %c0_i32_1 = arith.constant 0 : i32
    return %c0_i32, %c0_i32_0 : i32, i32
  }
  func.func @transform_11(%arg0: i32, %arg1: i32) -> (i32, i32, i32, i32) {
    %c0_i32 = arith.constant 0 : i32
    %c0_i32_0 = arith.constant 0 : i32
    %c0_i32_1 = arith.constant 0 : i32
    return %arg0, %c0_i32, %arg1, %c0_i32_0 : i32, i32, i32, i32
  }
}

</mosaic_0001>

<llo_original>
// kernel: tpu_custom_call.1
$region0: #{tpu_custom_call.1}
  #allocation0 [shape = 'u32[]', space=smem, size = 0x4, offset = 0x4, fixed_abs, tag = 'smem constant byte address 0x4 - core index']
  #allocation1 [shape = 'u32[144,128]{1,0:T(1,128)}', space=vmem, size = 0x12000, scoped, tag = 'internal scratch']
  #allocation4 [shape = 's32[]', space=sflag, size = 0x4, offset = 0, fixed_abs, tag = 'sflag constant byte address 0x0 - dummy sync flag']
  %s0 = inlined_call_operand.vmem [shape: f32[2,16,6,10], index: 0, kind: input, shape index: {}]
  %s1 = inlined_call_operand.vmem [shape: f32[2,16,6,10], index: 1, kind: input, shape index: {}]
  %s2 = inlined_call_operand.vmem [shape: f32[2,16,6,10], index: 2, kind: input, shape index: {}]
  %s3 = inlined_call_operand.vmem [shape: f32[2,16,4,10], index: 3, kind: input, shape index: {}]
  %s4 = inlined_call_operand.vmem [shape: f32[2,16,4,10], index: 4, kind: input, shape index: {}]
  %s5 = inlined_call_operand.vmem [shape: f32[2,16,4,10], index: 5, kind: input, shape index: {}]
  %s6 = inlined_call_operand.vmem [shape: f32[8,6], index: 6, kind: input, shape index: {}]
  %s7 = inlined_call_operand.vmem [shape: f32[8,1], index: 7, kind: input, shape index: {}]
  %s8 = inlined_call_operand.vmem [shape: f32[8,108], index: 8, kind: input, shape index: {}]
  %s9 = inlined_call_operand.vmem [shape: f32[8,1], index: 9, kind: input, shape index: {}]
  %s10 = inlined_call_operand.vmem [shape: f32[10,80], index: 10, kind: input, shape index: {}]
  %s11 = inlined_call_operand.hbm [shape: f32[2,8,64,64], index: 11, kind: output, shape index: {}]
  %s12 = sld [smem:[#allocation0]]
  $region77: #{tpu_custom_call.1} parent=0
    _
  %s14 = ssub.s32 1, %s12
  %s15 = scalar_select 0, %s14, %s12
  $region1: #{tpu_custom_call.1} parent=0
    #allocation2 [shape = 'u8[262144]{0}', space=vmem, size = 0x40000, scoped, tag = 'output window, operand 0']
    #allocation3 [shape = 's32[2]{0}', space=sflag, size = 0x8, scoped, tag = 'scoped memory for tpu_custom_call.1']
    %16 = vsyncpa [#allocation3], 0
    %s17 = scalar_lea.sflag [#allocation3], 1
    %18 = vsyncpa %s17, 0
    loop: start=0, step=1, limit=6
    $region2: #{tpu_custom_call.1} parent=1 // loop_pre_header
      _
    $region3: #{tpu_custom_call.1} parent=1 // loop_header
      %s20 = sphi 0, %s24
      %p21 = scmp.ge.s32.totalorder %s20, 6
      %s27 = sphi 0, %s39
      %s28 = sphi 0, %s35
      %s29 = sphi 0, %s27
      %s30 = sphi 0, %s28
      %s31 = sphi 0, %s29
      %s32 = sphi 0, %s30
      %s44 = sphi 0, %s46
      %s47 = sphi 0, %s44
      %s48 = sphi 0, %s47
      %s64 = sphi 0, %s48
      %s74 = sphi 0, %s76
      %s77 = sphi 0, %s74
      %s78 = sphi 0, %s77
      %s94 = sphi 0, %s78
      %s104 = sphi 0, %s106
      %s107 = sphi 0, %s104
      %s108 = sphi 0, %s107
      %s124 = sphi 0, %s108
      %s132 = sphi 0, %s134
      %s135 = sphi 0, %s132
      %s136 = sphi 0, %s135
      %s152 = sphi 0, %s136
      %s162 = sphi 0, %s164
      %s165 = sphi 0, %s162
      %s166 = sphi 0, %s165
      %s182 = sphi 0, %s166
      %s192 = sphi 0, %s194
      %s195 = sphi 0, %s192
      %s196 = sphi 0, %s195
      %s212 = sphi 0, %s196
      %s216 = sphi 0, %s216
      %s218 = sphi 0, %s216
      %s219 = sphi 0, %s218
      %s233 = sphi 0, %s219
      %s237 = sphi 0, %s237
      %s239 = sphi 0, %s237
      %s240 = sphi 0, %s239
      %s254 = sphi 0, %s240
      %s258 = sphi 0, %s258
      %s260 = sphi 0, %s258
      %s261 = sphi 0, %s260
      %s275 = sphi 0, %s261
      %s279 = sphi 0, %s279
      %s281 = sphi 0, %s279
      %s282 = sphi 0, %s281
      %s296 = sphi 0, %s282
      %s300 = sphi 0, %s300
      %s302 = sphi 0, %s300
      %s303 = sphi 0, %s302
      %s317 = sphi 0, %s303
      %s325 = sphi 0, %s327
      %s328 = sphi 0, %s325
      %s329 = sphi 0, %s328
      %s345 = sphi 0, %s329
    $region4: #{tpu_custom_call.1} parent=1 // loop_header_branch
      %23 = sbr.rel (%p21) target = $region8
    $region5: #{tpu_custom_call.1} parent=1 // loop_body
      %s25 = ssub.s32 %s20, 1
      %s26 = ssub.s32 %s20, 2
      %s33 = sadd.s32 1, %s28
      %p34 = scmp.ge.s32.totalorder %s33, 2
      %s35 = scalar_select %p34, 0, %s33
      %s36 = sadd.s32 1, %s27
      %s37 = scalar_select %p34, %s36, %s27
      %p38 = scmp.ge.s32.totalorder %s37, 2
      %s39 = scalar_select %p38, 0, %s37
      %s40 = ssub.s32 %s27, %s39
      %s41 = ssub.s32 %s28, %s35
      %s42 = sor.u32 %s40, %s41
      %p43 = scmp.eq.s32.totalorder %s42, 0
      %s45 = sadd.s32 %s44, 1
      %s46 = scalar_select %p43, %s44, %s45
      %p49 = pneg %p43
      %p50 = scmp.eq.s32.totalorder %s20, 3
      %p51 = por %p49, %p50
      %p52 = scmp.ne.s32.totalorder %s44, %s47
      %p53 = scmp.eq.s32.totalorder %s20, 0
      %p54 = por %p52, %p53
      %p55 = scmp.ne.s32.totalorder %s44, %s47
      %p56 = scmp.eq.s32.totalorder %s25, 3
      %p57 = por %p55, %p56
      %p58 = scmp.ne.s32.totalorder %s47, %s48
      %p59 = scmp.eq.s32.totalorder %s25, 0
      %p60 = por %p58, %p59
      %p61 = scmp.ne.s32.totalorder %s47, %s48
      %p62 = scmp.eq.s32.totalorder %s26, 3
      %p63 = por %p61, %p62
      %p65 = scmp.ne.s32.totalorder %s48, %s64
      %p66 = scmp.eq.s32.totalorder %s26, 0
      %p67 = por %p65, %p66
      %s68 = sadd.s32 %s28, 1
      %s69 = sadd.s32 %s35, 1
      %s70 = ssub.s32 %s27, %s39
      %s71 = ssub.s32 %s68, %s69
      %s72 = sor.u32 %s70, %s71
      %p73 = scmp.eq.s32.totalorder %s72, 0
      %s75 = sadd.s32 %s74, 1
      %s76 = scalar_select %p73, %s74, %s75
      %p79 = pneg %p73
      %p80 = scmp.eq.s32.totalorder %s20, 3
      %p81 = por %p79, %p80
      %p82 = scmp.ne.s32.totalorder %s74, %s77
      %p83 = scmp.eq.s32.totalorder %s20, 0
      %p84 = por %p82, %p83
      %p85 = scmp.ne.s32.totalorder %s74, %s77
      %p86 = scmp.eq.s32.totalorder %s25, 3
      %p87 = por %p85, %p86
      %p88 = scmp.ne.s32.totalorder %s77, %s78
      %p89 = scmp.eq.s32.totalorder %s25, 0
      %p90 = por %p88, %p89
      %p91 = scmp.ne.s32.totalorder %s77, %s78
      %p92 = scmp.eq.s32.totalorder %s26, 3
      %p93 = por %p91, %p92
      %p95 = scmp.ne.s32.totalorder %s78, %s94
      %p96 = scmp.eq.s32.totalorder %s26, 0
      %p97 = por %p95, %p96
      %s98 = sadd.s32 %s28, 2
      %s99 = sadd.s32 %s35, 2
      %s100 = ssub.s32 %s27, %s39
      %s101 = ssub.s32 %s98, %s99
      %s102 = sor.u32 %s100, %s101
      %p103 = scmp.eq.s32.totalorder %s102, 0
      %s105 = sadd.s32 %s104, 1
      %s106 = scalar_select %p103, %s104, %s105
      %p109 = pneg %p103
      %p110 = scmp.eq.s32.totalorder %s20, 3
      %p111 = por %p109, %p110
      %p112 = scmp.ne.s32.totalorder %s104, %s107
      %p113 = scmp.eq.s32.totalorder %s20, 0
      %p114 = por %p112, %p113
      %p115 = scmp.ne.s32.totalorder %s104, %s107
      %p116 = scmp.eq.s32.totalorder %s25, 3
      %p117 = por %p115, %p116
      %p118 = scmp.ne.s32.totalorder %s107, %s108
      %p119 = scmp.eq.s32.totalorder %s25, 0
      %p120 = por %p118, %p119
      %p121 = scmp.ne.s32.totalorder %s107, %s108
      %p122 = scmp.eq.s32.totalorder %s26, 3
      %p123 = por %p121, %p122
      %p125 = scmp.ne.s32.totalorder %s108, %s124
      %p126 = scmp.eq.s32.totalorder %s26, 0
      %p127 = por %p125, %p126
      %s128 = ssub.s32 %s27, %s39
      %s129 = ssub.s32 %s28, %s35
      %s130 = sor.u32 %s128, %s129
      %p131 = scmp.eq.s32.totalorder %s130, 0
      %s133 = sadd.s32 %s132, 1
      %s134 = scalar_select %p131, %s132, %s133
      %p137 = pneg %p131
      %p138 = scmp.eq.s32.totalorder %s20, 3
      %p139 = por %p137, %p138
      %p140 = scmp.ne.s32.totalorder %s132, %s135
      %p141 = scmp.eq.s32.totalorder %s20, 0
      %p142 = por %p140, %p141
      %p143 = scmp.ne.s32.totalorder %s132, %s135
      %p144 = scmp.eq.s32.totalorder %s25, 3
      %p145 = por %p143, %p144
      %p146 = scmp.ne.s32.totalorder %s135, %s136
      %p147 = scmp.eq.s32.totalorder %s25, 0
      %p148 = por %p146, %p147
      %p149 = scmp.ne.s32.totalorder %s135, %s136
      %p150 = scmp.eq.s32.totalorder %s26, 3
      %p151 = por %p149, %p150
      %p153 = scmp.ne.s32.totalorder %s136, %s152
      %p154 = scmp.eq.s32.totalorder %s26, 0
      %p155 = por %p153, %p154
      %s156 = sadd.s32 %s28, 1
      %s157 = sadd.s32 %s35, 1
      %s158 = ssub.s32 %s27, %s39
      %s159 = ssub.s32 %s156, %s157
      %s160 = sor.u32 %s158, %s159
      %p161 = scmp.eq.s32.totalorder %s160, 0
      %s163 = sadd.s32 %s162, 1
      %s164 = scalar_select %p161, %s162, %s163
      %p167 = pneg %p161
      %p168 = scmp.eq.s32.totalorder %s20, 3
      %p169 = por %p167, %p168
      %p170 = scmp.ne.s32.totalorder %s162, %s165
      %p171 = scmp.eq.s32.totalorder %s20, 0
      %p172 = por %p170, %p171
      %p173 = scmp.ne.s32.totalorder %s162, %s165
      %p174 = scmp.eq.s32.totalorder %s25, 3
      %p175 = por %p173, %p174
      %p176 = scmp.ne.s32.totalorder %s165, %s166
      %p177 = scmp.eq.s32.totalorder %s25, 0
      %p178 = por %p176, %p177
      %p179 = scmp.ne.s32.totalorder %s165, %s166
      %p180 = scmp.eq.s32.totalorder %s26, 3
      %p181 = por %p179, %p180
      %p183 = scmp.ne.s32.totalorder %s166, %s182
      %p184 = scmp.eq.s32.totalorder %s26, 0
      %p185 = por %p183, %p184
      %s186 = sadd.s32 %s28, 2
      %s187 = sadd.s32 %s35, 2
      %s188 = ssub.s32 %s27, %s39
      %s189 = ssub.s32 %s186, %s187
      %s190 = sor.u32 %s188, %s189
      %p191 = scmp.eq.s32.totalorder %s190, 0
      %s193 = sadd.s32 %s192, 1
      %s194 = scalar_select %p191, %s192, %s193
      %p197 = pneg %p191
      %p198 = scmp.eq.s32.totalorder %s20, 3
      %p199 = por %p197, %p198
      %p200 = scmp.ne.s32.totalorder %s192, %s195
      %p201 = scmp.eq.s32.totalorder %s20, 0
      %p202 = por %p200, %p201
      %p203 = scmp.ne.s32.totalorder %s192, %s195
      %p204 = scmp.eq.s32.totalorder %s25, 3
      %p205 = por %p203, %p204
      %p206 = scmp.ne.s32.totalorder %s195, %s196
      %p207 = scmp.eq.s32.totalorder %s25, 0
      %p208 = por %p206, %p207
      %p209 = scmp.ne.s32.totalorder %s195, %s196
      %p210 = scmp.eq.s32.totalorder %s26, 3
      %p211 = por %p209, %p210
      %p213 = scmp.ne.s32.totalorder %s196, %s212
      %p214 = scmp.eq.s32.totalorder %s26, 0
      %p215 = por %p213, %p214
      %s217 = sadd.s32 %s216, 1
      %p220 = scmp.eq.s32.totalorder %s20, 3
      %p221 = scmp.ne.s32.totalorder %s216, %s218
      %p222 = scmp.eq.s32.totalorder %s20, 0
      %p223 = por %p221, %p222
      %p224 = scmp.ne.s32.totalorder %s216, %s218
      %p225 = scmp.eq.s32.totalorder %s25, 3
      %p226 = por %p224, %p225
      %p227 = scmp.ne.s32.totalorder %s218, %s219
      %p228 = scmp.eq.s32.totalorder %s25, 0
      %p229 = por %p227, %p228
      %p230 = scmp.ne.s32.totalorder %s218, %s219
      %p231 = scmp.eq.s32.totalorder %s26, 3
      %p232 = por %p230, %p231
      %p234 = scmp.ne.s32.totalorder %s219, %s233
      %p235 = scmp.eq.s32.totalorder %s26, 0
      %p236 = por %p234, %p235
      %s238 = sadd.s32 %s237, 1
      %p241 = scmp.eq.s32.totalorder %s20, 3
      %p242 = scmp.ne.s32.totalorder %s237, %s239
      %p243 = scmp.eq.s32.totalorder %s20, 0
      %p244 = por %p242, %p243
      %p245 = scmp.ne.s32.totalorder %s237, %s239
      %p246 = scmp.eq.s32.totalorder %s25, 3
      %p247 = por %p245, %p246
      %p248 = scmp.ne.s32.totalorder %s239, %s240
      %p249 = scmp.eq.s32.totalorder %s25, 0
      %p250 = por %p248, %p249
      %p251 = scmp.ne.s32.totalorder %s239, %s240
      %p252 = scmp.eq.s32.totalorder %s26, 3
      %p253 = por %p251, %p252
      %p255 = scmp.ne.s32.totalorder %s240, %s254
      %p256 = scmp.eq.s32.totalorder %s26, 0
      %p257 = por %p255, %p256
      %s259 = sadd.s32 %s258, 1
      %p262 = scmp.eq.s32.totalorder %s20, 3
      %p263 = scmp.ne.s32.totalorder %s258, %s260
      %p264 = scmp.eq.s32.totalorder %s20, 0
      %p265 = por %p263, %p264
      %p266 = scmp.ne.s32.totalorder %s258, %s260
      %p267 = scmp.eq.s32.totalorder %s25, 3
      %p268 = por %p266, %p267
      %p269 = scmp.ne.s32.totalorder %s260, %s261
      %p270 = scmp.eq.s32.totalorder %s25, 0
      %p271 = por %p269, %p270
      %p272 = scmp.ne.s32.totalorder %s260, %s261
      %p273 = scmp.eq.s32.totalorder %s26, 3
      %p274 = por %p272, %p273
      %p276 = scmp.ne.s32.totalorder %s261, %s275
      %p277 = scmp.eq.s32.totalorder %s26, 0
      %p278 = por %p276, %p277
      %s280 = sadd.s32 %s279, 1
      %p283 = scmp.eq.s32.totalorder %s20, 3
      %p284 = scmp.ne.s32.totalorder %s279, %s281
      %p285 = scmp.eq.s32.totalorder %s20, 0
      %p286 = por %p284, %p285
      %p287 = scmp.ne.s32.totalorder %s279, %s281
      %p288 = scmp.eq.s32.totalorder %s25, 3
      %p289 = por %p287, %p288
      %p290 = scmp.ne.s32.totalorder %s281, %s282
      %p291 = scmp.eq.s32.totalorder %s25, 0
      %p292 = por %p290, %p291
      %p293 = scmp.ne.s32.totalorder %s281, %s282
      %p294 = scmp.eq.s32.totalorder %s26, 3
      %p295 = por %p293, %p294
      %p297 = scmp.ne.s32.totalorder %s282, %s296
      %p298 = scmp.eq.s32.totalorder %s26, 0
      %p299 = por %p297, %p298
      %s301 = sadd.s32 %s300, 1
      %p304 = scmp.eq.s32.totalorder %s20, 3
      %p305 = scmp.ne.s32.totalorder %s300, %s302
      %p306 = scmp.eq.s32.totalorder %s20, 0
      %p307 = por %p305, %p306
      %p308 = scmp.ne.s32.totalorder %s300, %s302
      %p309 = scmp.eq.s32.totalorder %s25, 3
      %p310 = por %p308, %p309
      %p311 = scmp.ne.s32.totalorder %s302, %s303
      %p312 = scmp.eq.s32.totalorder %s25, 0
      %p313 = por %p311, %p312
      %p314 = scmp.ne.s32.totalorder %s302, %s303
      %p315 = scmp.eq.s32.totalorder %s26, 3
      %p316 = por %p314, %p315
      %p318 = scmp.ne.s32.totalorder %s303, %s317
      %p319 = scmp.eq.s32.totalorder %s26, 0
      %p320 = por %p318, %p319
      %s321 = ssub.s32 %s27, %s39
      %s322 = ssub.s32 %s28, %s35
      %s323 = sor.u32 %s321, %s322
      %p324 = scmp.eq.s32.totalorder %s323, 0
      %s326 = sadd.s32 %s325, 1
      %s327 = scalar_select %p324, %s325, %s326
      %p330 = pneg %p324
      %p331 = scmp.eq.s32.totalorder %s20, 3
      %p332 = por %p330, %p331
      %p333 = scmp.ne.s32.totalorder %s325, %s328
      %p334 = scmp.eq.s32.totalorder %s20, 0
      %p335 = por %p333, %p334
      %p336 = scmp.ne.s32.totalorder %s325, %s328
      %p337 = scmp.eq.s32.totalorder %s25, 3
      %p338 = por %p336, %p337
      %p339 = scmp.ne.s32.totalorder %s328, %s329
      %p340 = scmp.eq.s32.totalorder %s25, 0
      %p341 = por %p339, %p340
      %p342 = scmp.ne.s32.totalorder %s328, %s329
      %p343 = scmp.eq.s32.totalorder %s26, 3
      %p344 = por %p342, %p343
      %p346 = scmp.ne.s32.totalorder %s329, %s345
      %p347 = scmp.eq.s32.totalorder %s26, 0
      %p348 = por %p346, %p347
      %p349 = scmp.le.s32.totalorder 1, %s20
      %p350 = scmp.lt.s32.totalorder %s20, 5
      %p351 = pnand %p349, %p350
      %p352 = pneg %p351
      // Predicated region
      $region9: #{tpu_custom_call.1} parent=5 // pred_check
        _
      $region10: #{tpu_custom_call.1} parent=5 // pred_check_branch
        %354 = sbr.rel (%p351) target = $region12
      $region11: #{tpu_custom_call.1} parent=5 // pred_region
        %s355 = ssub.s32 %s20, 1
        // Predicated region
        $region13: #{tpu_custom_call.1} parent=11 // pred_check
          %p356 = pneg %p229
        $region14: #{tpu_custom_call.1} parent=11 // pred_check_branch
          %358 = sbr.rel (%p356) target = $region16
        $region15: #{tpu_custom_call.1} parent=11 // pred_region
          _
        $region16: #{tpu_custom_call.1} parent=11 // pred_fallthru
          _
        // Predicated region
        $region17: #{tpu_custom_call.1} parent=11 // pred_check
          %p359 = pneg %p250
        $region18: #{tpu_custom_call.1} parent=11 // pred_check_branch
          %361 = sbr.rel (%p359) target = $region20
        $region19: #{tpu_custom_call.1} parent=11 // pred_region
          _
        $region20: #{tpu_custom_call.1} parent=11 // pred_fallthru
          _
        // Predicated region
        $region21: #{tpu_custom_call.1} parent=11 // pred_check
          %p362 = pneg %p271
        $region22: #{tpu_custom_call.1} parent=11 // pred_check_branch
          %364 = sbr.rel (%p362) target = $region24
        $region23: #{tpu_custom_call.1} parent=11 // pred_region
          _
        $region24: #{tpu_custom_call.1} parent=11 // pred_fallthru
          _
        // Predicated region
        $region25: #{tpu_custom_call.1} parent=11 // pred_check
          %p365 = pneg %p292
        $region26: #{tpu_custom_call.1} parent=11 // pred_check_branch
          %367 = sbr.rel (%p365) target = $region28
        $region27: #{tpu_custom_call.1} parent=11 // pred_region
          _
        $region28: #{tpu_custom_call.1} parent=11 // pred_fallthru
          _
        // Predicated region
        $region29: #{tpu_custom_call.1} parent=11 // pred_check
          %p368 = pneg %p313
        $region30: #{tpu_custom_call.1} parent=11 // pred_check_branch
          %370 = sbr.rel (%p368) target = $region32
        $region31: #{tpu_custom_call.1} parent=11 // pred_region
          _
        $region32: #{tpu_custom_call.1} parent=11 // pred_fallthru
          _
      $region12: #{tpu_custom_call.1} parent=5 // pred_fallthru
        _
      %p371 = scmp.lt.s32.totalorder %s20, 4
      // Predicated region
      $region33: #{tpu_custom_call.1} parent=5 // pred_check
        %p372 = pneg %p371
      $region34: #{tpu_custom_call.1} parent=5 // pred_check_branch
        %374 = sbr.rel (%p372) target = $region36
      $region35: #{tpu_custom_call.1} parent=5 // pred_region
        // Predicated region
        $region37: #{tpu_custom_call.1} parent=35 // pred_check
          %p375 = pneg %p54
        $region38: #{tpu_custom_call.1} parent=35 // pred_check_branch
          %377 = sbr.rel (%p375) target = $region40
        $region39: #{tpu_custom_call.1} parent=35 // pred_region
          %s378 = smul.u32 4, %s28
          %p379 = scmp.lt.s32.totalorder %s27, 1
          %s380 = scalar_select %p379, %s27, 1
          %p381 = scmp.lt.s32.totalorder %s378, 15
          %s382 = scalar_select %p381, %s378, 15
          %s383 = smul.addr %s380, 16
          %s384 = sadd.s32 %s382, %s383
          %s385 = smul.addr %s384, 8
          %s386 = scalar_lea.vmem %s0, %s385
          %s387 = smul.u32 4, %s28
        $region40: #{tpu_custom_call.1} parent=35 // pred_fallthru
          _
        // Predicated region
        $region41: #{tpu_custom_call.1} parent=35 // pred_check
          %p388 = pneg %p84
        $region42: #{tpu_custom_call.1} parent=35 // pred_check_branch
          %390 = sbr.rel (%p388) target = $region44
        $region43: #{tpu_custom_call.1} parent=35 // pred_region
          %s391 = sadd.s32 %s28, 1
          %s392 = smul.u32 4, %s391
          %p393 = scmp.lt.s32.totalorder %s27, 1
          %s394 = scalar_select %p393, %s27, 1
          %p395 = scmp.lt.s32.totalorder %s392, 15
          %s396 = scalar_select %p395, %s392, 15
          %s397 = smul.addr %s394, 16
          %s398 = sadd.s32 %s396, %s397
          %s399 = smul.addr %s398, 8
          %s400 = scalar_lea.vmem %s1, %s399
          %s401 = sadd.s32 %s28, 1
          %s402 = smul.u32 4, %s401
        $region44: #{tpu_custom_call.1} parent=35 // pred_fallthru
          _
        // Predicated region
        $region45: #{tpu_custom_call.1} parent=35 // pred_check
          %p403 = pneg %p114
        $region46: #{tpu_custom_call.1} parent=35 // pred_check_branch
          %405 = sbr.rel (%p403) target = $region48
        $region47: #{tpu_custom_call.1} parent=35 // pred_region
          %s406 = sadd.s32 %s28, 2
          %s407 = smul.u32 4, %s406
          %p408 = scmp.lt.s32.totalorder %s27, 1
          %s409 = scalar_select %p408, %s27, 1
          %p410 = scmp.lt.s32.totalorder %s407, 15
          %s411 = scalar_select %p410, %s407, 15
          %s412 = smul.addr %s409, 16
          %s413 = sadd.s32 %s411, %s412
          %s414 = smul.addr %s413, 8
          %s415 = scalar_lea.vmem %s2, %s414
          %s416 = sadd.s32 %s28, 2
          %s417 = smul.u32 4, %s416
        $region48: #{tpu_custom_call.1} parent=35 // pred_fallthru
          _
        // Predicated region
        $region49: #{tpu_custom_call.1} parent=35 // pred_check
          %p418 = pneg %p142
        $region50: #{tpu_custom_call.1} parent=35 // pred_check_branch
          %420 = sbr.rel (%p418) target = $region52
        $region51: #{tpu_custom_call.1} parent=35 // pred_region
          %s421 = smul.u32 4, %s28
          %p422 = scmp.lt.s32.totalorder %s27, 1
          %s423 = scalar_select %p422, %s27, 1
          %p424 = scmp.lt.s32.totalorder %s421, 15
          %s425 = scalar_select %p424, %s421, 15
          %s426 = smul.addr %s423, 16
          %s427 = sadd.s32 %s425, %s426
          %s428 = smul.addr %s427, 4
          %s429 = scalar_lea.vmem %s3, %s428
          %s430 = smul.u32 4, %s28
        $region52: #{tpu_custom_call.1} parent=35 // pred_fallthru
          _
        // Predicated region
        $region53: #{tpu_custom_call.1} parent=35 // pred_check
          %p431 = pneg %p172
        $region54: #{tpu_custom_call.1} parent=35 // pred_check_branch
          %433 = sbr.rel (%p431) target = $region56
        $region55: #{tpu_custom_call.1} parent=35 // pred_region
          %s434 = sadd.s32 %s28, 1
          %s435 = smul.u32 4, %s434
          %p436 = scmp.lt.s32.totalorder %s27, 1
          %s437 = scalar_select %p436, %s27, 1
          %p438 = scmp.lt.s32.totalorder %s435, 15
          %s439 = scalar_select %p438, %s435, 15
          %s440 = smul.addr %s437, 16
          %s441 = sadd.s32 %s439, %s440
          %s442 = smul.addr %s441, 4
          %s443 = scalar_lea.vmem %s4, %s442
          %s444 = sadd.s32 %s28, 1
          %s445 = smul.u32 4, %s444
        $region56: #{tpu_custom_call.1} parent=35 // pred_fallthru
          _
        // Predicated region
        $region57: #{tpu_custom_call.1} parent=35 // pred_check
          %p446 = pneg %p202
        $region58: #{tpu_custom_call.1} parent=35 // pred_check_branch
          %448 = sbr.rel (%p446) target = $region60
        $region59: #{tpu_custom_call.1} parent=35 // pred_region
          %s449 = sadd.s32 %s28, 2
          %s450 = smul.u32 4, %s449
          %p451 = scmp.lt.s32.totalorder %s27, 1
          %s452 = scalar_select %p451, %s27, 1
          %p453 = scmp.lt.s32.totalorder %s450, 15
          %s454 = scalar_select %p453, %s450, 15
          %s455 = smul.addr %s452, 16
          %s456 = sadd.s32 %s454, %s455
          %s457 = smul.addr %s456, 4
          %s458 = scalar_lea.vmem %s5, %s457
          %s459 = sadd.s32 %s28, 2
          %s460 = smul.u32 4, %s459
        $region60: #{tpu_custom_call.1} parent=35 // pred_fallthru
          _
      $region36: #{tpu_custom_call.1} parent=5 // pred_fallthru
        _
      %p461 = scmp.le.s32.totalorder 1, %s20
      %p462 = scmp.lt.s32.totalorder %s20, 5
      %p463 = pnand %p461, %p462
      %p464 = pneg %p463
      // Predicated region
      $region61: #{tpu_custom_call.1} parent=5 // pred_check
        _
      $region62: #{tpu_custom_call.1} parent=5 // pred_check_branch
        %466 = sbr.rel (%p463) target = $region64
      $region63: #{tpu_custom_call.1} parent=5 // pred_region
        %s467 = ssub.s32 %s20, 1
        %s468 = smul.u32 4, %s30
        %p469 = scmp.lt.s32.totalorder %s29, 1
        %s470 = scalar_select %p469, %s29, 1
        %p471 = scmp.lt.s32.totalorder %s468, 15
        %s472 = scalar_select %p471, %s468, 15
        %s473 = smul.addr %s470, 16
        %s474 = sadd.s32 %s472, %s473
        %s475 = smul.addr %s474, 8
        %s476 = scalar_lea.vmem %s0, %s475
        %p477 = pneg %p60
        %p478 = pneg %p57
        %s479 = sadd.s32 %s30, 1
        %s480 = smul.u32 4, %s479
        %p481 = scmp.lt.s32.totalorder %s29, 1
        %s482 = scalar_select %p481, %s29, 1
        %p483 = scmp.lt.s32.totalorder %s480, 15
        %s484 = scalar_select %p483, %s480, 15
        %s485 = smul.addr %s482, 16
        %s486 = sadd.s32 %s484, %s485
        %s487 = smul.addr %s486, 8
        %s488 = scalar_lea.vmem %s1, %s487
        %p489 = pneg %p90
        %p490 = pneg %p87
        %s491 = sadd.s32 %s30, 2
        %s492 = smul.u32 4, %s491
        %p493 = scmp.lt.s32.totalorder %s29, 1
        %s494 = scalar_select %p493, %s29, 1
        %p495 = scmp.lt.s32.totalorder %s492, 15
        %s496 = scalar_select %p495, %s492, 15
        %s497 = smul.addr %s494, 16
        %s498 = sadd.s32 %s496, %s497
        %s499 = smul.addr %s498, 8
        %s500 = scalar_lea.vmem %s2, %s499
        %p501 = pneg %p120
        %p502 = pneg %p117
        %s503 = smul.u32 4, %s30
        %p504 = scmp.lt.s32.totalorder %s29, 1
        %s505 = scalar_select %p504, %s29, 1
        %p506 = scmp.lt.s32.totalorder %s503, 15
        %s507 = scalar_select %p506, %s503, 15
        %s508 = smul.addr %s505, 16
        %s509 = sadd.s32 %s507, %s508
        %s510 = smul.addr %s509, 4
        %s511 = scalar_lea.vmem %s3, %s510
        %p512 = pneg %p148
        %p513 = pneg %p145
        %s514 = sadd.s32 %s30, 1
        %s515 = smul.u32 4, %s514
        %p516 = scmp.lt.s32.totalorder %s29, 1
        %s517 = scalar_select %p516, %s29, 1
        %p518 = scmp.lt.s32.totalorder %s515, 15
        %s519 = scalar_select %p518, %s515, 15
        %s520 = smul.addr %s517, 16
        %s521 = sadd.s32 %s519, %s520
        %s522 = smul.addr %s521, 4
        %s523 = scalar_lea.vmem %s4, %s522
        %p524 = pneg %p178
        %p525 = pneg %p175
        %s526 = sadd.s32 %s30, 2
        %s527 = smul.u32 4, %s526
        %p528 = scmp.lt.s32.totalorder %s29, 1
        %s529 = scalar_select %p528, %s29, 1
        %p530 = scmp.lt.s32.totalorder %s527, 15
        %s531 = scalar_select %p530, %s527, 15
        %s532 = smul.addr %s529, 16
        %s533 = sadd.s32 %s531, %s532
        %s534 = smul.addr %s533, 4
        %s535 = scalar_lea.vmem %s5, %s534
        %p536 = pneg %p208
        %p537 = pneg %p205
        %p538 = pneg %p229
        %p539 = pneg %p226
        %p540 = pneg %p250
        %p541 = pneg %p247
        %p542 = pneg %p271
        %p543 = pneg %p268
        %p544 = pneg %p292
        %p545 = pneg %p289
        %p546 = pneg %p313
        %p547 = pneg %p310
        %p548 = pneg %p341
        %p549 = pneg %p338
        %s550 = sand.u32 %s328, 1
        %s551 = scalar_lea.sflag [#allocation3], %s550
        %s552 = sand.u32 %s328, 1
        %s553 = smul.addr %s552, 256
        %s554 = scalar_lea.vmem [#allocation2], %s553
        %s555 = smul.u32 4, %s30
        %p556 = scmp.lt.s32.totalorder %s29, 1
        %s557 = scalar_select %p556, %s29, 1
        %p558 = scmp.lt.s32.totalorder %s555, 15
        %s559 = scalar_select %p558, %s555, 15
        %s560 = smul.addr %s557, 16
        %s561 = sadd.s32 %s559, %s560
        %s562 = smul.addr %s561, 8
        %s563 = scalar_lea.vmem %s0, %s562
        %s564 = smul.u32 4, %s30
        %s565 = sadd.s32 %s30, 1
        %s566 = smul.u32 4, %s565
        %p567 = scmp.lt.s32.totalorder %s29, 1
        %s568 = scalar_select %p567, %s29, 1
        %p569 = scmp.lt.s32.totalorder %s566, 15
        %s570 = scalar_select %p569, %s566, 15
        %s571 = smul.addr %s568, 16
        %s572 = sadd.s32 %s570, %s571
        %s573 = smul.addr %s572, 8
        %s574 = scalar_lea.vmem %s1, %s573
        %s575 = sadd.s32 %s30, 1
        %s576 = smul.u32 4, %s575
        %s577 = sadd.s32 %s30, 2
        %s578 = smul.u32 4, %s577
        %p579 = scmp.lt.s32.totalorder %s29, 1
        %s580 = scalar_select %p579, %s29, 1
        %p581 = scmp.lt.s32.totalorder %s578, 15
        %s582 = scalar_select %p581, %s578, 15
        %s583 = smul.addr %s580, 16
        %s584 = sadd.s32 %s582, %s583
        %s585 = smul.addr %s584, 8
        %s586 = scalar_lea.vmem %s2, %s585
        %s587 = sadd.s32 %s30, 2
        %s588 = smul.u32 4, %s587
        %s589 = smul.u32 4, %s30
        %p590 = scmp.lt.s32.totalorder %s29, 1
        %s591 = scalar_select %p590, %s29, 1
        %p592 = scmp.lt.s32.totalorder %s589, 15
        %s593 = scalar_select %p592, %s589, 15
        %s594 = smul.addr %s591, 16
        %s595 = sadd.s32 %s593, %s594
        %s596 = smul.addr %s595, 4
        %s597 = scalar_lea.vmem %s3, %s596
        %s598 = smul.u32 4, %s30
        %s599 = sadd.s32 %s30, 1
        %s600 = smul.u32 4, %s599
        %p601 = scmp.lt.s32.totalorder %s29, 1
        %s602 = scalar_select %p601, %s29, 1
        %p603 = scmp.lt.s32.totalorder %s600, 15
        %s604 = scalar_select %p603, %s600, 15
        %s605 = smul.addr %s602, 16
        %s606 = sadd.s32 %s604, %s605
        %s607 = smul.addr %s606, 4
        %s608 = scalar_lea.vmem %s4, %s607
        %s609 = sadd.s32 %s30, 1
        %s610 = smul.u32 4, %s609
        %s611 = sadd.s32 %s30, 2
        %s612 = smul.u32 4, %s611
        %p613 = scmp.lt.s32.totalorder %s29, 1
        %s614 = scalar_select %p613, %s29, 1
        %p615 = scmp.lt.s32.totalorder %s612, 15
        %s616 = scalar_select %p615, %s612, 15
        %s617 = smul.addr %s614, 16
        %s618 = sadd.s32 %s616, %s617
        %s619 = smul.addr %s618, 4
        %s620 = scalar_lea.vmem %s5, %s619
        %s621 = sadd.s32 %s30, 2
        %s622 = smul.u32 4, %s621
        %s623 = smul.u32 4, %s30
        %v624 = vld [vmem:[%s6] sm:$0xff]
        %v625 = vld [vmem:[%s7] sm:$0xff]
        %v626 = vld [vmem:[%s8] sm:$0xff]
        %v627 = vld [vmem:[%s9] sm:$0xff]
        %v628 = vld [vmem:[%s10] sm:$0xff]
        %v629 = vld [vmem:[%s10 + $0x8] sm:$0x3]
        %v630 = vlaneseq
        %v631 = vand.u32 %v630, 127
        %vm632 = vcmp.ge.s32.totalorder %v631, 1
        %vm633 = vcmp.le.s32.totalorder %v631, 8
        %vm634 = vmand %vm632, %vm633
        %v635 = vsel %vm634, 1, 0
        %v636 = vcvt.s32.f32 %v635
        %v637 = vld [vmem:[%s563] sm:$0x3f]
        %v638 = vld [vmem:[%s597] sm:$0xf]
        %640 = vset.pattern.permute.xlu0 0
        %641 = vperm.xlu0 %640, %v625
        %v642 = vpop.permute.xlu0 %641
        %vm644 = vcmask 48128
        %v646 = vsel %vm644, %v624, 0
        %vm648 = vcmask 1045504
        %v650 = vsel %vm648, %v637, 0
        %652 = vmatprep.subr.mxu0 0.0
        %653 = vmatpush1.msra.mxu0 %v650
        %654 = vmatprep.subr.mxu0 0.0
        %655 = vmatpush1.msra.mxu0 0.0
        %656 = vmatprep.subr.mxu0 0.0
        %657 = vmatpush1.msra.mxu0 0.0
        %658 = vmatprep.subr.mxu0 0.0
        %659 = vmatpush1.msra.mxu0 0.0
        %660 = vmatprep.subr.mxu0 0.0
        %661 = vmatpush1.msra.mxu0 0.0
        %662 = vmatprep.subr.mxu0 0.0
        %663 = vmatpush1.msra.mxu0 0.0
        %664 = vmatprep.subr.mxu0 0.0
        %665 = vmatpush1.msra.mxu0 0.0
        %666 = vmatprep.subr.mxu0 0.0
        %667 = vmatpush1.msra.mxu0 0.0
        %668 = vmatprep.subr.mxu0 0.0
        %669 = vmatpush1.msra.mxu0 0.0
        %670 = vmatprep.subr.mxu0 0.0
        %671 = vmatpush1.msra.mxu0 0.0
        %672 = vmatprep.subr.mxu0 0.0
        %673 = vmatpush1.msra.mxu0 0.0
        %674 = vmatprep.subr.mxu0 0.0
        %675 = vmatpush1.msra.mxu0 0.0
        %676 = vmatprep.subr.mxu0 0.0
        %677 = vmatpush1.msra.mxu0 0.0
        %678 = vmatprep.subr.mxu0 0.0
        %679 = vmatpush1.msra.mxu0 0.0
        %680 = vmatprep.subr.mxu0 0.0
        %681 = vmatpush1.msra.mxu0 0.0
        %682 = vmatprep.subr.mxu0 0.0
        %683 = vmatpush1.msra.mxu0 0.0
        %684 = vmatprep.subr.mxu0 0.0
        %685 = vmatpush1.msra.mxu0 0.0
        %686 = vmatprep.subr.mxu0 0.0
        %687 = vmatpush1.msra.mxu0 0.0
        %688 = vmatprep.subr.mxu0 0.0
        %689 = vmatpush1.msra.mxu0 0.0
        %690 = vmatprep.subr.mxu0 0.0
        %691 = vmatpush1.msra.mxu0 0.0
        %692 = vmatprep.subr.mxu0 0.0
        %693 = vmatpush1.msra.mxu0 0.0
        %694 = vmatprep.subr.mxu0 0.0
        %695 = vmatpush1.msra.mxu0 0.0
        %696 = vmatprep.subr.mxu0 0.0
        %697 = vmatpush1.msra.mxu0 0.0
        %698 = vmatprep.subr.mxu0 0.0
        %699 = vmatpush1.msra.mxu0 0.0
        %700 = vmatprep.subr.mxu0 0.0
        %701 = vmatpush1.msra.mxu0 0.0
        %702 = vmatprep.subr.mxu0 0.0
        %703 = vmatpush1.msra.mxu0 0.0
        %704 = vmatprep.subr.mxu0 0.0
        %705 = vmatpush1.msra.mxu0 0.0
        %706 = vmatprep.subr.mxu0 0.0
        %707 = vmatpush1.msra.mxu0 0.0
        %708 = vmatprep.subr.mxu0 0.0
        %709 = vmatpush1.msra.mxu0 0.0
        %710 = vmatprep.subr.mxu0 0.0
        %711 = vmatpush1.msra.mxu0 0.0
        %712 = vmatprep.subr.mxu0 0.0
        %713 = vmatpush1.msra.mxu0 0.0
        %714 = vmatprep.subr.mxu0 0.0
        %715 = vmatpush1.msra.mxu0 0.0
        %716 = vmatprep.mubr.f32.mxu0 0.0
        %717 = vmatmul.mubr.f32.gmra.mrb[0].mxu0 %v646
        %v718 = vpop.f32.mrb[0].mxu0
        %v719 = vadd.f32 %v642, %v718
        %v720 = vpop.f32.mrb[0].mxu0
        %721 = vdwg.mxu0
        %s722 = smul.u32 %s30, 4
        %p723 = scmp.ge.s32.totalorder %s722, 1
        %p724 = scmp.le.s32.totalorder %s722, 8
        %p725 = pnand %p723, %p724
        %p726 = pneg %p725
        %s727 = scalar_select %p726, 1, 0
        %s728 = scvt.s32.f32 %s727
        %v729 = vmul.f32 %v719, %v636
        %v730 = vstv %s728
        %v731 = vmul.f32 %v729, %v730
        %vm732 = vcmask 80896
        %v734 = vsel %vm732, %v731, 0
        %v737 = vsel %vm732, %v638, 0
        %vm739 = vcmask 1041408
        %v741 = vsel %vm739, %v629, 0
        %743 = vmatprep.subr.mxu0 0.0
        %744 = vmatpush1.msra.mxu0 %v628
        %745 = vmatprep.subr.mxu0 0.0
        %746 = vmatpush1.msra.mxu0 %v741
        %747 = vmatprep.subr.mxu0 0.0
        %748 = vmatpush1.msra.mxu0 0.0
        %749 = vmatprep.subr.mxu0 0.0
        %750 = vmatpush1.msra.mxu0 0.0
        %751 = vmatprep.subr.mxu0 0.0
        %752 = vmatpush1.msra.mxu0 0.0
        %753 = vmatprep.subr.mxu0 0.0
        %754 = vmatpush1.msra.mxu0 0.0
        %755 = vmatprep.subr.mxu0 0.0
        %756 = vmatpush1.msra.mxu0 0.0
        %757 = vmatprep.subr.mxu0 0.0
        %758 = vmatpush1.msra.mxu0 0.0
        %759 = vmatprep.subr.mxu0 0.0
        %760 = vmatpush1.msra.mxu0 0.0
        %761 = vmatprep.subr.mxu0 0.0
        %762 = vmatpush1.msra.mxu0 0.0
        %763 = vmatprep.subr.mxu0 0.0
        %764 = vmatpush1.msra.mxu0 0.0
        %765 = vmatprep.subr.mxu0 0.0
        %766 = vmatpush1.msra.mxu0 0.0
        %767 = vmatprep.subr.mxu0 0.0
        %768 = vmatpush1.msra.mxu0 0.0
        %769 = vmatprep.subr.mxu0 0.0
        %770 = vmatpush1.msra.mxu0 0.0
        %771 = vmatprep.subr.mxu0 0.0
        %772 = vmatpush1.msra.mxu0 0.0
        %773 = vmatprep.subr.mxu0 0.0
        %774 = vmatpush1.msra.mxu0 0.0
        %775 = vmatprep.subr.mxu0 0.0
        %776 = vmatpush1.msra.mxu0 0.0
        %777 = vmatprep.subr.mxu0 0.0
        %778 = vmatpush1.msra.mxu0 0.0
        %779 = vmatprep.subr.mxu0 0.0
        %780 = vmatpush1.msra.mxu0 0.0
        %781 = vmatprep.subr.mxu0 0.0
        %782 = vmatpush1.msra.mxu0 0.0
        %783 = vmatprep.subr.mxu0 0.0
        %784 = vmatpush1.msra.mxu0 0.0
        %785 = vmatprep.subr.mxu0 0.0
        %786 = vmatpush1.msra.mxu0 0.0
        %787 = vmatprep.subr.mxu0 0.0
        %788 = vmatpush1.msra.mxu0 0.0
        %789 = vmatprep.subr.mxu0 0.0
        %790 = vmatpush1.msra.mxu0 0.0
        %791 = vmatprep.subr.mxu0 0.0
        %792 = vmatpush1.msra.mxu0 0.0
        %793 = vmatprep.subr.mxu0 0.0
        %794 = vmatpush1.msra.mxu0 0.0
        %795 = vmatprep.subr.mxu0 0.0
        %796 = vmatpush1.msra.mxu0 0.0
        %797 = vmatprep.subr.mxu0 0.0
        %798 = vmatpush1.msra.mxu0 0.0
        %799 = vmatprep.subr.mxu0 0.0
        %800 = vmatpush1.msra.mxu0 0.0
        %801 = vmatprep.subr.mxu0 0.0
        %802 = vmatpush1.msra.mxu0 0.0
        %803 = vmatprep.subr.mxu0 0.0
        %804 = vmatpush1.msra.mxu0 0.0
        %805 = vmatprep.subr.mxu0 0.0
        %806 = vmatpush1.msra.mxu0 0.0
        %807 = vmatprep.mubr.f32.mxu0 0.0
        %808 = vmatmul.mubr.f32.gmra.mrb[0].mxu0 %v734
        %v809 = vpop.f32.mrb[0].mxu0
        %v810 = vadd.f32 0.0, %v809
        %v811 = vpop.f32.mrb[0].mxu0
        %812 = vmatprep.mubr.f32.mxu0 0.0
        %813 = vmatmul.mubr.f32.gmra.mrb[0].mxu0 %v737
        %v814 = vpop.f32.mrb[0].mxu0
        %v815 = vadd.f32 0.0, %v814
        %v816 = vpop.f32.mrb[0].mxu0
        %817 = vdwg.mxu0
        %s818 = scalar_lea.vmem %s563, 8
        %v819 = vld [vmem:[%s818] sm:$0x3f]
        %s820 = scalar_lea.vmem %s597, 4
        %v821 = vld [vmem:[%s820] sm:$0xf]
        %v823 = vsel %vm648, %v819, 0
        %825 = vmatprep.subr.mxu0 0.0
        %826 = vmatpush1.msra.mxu0 %v823
        %827 = vmatprep.subr.mxu0 0.0
        %828 = vmatpush1.msra.mxu0 0.0
        %829 = vmatprep.subr.mxu0 0.0
        %830 = vmatpush1.msra.mxu0 0.0
        %831 = vmatprep.subr.mxu0 0.0
        %832 = vmatpush1.msra.mxu0 0.0
        %833 = vmatprep.subr.mxu0 0.0
        %834 = vmatpush1.msra.mxu0 0.0
        %835 = vmatprep.subr.mxu0 0.0
        %836 = vmatpush1.msra.mxu0 0.0
        %837 = vmatprep.subr.mxu0 0.0
        %838 = vmatpush1.msra.mxu0 0.0
        %839 = vmatprep.subr.mxu0 0.0
        %840 = vmatpush1.msra.mxu0 0.0
        %841 = vmatprep.subr.mxu0 0.0
        %842 = vmatpush1.msra.mxu0 0.0
        %843 = vmatprep.subr.mxu0 0.0
        %844 = vmatpush1.msra.mxu0 0.0
        %845 = vmatprep.subr.mxu0 0.0
        %846 = vmatpush1.msra.mxu0 0.0
        %847 = vmatprep.subr.mxu0 0.0
        %848 = vmatpush1.msra.mxu0 0.0
        %849 = vmatprep.subr.mxu0 0.0
        %850 = vmatpush1.msra.mxu0 0.0
        %851 = vmatprep.subr.mxu0 0.0
        %852 = vmatpush1.msra.mxu0 0.0
        %853 = vmatprep.subr.mxu0 0.0
        %854 = vmatpush1.msra.mxu0 0.0
        %855 = vmatprep.subr.mxu0 0.0
        %856 = vmatpush1.msra.mxu0 0.0
        %857 = vmatprep.subr.mxu0 0.0
        %858 = vmatpush1.msra.mxu0 0.0
        %859 = vmatprep.subr.mxu0 0.0
        %860 = vmatpush1.msra.mxu0 0.0
        %861 = vmatprep.subr.mxu0 0.0
        %862 = vmatpush1.msra.mxu0 0.0
        %863 = vmatprep.subr.mxu0 0.0
        %864 = vmatpush1.msra.mxu0 0.0
        %865 = vmatprep.subr.mxu0 0.0
        %866 = vmatpush1.msra.mxu0 0.0
        %867 = vmatprep.subr.mxu0 0.0
        %868 = vmatpush1.msra.mxu0 0.0
        %869 = vmatprep.subr.mxu0 0.0
        %870 = vmatpush1.msra.mxu0 0.0
        %871 = vmatprep.subr.mxu0 0.0
        %872 = vmatpush1.msra.mxu0 0.0
        %873 = vmatprep.subr.mxu0 0.0
        %874 = vmatpush1.msra.mxu0 0.0
        %875 = vmatprep.subr.mxu0 0.0
        %876 = vmatpush1.msra.mxu0 0.0
        %877 = vmatprep.subr.mxu0 0.0
        %878 = vmatpush1.msra.mxu0 0.0
        %879 = vmatprep.subr.mxu0 0.0
        %880 = vmatpush1.msra.mxu0 0.0
        %881 = vmatprep.subr.mxu0 0.0
        %882 = vmatpush1.msra.mxu0 0.0
        %883 = vmatprep.subr.mxu0 0.0
        %884 = vmatpush1.msra.mxu0 0.0
        %885 = vmatprep.subr.mxu0 0.0
        %886 = vmatpush1.msra.mxu0 0.0
        %887 = vmatprep.subr.mxu0 0.0
        %888 = vmatpush1.msra.mxu0 0.0
        %889 = vmatprep.mubr.f32.mxu0 0.0
        %890 = vmatmul.mubr.f32.gmra.mrb[0].mxu0 %v646
        %v891 = vpop.f32.mrb[0].mxu0
        %v892 = vadd.f32 %v642, %v891
        %v893 = vpop.f32.mrb[0].mxu0
        %894 = vdwg.mxu0
        %s895 = sadd.s32 %s722, 1
        %p896 = scmp.ge.s32.totalorder %s895, 1
        %p897 = scmp.le.s32.totalorder %s895, 8
        %p898 = pnand %p896, %p897
        %p899 = pneg %p898
        %s900 = scalar_select %p899, 1, 0
        %s901 = scvt.s32.f32 %s900
        %v902 = vmul.f32 %v892, %v636
        %v903 = vstv %s901
        %v904 = vmul.f32 %v902, %v903
        %v906 = vsel %vm732, %v904, 0
        %v909 = vsel %vm732, %v821, 0
        %911 = vmatprep.subr.mxu0 0.0
        %912 = vmatpush1.msra.mxu0 %v628
        %913 = vmatprep.subr.mxu0 0.0
        %914 = vmatpush1.msra.mxu0 %v741
        %915 = vmatprep.subr.mxu0 0.0
        %916 = vmatpush1.msra.mxu0 0.0
        %917 = vmatprep.subr.mxu0 0.0
        %918 = vmatpush1.msra.mxu0 0.0
        %919 = vmatprep.subr.mxu0 0.0
        %920 = vmatpush1.msra.mxu0 0.0
        %921 = vmatprep.subr.mxu0 0.0
        %922 = vmatpush1.msra.mxu0 0.0
        %923 = vmatprep.subr.mxu0 0.0
        %924 = vmatpush1.msra.mxu0 0.0
        %925 = vmatprep.subr.mxu0 0.0
        %926 = vmatpush1.msra.mxu0 0.0
        %927 = vmatprep.subr.mxu0 0.0
        %928 = vmatpush1.msra.mxu0 0.0
        %929 = vmatprep.subr.mxu0 0.0
        %930 = vmatpush1.msra.mxu0 0.0
        %931 = vmatprep.subr.mxu0 0.0
        %932 = vmatpush1.msra.mxu0 0.0
        %933 = vmatprep.subr.mxu0 0.0
        %934 = vmatpush1.msra.mxu0 0.0
        %935 = vmatprep.subr.mxu0 0.0
        %936 = vmatpush1.msra.mxu0 0.0
        %937 = vmatprep.subr.mxu0 0.0
        %938 = vmatpush1.msra.mxu0 0.0
        %939 = vmatprep.subr.mxu0 0.0
        %940 = vmatpush1.msra.mxu0 0.0
        %941 = vmatprep.subr.mxu0 0.0
        %942 = vmatpush1.msra.mxu0 0.0
        %943 = vmatprep.subr.mxu0 0.0
        %944 = vmatpush1.msra.mxu0 0.0
        %945 = vmatprep.subr.mxu0 0.0
        %946 = vmatpush1.msra.mxu0 0.0
        %947 = vmatprep.subr.mxu0 0.0
        %948 = vmatpush1.msra.mxu0 0.0
        %949 = vmatprep.subr.mxu0 0.0
        %950 = vmatpush1.msra.mxu0 0.0
        %951 = vmatprep.subr.mxu0 0.0
        %952 = vmatpush1.msra.mxu0 0.0
        %953 = vmatprep.subr.mxu0 0.0
        %954 = vmatpush1.msra.mxu0 0.0
        %955 = vmatprep.subr.mxu0 0.0
        %956 = vmatpush1.msra.mxu0 0.0
        %957 = vmatprep.subr.mxu0 0.0
        %958 = vmatpush1.msra.mxu0 0.0
        %959 = vmatprep.subr.mxu0 0.0
        %960 = vmatpush1.msra.mxu0 0.0
        %961 = vmatprep.subr.mxu0 0.0
        %962 = vmatpush1.msra.mxu0 0.0
        %963 = vmatprep.subr.mxu0 0.0
        %964 = vmatpush1.msra.mxu0 0.0
        %965 = vmatprep.subr.mxu0 0.0
        %966 = vmatpush1.msra.mxu0 0.0
        %967 = vmatprep.subr.mxu0 0.0
        %968 = vmatpush1.msra.mxu0 0.0
        %969 = vmatprep.subr.mxu0 0.0
        %970 = vmatpush1.msra.mxu0 0.0
        %971 = vmatprep.subr.mxu0 0.0
        %972 = vmatpush1.msra.mxu0 0.0
        %973 = vmatprep.subr.mxu0 0.0
        %974 = vmatpush1.msra.mxu0 0.0
        %975 = vmatprep.mubr.f32.mxu0 0.0
        %976 = vmatmul.mubr.f32.gmra.mrb[0].mxu0 %v906
        %v977 = vpop.f32.mrb[0].mxu0
        %v978 = vadd.f32 0.0, %v977
        %v979 = vpop.f32.mrb[0].mxu0
        %980 = vmatprep.mubr.f32.mxu0 0.0
        %981 = vmatmul.mubr.f32.gmra.mrb[0].mxu0 %v909
        %v982 = vpop.f32.mrb[0].mxu0
        %v983 = vadd.f32 0.0, %v982
        %v984 = vpop.f32.mrb[0].mxu0
        %985 = vdwg.mxu0
        %s986 = scalar_lea.vmem %s563, 16
        %v987 = vld [vmem:[%s986] sm:$0x3f]
        %s988 = scalar_lea.vmem %s597, 8
        %v989 = vld [vmem:[%s988] sm:$0xf]
        %v991 = vsel %vm648, %v987, 0
        %993 = vmatprep.subr.mxu0 0.0
        %994 = vmatpush1.msra.mxu0 %v991
        %995 = vmatprep.subr.mxu0 0.0
        %996 = vmatpush1.msra.mxu0 0.0
        %997 = vmatprep.subr.mxu0 0.0
        %998 = vmatpush1.msra.mxu0 0.0
        %999 = vmatprep.subr.mxu0 0.0
        %1000 = vmatpush1.msra.mxu0 0.0
        %1001 = vmatprep.subr.mxu0 0.0
        %1002 = vmatpush1.msra.mxu0 0.0
        %1003 = vmatprep.subr.mxu0 0.0
        %1004 = vmatpush1.msra.mxu0 0.0
        %1005 = vmatprep.subr.mxu0 0.0
        %1006 = vmatpush1.msra.mxu0 0.0
        %1007 = vmatprep.subr.mxu0 0.0
        %1008 = vmatpush1.msra.mxu0 0.0
        %1009 = vmatprep.subr.mxu0 0.0
        %1010 = vmatpush1.msra.mxu0 0.0
        %1011 = vmatprep.subr.mxu0 0.0
        %1012 = vmatpush1.msra.mxu0 0.0
        %1013 = vmatprep.subr.mxu0 0.0
        %1014 = vmatpush1.msra.mxu0 0.0
        %1015 = vmatprep.subr.mxu0 0.0
        %1016 = vmatpush1.msra.mxu0 0.0
        %1017 = vmatprep.subr.mxu0 0.0
        %1018 = vmatpush1.msra.mxu0 0.0
        %1019 = vmatprep.subr.mxu0 0.0
        %1020 = vmatpush1.msra.mxu0 0.0
        %1021 = vmatprep.subr.mxu0 0.0
        %1022 = vmatpush1.msra.mxu0 0.0
        %1023 = vmatprep.subr.mxu0 0.0
        %1024 = vmatpush1.msra.mxu0 0.0
        %1025 = vmatprep.subr.mxu0 0.0
        %1026 = vmatpush1.msra.mxu0 0.0
        %1027 = vmatprep.subr.mxu0 0.0
        %1028 = vmatpush1.msra.mxu0 0.0
        %1029 = vmatprep.subr.mxu0 0.0
        %1030 = vmatpush1.msra.mxu0 0.0
        %1031 = vmatprep.subr.mxu0 0.0
        %1032 = vmatpush1.msra.mxu0 0.0
        %1033 = vmatprep.subr.mxu0 0.0
        %1034 = vmatpush1.msra.mxu0 0.0
        %1035 = vmatprep.subr.mxu0 0.0
        %1036 = vmatpush1.msra.mxu0 0.0
        %1037 = vmatprep.subr.mxu0 0.0
        %1038 = vmatpush1.msra.mxu0 0.0
        %1039 = vmatprep.subr.mxu0 0.0
        %1040 = vmatpush1.msra.mxu0 0.0
        %1041 = vmatprep.subr.mxu0 0.0
        %1042 = vmatpush1.msra.mxu0 0.0
        %1043 = vmatprep.subr.mxu0 0.0
        %1044 = vmatpush1.msra.mxu0 0.0
        %1045 = vmatprep.subr.mxu0 0.0
        %1046 = vmatpush1.msra.mxu0 0.0
        %1047 = vmatprep.subr.mxu0 0.0
        %1048 = vmatpush1.msra.mxu0 0.0
        %1049 = vmatprep.subr.mxu0 0.0
        %1050 = vmatpush1.msra.mxu0 0.0
        %1051 = vmatprep.subr.mxu0 0.0
        %1052 = vmatpush1.msra.mxu0 0.0
        %1053 = vmatprep.subr.mxu0 0.0
        %1054 = vmatpush1.msra.mxu0 0.0
        %1055 = vmatprep.subr.mxu0 0.0
        %1056 = vmatpush1.msra.mxu0 0.0
        %1057 = vmatprep.mubr.f32.mxu0 0.0
        %1058 = vmatmul.mubr.f32.gmra.mrb[0].mxu0 %v646
        %v1059 = vpop.f32.mrb[0].mxu0
        %v1060 = vadd.f32 %v642, %v1059
        %v1061 = vpop.f32.mrb[0].mxu0
        %1062 = vdwg.mxu0
        %s1063 = sadd.s32 %s722, 2
        %p1064 = scmp.ge.s32.totalorder %s1063, 1
        %p1065 = scmp.le.s32.totalorder %s1063, 8
        %p1066 = pnand %p1064, %p1065
        %p1067 = pneg %p1066
        %s1068 = scalar_select %p1067, 1, 0
        %s1069 = scvt.s32.f32 %s1068
        %v1070 = vmul.f32 %v1060, %v636
        %v1071 = vstv %s1069
        %v1072 = vmul.f32 %v1070, %v1071
        %v1074 = vsel %vm732, %v1072, 0
        %v1077 = vsel %vm732, %v989, 0
        %1079 = vmatprep.subr.mxu0 0.0
        %1080 = vmatpush1.msra.mxu0 %v628
        %1081 = vmatprep.subr.mxu0 0.0
        %1082 = vmatpush1.msra.mxu0 %v741
        %1083 = vmatprep.subr.mxu0 0.0
        %1084 = vmatpush1.msra.mxu0 0.0
        %1085 = vmatprep.subr.mxu0 0.0
        %1086 = vmatpush1.msra.mxu0 0.0
        %1087 = vmatprep.subr.mxu0 0.0
        %1088 = vmatpush1.msra.mxu0 0.0
        %1089 = vmatprep.subr.mxu0 0.0
        %1090 = vmatpush1.msra.mxu0 0.0
        %1091 = vmatprep.subr.mxu0 0.0
        %1092 = vmatpush1.msra.mxu0 0.0
        %1093 = vmatprep.subr.mxu0 0.0
        %1094 = vmatpush1.msra.mxu0 0.0
        %1095 = vmatprep.subr.mxu0 0.0
        %1096 = vmatpush1.msra.mxu0 0.0
        %1097 = vmatprep.subr.mxu0 0.0
        %1098 = vmatpush1.msra.mxu0 0.0
        %1099 = vmatprep.subr.mxu0 0.0
        %1100 = vmatpush1.msra.mxu0 0.0
        %1101 = vmatprep.subr.mxu0 0.0
        %1102 = vmatpush1.msra.mxu0 0.0
        %1103 = vmatprep.subr.mxu0 0.0
        %1104 = vmatpush1.msra.mxu0 0.0
        %1105 = vmatprep.subr.mxu0 0.0
        %1106 = vmatpush1.msra.mxu0 0.0
        %1107 = vmatprep.subr.mxu0 0.0
        %1108 = vmatpush1.msra.mxu0 0.0
        %1109 = vmatprep.subr.mxu0 0.0
        %1110 = vmatpush1.msra.mxu0 0.0
        %1111 = vmatprep.subr.mxu0 0.0
        %1112 = vmatpush1.msra.mxu0 0.0
        %1113 = vmatprep.subr.mxu0 0.0
        %1114 = vmatpush1.msra.mxu0 0.0
        %1115 = vmatprep.subr.mxu0 0.0
        %1116 = vmatpush1.msra.mxu0 0.0
        %1117 = vmatprep.subr.mxu0 0.0
        %1118 = vmatpush1.msra.mxu0 0.0
        %1119 = vmatprep.subr.mxu0 0.0
        %1120 = vmatpush1.msra.mxu0 0.0
        %1121 = vmatprep.subr.mxu0 0.0
        %1122 = vmatpush1.msra.mxu0 0.0
        %1123 = vmatprep.subr.mxu0 0.0
        %1124 = vmatpush1.msra.mxu0 0.0
        %1125 = vmatprep.subr.mxu0 0.0
        %1126 = vmatpush1.msra.mxu0 0.0
        %1127 = vmatprep.subr.mxu0 0.0
        %1128 = vmatpush1.msra.mxu0 0.0
        %1129 = vmatprep.subr.mxu0 0.0
        %1130 = vmatpush1.msra.mxu0 0.0
        %1131 = vmatprep.subr.mxu0 0.0
        %1132 = vmatpush1.msra.mxu0 0.0
        %1133 = vmatprep.subr.mxu0 0.0
        %1134 = vmatpush1.msra.mxu0 0.0
        %1135 = vmatprep.subr.mxu0 0.0
        %1136 = vmatpush1.msra.mxu0 0.0
        %1137 = vmatprep.subr.mxu0 0.0
        %1138 = vmatpush1.msra.mxu0 0.0
        %1139 = vmatprep.subr.mxu0 0.0
        %1140 = vmatpush1.msra.mxu0 0.0
        %1141 = vmatprep.subr.mxu0 0.0
        %1142 = vmatpush1.msra.mxu0 0.0
        %1143 = vmatprep.mubr.f32.mxu0 0.0
        %1144 = vmatmul.mubr.f32.gmra.mrb[0].mxu0 %v1074
        %v1145 = vpop.f32.mrb[0].mxu0
        %v1146 = vadd.f32 0.0, %v1145
        %v1147 = vpop.f32.mrb[0].mxu0
        %1148 = vmatprep.mubr.f32.mxu0 0.0
        %1149 = vmatmul.mubr.f32.gmra.mrb[0].mxu0 %v1077
        %v1150 = vpop.f32.mrb[0].mxu0
        %v1151 = vadd.f32 0.0, %v1150
        %v1152 = vpop.f32.mrb[0].mxu0
        %1153 = vdwg.mxu0
        %s1154 = scalar_lea.vmem %s563, 24
        %v1155 = vld [vmem:[%s1154] sm:$0x3f]
        %s1156 = scalar_lea.vmem %s597, 12
        %v1157 = vld [vmem:[%s1156] sm:$0xf]
        %v1159 = vsel %vm648, %v1155, 0
        %1161 = vmatprep.subr.mxu0 0.0
        %1162 = vmatpush1.msra.mxu0 %v1159
        %1163 = vmatprep.subr.mxu0 0.0
        %1164 = vmatpush1.msra.mxu0 0.0
        %1165 = vmatprep.subr.mxu0 0.0
        %1166 = vmatpush1.msra.mxu0 0.0
        %1167 = vmatprep.subr.mxu0 0.0
        %1168 = vmatpush1.msra.mxu0 0.0
        %1169 = vmatprep.subr.mxu0 0.0
        %1170 = vmatpush1.msra.mxu0 0.0
        %1171 = vmatprep.subr.mxu0 0.0
        %1172 = vmatpush1.msra.mxu0 0.0
        %1173 = vmatprep.subr.mxu0 0.0
        %1174 = vmatpush1.msra.mxu0 0.0
        %1175 = vmatprep.subr.mxu0 0.0
        %1176 = vmatpush1.msra.mxu0 0.0
        %1177 = vmatprep.subr.mxu0 0.0
        %1178 = vmatpush1.msra.mxu0 0.0
        %1179 = vmatprep.subr.mxu0 0.0
        %1180 = vmatpush1.msra.mxu0 0.0
        %1181 = vmatprep.subr.mxu0 0.0
        %1182 = vmatpush1.msra.mxu0 0.0
        %1183 = vmatprep.subr.mxu0 0.0
        %1184 = vmatpush1.msra.mxu0 0.0
        %1185 = vmatprep.subr.mxu0 0.0
        %1186 = vmatpush1.msra.mxu0 0.0
        %1187 = vmatprep.subr.mxu0 0.0
        %1188 = vmatpush1.msra.mxu0 0.0
        %1189 = vmatprep.subr.mxu0 0.0
        %1190 = vmatpush1.msra.mxu0 0.0
        %1191 = vmatprep.subr.mxu0 0.0
        %1192 = vmatpush1.msra.mxu0 0.0
        %1193 = vmatprep.subr.mxu0 0.0
        %1194 = vmatpush1.msra.mxu0 0.0
        %1195 = vmatprep.subr.mxu0 0.0
        %1196 = vmatpush1.msra.mxu0 0.0
        %1197 = vmatprep.subr.mxu0 0.0
        %1198 = vmatpush1.msra.mxu0 0.0
        %1199 = vmatprep.subr.mxu0 0.0
        %1200 = vmatpush1.msra.mxu0 0.0
        %1201 = vmatprep.subr.mxu0 0.0
        %1202 = vmatpush1.msra.mxu0 0.0
        %1203 = vmatprep.subr.mxu0 0.0
        %1204 = vmatpush1.msra.mxu0 0.0
        %1205 = vmatprep.subr.mxu0 0.0
        %1206 = vmatpush1.msra.mxu0 0.0
        %1207 = vmatprep.subr.mxu0 0.0
        %1208 = vmatpush1.msra.mxu0 0.0
        %1209 = vmatprep.subr.mxu0 0.0
        %1210 = vmatpush1.msra.mxu0 0.0
        %1211 = vmatprep.subr.mxu0 0.0
        %1212 = vmatpush1.msra.mxu0 0.0
        %1213 = vmatprep.subr.mxu0 0.0
        %1214 = vmatpush1.msra.mxu0 0.0
        %1215 = vmatprep.subr.mxu0 0.0
        %1216 = vmatpush1.msra.mxu0 0.0
        %1217 = vmatprep.subr.mxu0 0.0
        %1218 = vmatpush1.msra.mxu0 0.0
        %1219 = vmatprep.subr.mxu0 0.0
        %1220 = vmatpush1.msra.mxu0 0.0
        %1221 = vmatprep.subr.mxu0 0.0
        %1222 = vmatpush1.msra.mxu0 0.0
        %1223 = vmatprep.subr.mxu0 0.0
        %1224 = vmatpush1.msra.mxu0 0.0
        %1225 = vmatprep.mubr.f32.mxu0 0.0
        %1226 = vmatmul.mubr.f32.gmra.mrb[0].mxu0 %v646
        %v1227 = vpop.f32.mrb[0].mxu0
        %v1228 = vadd.f32 %v642, %v1227
        %v1229 = vpop.f32.mrb[0].mxu0
        %1230 = vdwg.mxu0
        %s1231 = sadd.s32 %s722, 3
        %p1232 = scmp.ge.s32.totalorder %s1231, 1
        %p1233 = scmp.le.s32.totalorder %s1231, 8
        %p1234 = pnand %p1232, %p1233
        %p1235 = pneg %p1234
        %s1236 = scalar_select %p1235, 1, 0
        %s1237 = scvt.s32.f32 %s1236
        %v1238 = vmul.f32 %v1228, %v636
        %v1239 = vstv %s1237
        %v1240 = vmul.f32 %v1238, %v1239
        %v1242 = vsel %vm732, %v1240, 0
        %v1245 = vsel %vm732, %v1157, 0
        %1247 = vmatprep.subr.mxu0 0.0
        %1248 = vmatpush1.msra.mxu0 %v628
        %1249 = vmatprep.subr.mxu0 0.0
        %1250 = vmatpush1.msra.mxu0 %v741
        %1251 = vmatprep.subr.mxu0 0.0
        %1252 = vmatpush1.msra.mxu0 0.0
        %1253 = vmatprep.subr.mxu0 0.0
        %1254 = vmatpush1.msra.mxu0 0.0
        %1255 = vmatprep.subr.mxu0 0.0
        %1256 = vmatpush1.msra.mxu0 0.0
        %1257 = vmatprep.subr.mxu0 0.0
        %1258 = vmatpush1.msra.mxu0 0.0
        %1259 = vmatprep.subr.mxu0 0.0
        %1260 = vmatpush1.msra.mxu0 0.0
        %1261 = vmatprep.subr.mxu0 0.0
        %1262 = vmatpush1.msra.mxu0 0.0
        %1263 = vmatprep.subr.mxu0 0.0
        %1264 = vmatpush1.msra.mxu0 0.0
        %1265 = vmatprep.subr.mxu0 0.0
        %1266 = vmatpush1.msra.mxu0 0.0
        %1267 = vmatprep.subr.mxu0 0.0
        %1268 = vmatpush1.msra.mxu0 0.0
        %1269 = vmatprep.subr.mxu0 0.0
        %1270 = vmatpush1.msra.mxu0 0.0
        %1271 = vmatprep.subr.mxu0 0.0
        %1272 = vmatpush1.msra.mxu0 0.0
        %1273 = vmatprep.subr.mxu0 0.0
        %1274 = vmatpush1.msra.mxu0 0.0
        %1275 = vmatprep.subr.mxu0 0.0
        %1276 = vmatpush1.msra.mxu0 0.0
        %1277 = vmatprep.subr.mxu0 0.0
        %1278 = vmatpush1.msra.mxu0 0.0
        %1279 = vmatprep.subr.mxu0 0.0
        %1280 = vmatpush1.msra.mxu0 0.0
        %1281 = vmatprep.subr.mxu0 0.0
        %1282 = vmatpush1.msra.mxu0 0.0
        %1283 = vmatprep.subr.mxu0 0.0
        %1284 = vmatpush1.msra.mxu0 0.0
        %1285 = vmatprep.subr.mxu0 0.0
        %1286 = vmatpush1.msra.mxu0 0.0
        %1287 = vmatprep.subr.mxu0 0.0
        %1288 = vmatpush1.msra.mxu0 0.0
        %1289 = vmatprep.subr.mxu0 0.0
        %1290 = vmatpush1.msra.mxu0 0.0
        %1291 = vmatprep.subr.mxu0 0.0
        %1292 = vmatpush1.msra.mxu0 0.0
        %1293 = vmatprep.subr.mxu0 0.0
        %1294 = vmatpush1.msra.mxu0 0.0
        %1295 = vmatprep.subr.mxu0 0.0
        %1296 = vmatpush1.msra.mxu0 0.0
        %1297 = vmatprep.subr.mxu0 0.0
        %1298 = vmatpush1.msra.mxu0 0.0
        %1299 = vmatprep.subr.mxu0 0.0
        %1300 = vmatpush1.msra.mxu0 0.0
        %1301 = vmatprep.subr.mxu0 0.0
        %1302 = vmatpush1.msra.mxu0 0.0
        %1303 = vmatprep.subr.mxu0 0.0
        %1304 = vmatpush1.msra.mxu0 0.0
        %1305 = vmatprep.subr.mxu0 0.0
        %1306 = vmatpush1.msra.mxu0 0.0
        %1307 = vmatprep.subr.mxu0 0.0
        %1308 = vmatpush1.msra.mxu0 0.0
        %1309 = vmatprep.subr.mxu0 0.0
        %1310 = vmatpush1.msra.mxu0 0.0
        %1311 = vmatprep.mubr.f32.mxu0 0.0
        %1312 = vmatmul.mubr.f32.gmra.mrb[0].mxu0 %v1242
        %v1313 = vpop.f32.mrb[0].mxu0
        %v1314 = vadd.f32 0.0, %v1313
        %v1315 = vpop.f32.mrb[0].mxu0
        %1316 = vmatprep.mubr.f32.mxu0 0.0
        %1317 = vmatmul.mubr.f32.gmra.mrb[0].mxu0 %v1245
        %v1318 = vpop.f32.mrb[0].mxu0
        %v1319 = vadd.f32 0.0, %v1318
        %v1320 = vpop.f32.mrb[0].mxu0
        %1321 = vdwg.mxu0
        %v1322 = vld [vmem:[%s574] sm:$0x3f]
        %v1323 = vld [vmem:[%s608] sm:$0xf]
        %v1325 = vsel %vm648, %v1322, 0
        %1327 = vmatprep.subr.mxu0 0.0
        %1328 = vmatpush1.msra.mxu0 %v1325
        %1329 = vmatprep.subr.mxu0 0.0
        %1330 = vmatpush1.msra.mxu0 0.0
        %1331 = vmatprep.subr.mxu0 0.0
        %1332 = vmatpush1.msra.mxu0 0.0
        %1333 = vmatprep.subr.mxu0 0.0
        %1334 = vmatpush1.msra.mxu0 0.0
        %1335 = vmatprep.subr.mxu0 0.0
        %1336 = vmatpush1.msra.mxu0 0.0
        %1337 = vmatprep.subr.mxu0 0.0
        %1338 = vmatpush1.msra.mxu0 0.0
        %1339 = vmatprep.subr.mxu0 0.0
        %1340 = vmatpush1.msra.mxu0 0.0
        %1341 = vmatprep.subr.mxu0 0.0
        %1342 = vmatpush1.msra.mxu0 0.0
        %1343 = vmatprep.subr.mxu0 0.0
        %1344 = vmatpush1.msra.mxu0 0.0
        %1345 = vmatprep.subr.mxu0 0.0
        %1346 = vmatpush1.msra.mxu0 0.0
        %1347 = vmatprep.subr.mxu0 0.0
        %1348 = vmatpush1.msra.mxu0 0.0
        %1349 = vmatprep.subr.mxu0 0.0
        %1350 = vmatpush1.msra.mxu0 0.0
        %1351 = vmatprep.subr.mxu0 0.0
        %1352 = vmatpush1.msra.mxu0 0.0
        %1353 = vmatprep.subr.mxu0 0.0
        %1354 = vmatpush1.msra.mxu0 0.0
        %1355 = vmatprep.subr.mxu0 0.0
        %1356 = vmatpush1.msra.mxu0 0.0
        %1357 = vmatprep.subr.mxu0 0.0
        %1358 = vmatpush1.msra.mxu0 0.0
        %1359 = vmatprep.subr.mxu0 0.0
        %1360 = vmatpush1.msra.mxu0 0.0
        %1361 = vmatprep.subr.mxu0 0.0
        %1362 = vmatpush1.msra.mxu0 0.0
        %1363 = vmatprep.subr.mxu0 0.0
        %1364 = vmatpush1.msra.mxu0 0.0
        %1365 = vmatprep.subr.mxu0 0.0
        %1366 = vmatpush1.msra.mxu0 0.0
        %1367 = vmatprep.subr.mxu0 0.0
        %1368 = vmatpush1.msra.mxu0 0.0
        %1369 = vmatprep.subr.mxu0 0.0
        %1370 = vmatpush1.msra.mxu0 0.0
        %1371 = vmatprep.subr.mxu0 0.0
        %1372 = vmatpush1.msra.mxu0 0.0
        %1373 = vmatprep.subr.mxu0 0.0
        %1374 = vmatpush1.msra.mxu0 0.0
        %1375 = vmatprep.subr.mxu0 0.0
        %1376 = vmatpush1.msra.mxu0 0.0
        %1377 = vmatprep.subr.mxu0 0.0
        %1378 = vmatpush1.msra.mxu0 0.0
        %1379 = vmatprep.subr.mxu0 0.0
        %1380 = vmatpush1.msra.mxu0 0.0
        %1381 = vmatprep.subr.mxu0 0.0
        %1382 = vmatpush1.msra.mxu0 0.0
        %1383 = vmatprep.subr.mxu0 0.0
        %1384 = vmatpush1.msra.mxu0 0.0
        %1385 = vmatprep.subr.mxu0 0.0
        %1386 = vmatpush1.msra.mxu0 0.0
        %1387 = vmatprep.subr.mxu0 0.0
        %1388 = vmatpush1.msra.mxu0 0.0
        %1389 = vmatprep.subr.mxu0 0.0
        %1390 = vmatpush1.msra.mxu0 0.0
        %1391 = vmatprep.mubr.f32.mxu0 0.0
        %1392 = vmatmul.mubr.f32.gmra.mrb[0].mxu0 %v646
        %v1393 = vpop.f32.mrb[0].mxu0
        %v1394 = vadd.f32 %v642, %v1393
        %v1395 = vpop.f32.mrb[0].mxu0
        %1396 = vdwg.mxu0
        %s1397 = sadd.s32 %s722, 4
        %p1398 = scmp.ge.s32.totalorder %s1397, 1
        %p1399 = scmp.le.s32.totalorder %s1397, 8
        %p1400 = pnand %p1398, %p1399
        %p1401 = pneg %p1400
        %s1402 = scalar_select %p1401, 1, 0
        %s1403 = scvt.s32.f32 %s1402
        %v1404 = vmul.f32 %v1394, %v636
        %v1405 = vstv %s1403
        %v1406 = vmul.f32 %v1404, %v1405
        %v1408 = vsel %vm732, %v1406, 0
        %v1411 = vsel %vm732, %v1323, 0
        %1413 = vmatprep.subr.mxu0 0.0
        %1414 = vmatpush1.msra.mxu0 %v628
        %1415 = vmatprep.subr.mxu0 0.0
        %1416 = vmatpush1.msra.mxu0 %v741
        %1417 = vmatprep.subr.mxu0 0.0
        %1418 = vmatpush1.msra.mxu0 0.0
        %1419 = vmatprep.subr.mxu0 0.0
        %1420 = vmatpush1.msra.mxu0 0.0
        %1421 = vmatprep.subr.mxu0 0.0
        %1422 = vmatpush1.msra.mxu0 0.0
        %1423 = vmatprep.subr.mxu0 0.0
        %1424 = vmatpush1.msra.mxu0 0.0
        %1425 = vmatprep.subr.mxu0 0.0
        %1426 = vmatpush1.msra.mxu0 0.0
        %1427 = vmatprep.subr.mxu0 0.0
        %1428 = vmatpush1.msra.mxu0 0.0
        %1429 = vmatprep.subr.mxu0 0.0
        %1430 = vmatpush1.msra.mxu0 0.0
        %1431 = vmatprep.subr.mxu0 0.0
        %1432 = vmatpush1.msra.mxu0 0.0
        %1433 = vmatprep.subr.mxu0 0.0
        %1434 = vmatpush1.msra.mxu0 0.0
        %1435 = vmatprep.subr.mxu0 0.0
        %1436 = vmatpush1.msra.mxu0 0.0
        %1437 = vmatprep.subr.mxu0 0.0
        %1438 = vmatpush1.msra.mxu0 0.0
        %1439 = vmatprep.subr.mxu0 0.0
        %1440 = vmatpush1.msra.mxu0 0.0
        %1441 = vmatprep.subr.mxu0 0.0
        %1442 = vmatpush1.msra.mxu0 0.0
        %1443 = vmatprep.subr.mxu0 0.0
        %1444 = vmatpush1.msra.mxu0 0.0
        %1445 = vmatprep.subr.mxu0 0.0
        %1446 = vmatpush1.msra.mxu0 0.0
        %1447 = vmatprep.subr.mxu0 0.0
        %1448 = vmatpush1.msra.mxu0 0.0
        %1449 = vmatprep.subr.mxu0 0.0
        %1450 = vmatpush1.msra.mxu0 0.0
        %1451 = vmatprep.subr.mxu0 0.0
        %1452 = vmatpush1.msra.mxu0 0.0
        %1453 = vmatprep.subr.mxu0 0.0
        %1454 = vmatpush1.msra.mxu0 0.0
        %1455 = vmatprep.subr.mxu0 0.0
        %1456 = vmatpush1.msra.mxu0 0.0
        %1457 = vmatprep.subr.mxu0 0.0
        %1458 = vmatpush1.msra.mxu0 0.0
        %1459 = vmatprep.subr.mxu0 0.0
        %1460 = vmatpush1.msra.mxu0 0.0
        %1461 = vmatprep.subr.mxu0 0.0
        %1462 = vmatpush1.msra.mxu0 0.0
        %1463 = vmatprep.subr.mxu0 0.0
        %1464 = vmatpush1.msra.mxu0 0.0
        %1465 = vmatprep.subr.mxu0 0.0
        %1466 = vmatpush1.msra.mxu0 0.0
        %1467 = vmatprep.subr.mxu0 0.0
        %1468 = vmatpush1.msra.mxu0 0.0
        %1469 = vmatprep.subr.mxu0 0.0
        %1470 = vmatpush1.msra.mxu0 0.0
        %1471 = vmatprep.subr.mxu0 0.0
        %1472 = vmatpush1.msra.mxu0 0.0
        %1473 = vmatprep.subr.mxu0 0.0
        %1474 = vmatpush1.msra.mxu0 0.0
        %1475 = vmatprep.subr.mxu0 0.0
        %1476 = vmatpush1.msra.mxu0 0.0
        %1477 = vmatprep.mubr.f32.mxu0 0.0
        %1478 = vmatmul.mubr.f32.gmra.mrb[0].mxu0 %v1408
        %v1479 = vpop.f32.mrb[0].mxu0
        %v1480 = vadd.f32 0.0, %v1479
        %v1481 = vpop.f32.mrb[0].mxu0
        %1482 = vmatprep.mubr.f32.mxu0 0.0
        %1483 = vmatmul.mubr.f32.gmra.mrb[0].mxu0 %v1411
        %v1484 = vpop.f32.mrb[0].mxu0
        %v1485 = vadd.f32 0.0, %v1484
        %v1486 = vpop.f32.mrb[0].mxu0
        %1487 = vdwg.mxu0
        %s1488 = scalar_lea.vmem %s574, 8
        %v1489 = vld [vmem:[%s1488] sm:$0x3f]
        %s1490 = scalar_lea.vmem %s608, 4
        %v1491 = vld [vmem:[%s1490] sm:$0xf]
        %v1493 = vsel %vm648, %v1489, 0
        %1495 = vmatprep.subr.mxu0 0.0
        %1496 = vmatpush1.msra.mxu0 %v1493
        %1497 = vmatprep.subr.mxu0 0.0
        %1498 = vmatpush1.msra.mxu0 0.0
        %1499 = vmatprep.subr.mxu0 0.0
        %1500 = vmatpush1.msra.mxu0 0.0
        %1501 = vmatprep.subr.mxu0 0.0
        %1502 = vmatpush1.msra.mxu0 0.0
        %1503 = vmatprep.subr.mxu0 0.0
        %1504 = vmatpush1.msra.mxu0 0.0
        %1505 = vmatprep.subr.mxu0 0.0
        %1506 = vmatpush1.msra.mxu0 0.0
        %1507 = vmatprep.subr.mxu0 0.0
        %1508 = vmatpush1.msra.mxu0 0.0
        %1509 = vmatprep.subr.mxu0 0.0
        %1510 = vmatpush1.msra.mxu0 0.0
        %1511 = vmatprep.subr.mxu0 0.0
        %1512 = vmatpush1.msra.mxu0 0.0
        %1513 = vmatprep.subr.mxu0 0.0
        %1514 = vmatpush1.msra.mxu0 0.0
        %1515 = vmatprep.subr.mxu0 0.0
        %1516 = vmatpush1.msra.mxu0 0.0
        %1517 = vmatprep.subr.mxu0 0.0
        %1518 = vmatpush1.msra.mxu0 0.0
        %1519 = vmatprep.subr.mxu0 0.0
        %1520 = vmatpush1.msra.mxu0 0.0
        %1521 = vmatprep.subr.mxu0 0.0
        %1522 = vmatpush1.msra.mxu0 0.0
        %1523 = vmatprep.subr.mxu0 0.0
        %1524 = vmatpush1.msra.mxu0 0.0
        %1525 = vmatprep.subr.mxu0 0.0
        %1526 = vmatpush1.msra.mxu0 0.0
        %1527 = vmatprep.subr.mxu0 0.0
        %1528 = vmatpush1.msra.mxu0 0.0
        %1529 = vmatprep.subr.mxu0 0.0
        %1530 = vmatpush1.msra.mxu0 0.0
        %1531 = vmatprep.subr.mxu0 0.0
        %1532 = vmatpush1.msra.mxu0 0.0
        %1533 = vmatprep.subr.mxu0 0.0
        %1534 = vmatpush1.msra.mxu0 0.0
        %1535 = vmatprep.subr.mxu0 0.0
        %1536 = vmatpush1.msra.mxu0 0.0
        %1537 = vmatprep.subr.mxu0 0.0
        %1538 = vmatpush1.msra.mxu0 0.0
        %1539 = vmatprep.subr.mxu0 0.0
        %1540 = vmatpush1.msra.mxu0 0.0
        %1541 = vmatprep.subr.mxu0 0.0
        %1542 = vmatpush1.msra.mxu0 0.0
        %1543 = vmatprep.subr.mxu0 0.0
        %1544 = vmatpush1.msra.mxu0 0.0
        %1545 = vmatprep.subr.mxu0 0.0
        %1546 = vmatpush1.msra.mxu0 0.0
        %1547 = vmatprep.subr.mxu0 0.0
        %1548 = vmatpush1.msra.mxu0 0.0
        %1549 = vmatprep.subr.mxu0 0.0
        %1550 = vmatpush1.msra.mxu0 0.0
        %1551 = vmatprep.subr.mxu0 0.0
        %1552 = vmatpush1.msra.mxu0 0.0
        %1553 = vmatprep.subr.mxu0 0.0
        %1554 = vmatpush1.msra.mxu0 0.0
        %1555 = vmatprep.subr.mxu0 0.0
        %1556 = vmatpush1.msra.mxu0 0.0
        %1557 = vmatprep.subr.mxu0 0.0
        %1558 = vmatpush1.msra.mxu0 0.0
        %1559 = vmatprep.mubr.f32.mxu0 0.0
        %1560 = vmatmul.mubr.f32.gmra.mrb[0].mxu0 %v646
        %v1561 = vpop.f32.mrb[0].mxu0
        %v1562 = vadd.f32 %v642, %v1561
        %v1563 = vpop.f32.mrb[0].mxu0
        %1564 = vdwg.mxu0
        %s1565 = sadd.s32 %s722, 5
        %p1566 = scmp.ge.s32.totalorder %s1565, 1
        %p1567 = scmp.le.s32.totalorder %s1565, 8
        %p1568 = pnand %p1566, %p1567
        %p1569 = pneg %p1568
        %s1570 = scalar_select %p1569, 1, 0
        %s1571 = scvt.s32.f32 %s1570
        %v1572 = vmul.f32 %v1562, %v636
        %v1573 = vstv %s1571
        %v1574 = vmul.f32 %v1572, %v1573
        %v1576 = vsel %vm732, %v1574, 0
        %v1579 = vsel %vm732, %v1491, 0
        %1581 = vmatprep.subr.mxu0 0.0
        %1582 = vmatpush1.msra.mxu0 %v628
        %1583 = vmatprep.subr.mxu0 0.0
        %1584 = vmatpush1.msra.mxu0 %v741
        %1585 = vmatprep.subr.mxu0 0.0
        %1586 = vmatpush1.msra.mxu0 0.0
        %1587 = vmatprep.subr.mxu0 0.0
        %1588 = vmatpush1.msra.mxu0 0.0
        %1589 = vmatprep.subr.mxu0 0.0
        %1590 = vmatpush1.msra.mxu0 0.0
        %1591 = vmatprep.subr.mxu0 0.0
        %1592 = vmatpush1.msra.mxu0 0.0
        %1593 = vmatprep.subr.mxu0 0.0
        %1594 = vmatpush1.msra.mxu0 0.0
        %1595 = vmatprep.subr.mxu0 0.0
        %1596 = vmatpush1.msra.mxu0 0.0
        %1597 = vmatprep.subr.mxu0 0.0
        %1598 = vmatpush1.msra.mxu0 0.0
        %1599 = vmatprep.subr.mxu0 0.0
        %1600 = vmatpush1.msra.mxu0 0.0
        %1601 = vmatprep.subr.mxu0 0.0
        %1602 = vmatpush1.msra.mxu0 0.0
        %1603 = vmatprep.subr.mxu0 0.0
        %1604 = vmatpush1.msra.mxu0 0.0
        %1605 = vmatprep.subr.mxu0 0.0
        %1606 = vmatpush1.msra.mxu0 0.0
        %1607 = vmatprep.subr.mxu0 0.0
        %1608 = vmatpush1.msra.mxu0 0.0
        %1609 = vmatprep.subr.mxu0 0.0
        %1610 = vmatpush1.msra.mxu0 0.0
        %1611 = vmatprep.subr.mxu0 0.0
        %1612 = vmatpush1.msra.mxu0 0.0
        %1613 = vmatprep.subr.mxu0 0.0
        %1614 = vmatpush1.msra.mxu0 0.0
        %1615 = vmatprep.subr.mxu0 0.0
        %1616 = vmatpush1.msra.mxu0 0.0
        %1617 = vmatprep.subr.mxu0 0.0
        %1618 = vmatpush1.msra.mxu0 0.0
        %1619 = vmatprep.subr.mxu0 0.0
        %1620 = vmatpush1.msra.mxu0 0.0
        %1621 = vmatprep.subr.mxu0 0.0
        %1622 = vmatpush1.msra.mxu0 0.0
        %1623 = vmatprep.subr.mxu0 0.0
        %1624 = vmatpush1.msra.mxu0 0.0
        %1625 = vmatprep.subr.mxu0 0.0
        %1626 = vmatpush1.msra.mxu0 0.0
        %1627 = vmatprep.subr.mxu0 0.0
        %1628 = vmatpush1.msra.mxu0 0.0
        %1629 = vmatprep.subr.mxu0 0.0
        %1630 = vmatpush1.msra.mxu0 0.0
        %1631 = vmatprep.subr.mxu0 0.0
        %1632 = vmatpush1.msra.mxu0 0.0
        %1633 = vmatprep.subr.mxu0 0.0
        %1634 = vmatpush1.msra.mxu0 0.0
        %1635 = vmatprep.subr.mxu0 0.0
        %1636 = vmatpush1.msra.mxu0 0.0
        %1637 = vmatprep.subr.mxu0 0.0
        %1638 = vmatpush1.msra.mxu0 0.0
        %1639 = vmatprep.subr.mxu0 0.0
        %1640 = vmatpush1.msra.mxu0 0.0
        %1641 = vmatprep.subr.mxu0 0.0
        %1642 = vmatpush1.msra.mxu0 0.0
        %1643 = vmatprep.subr.mxu0 0.0
        %1644 = vmatpush1.msra.mxu0 0.0
        %1645 = vmatprep.mubr.f32.mxu0 0.0
        %1646 = vmatmul.mubr.f32.gmra.mrb[0].mxu0 %v1576
        %v1647 = vpop.f32.mrb[0].mxu0
        %v1648 = vadd.f32 0.0, %v1647
        %v1649 = vpop.f32.mrb[0].mxu0
        %1650 = vmatprep.mubr.f32.mxu0 0.0
        %1651 = vmatmul.mubr.f32.gmra.mrb[0].mxu0 %v1579
        %v1652 = vpop.f32.mrb[0].mxu0
        %v1653 = vadd.f32 0.0, %v1652
        %v1654 = vpop.f32.mrb[0].mxu0
        %1655 = vdwg.mxu0
        %vm1658 = vcmask 1043456
        %v1659 = vrot.slane %v810, 4
        %v1660 = vrot.slane %v815, 4
        %v1661 = vsel %vm1658, %v1659, %v1660
        %1662 = vrot.lane.b32.xlu0 %v1659, 126
        %v1663 = vpop.permute.xlu0 %1662
        %1664 = vrot.lane.b32.xlu0 %v1661, 126
        %v1665 = vpop.permute.xlu0 %1664
        %1667 = vrot.lane.b32.xlu0 %v810, 124
        %v1668 = vpop.permute.xlu0 %1667
        %1669 = vrot.lane.b32.xlu0 %v815, 124
        %v1670 = vpop.permute.xlu0 %1669
        %v1674 = vrot.slane %v978, 4
        %v1675 = vrot.slane %v983, 4
        %v1676 = vsel %vm1658, %v1674, %v1675
        %1678 = vrot.lane.b32.xlu0 %v978, 126
        %v1679 = vpop.permute.xlu0 %1678
        %1680 = vrot.lane.b32.xlu0 %v983, 126
        %v1681 = vpop.permute.xlu0 %1680
        %1683 = vrot.lane.b32.xlu0 %v1674, 124
        %v1684 = vpop.permute.xlu0 %1683
        %1685 = vrot.lane.b32.xlu0 %v1676, 124
        %v1686 = vpop.permute.xlu0 %1685
        %1688 = vrot.lane.b32.xlu0 %v1674, 126
        %v1689 = vpop.permute.xlu0 %1688
        %1690 = vrot.lane.b32.xlu0 %v1676, 126
        %v1691 = vpop.permute.xlu0 %1690
        %1693 = vrot.lane.b32.xlu0 %v978, 124
        %v1694 = vpop.permute.xlu0 %1693
        %1695 = vrot.lane.b32.xlu0 %v983, 124
        %v1696 = vpop.permute.xlu0 %1695
        %v1697 = vsel %vm1658, %v815, %v1663
        %v1698 = vsel %vm1658, %v1670, %v1674
        %v1699 = vsel %vm1658, %v1681, %v1684
        %v1700 = vsel %vm1658, %v983, %v1689
        %1702 = vset.pattern.permute.xlu0 0
        %1703 = vperm.xlu0 %1702, %v627
        %v1704 = vpop.permute.xlu0 %1703
        %1710 = vrot.lane.b32.xlu0 %v810, 122
        %v1711 = vpop.permute.xlu0 %1710
        %1712 = vrot.lane.b32.xlu0 %v1697, 122
        %v1713 = vpop.permute.xlu0 %1712
        %1714 = vrot.lane.b32.xlu0 %v1665, 122
        %v1715 = vpop.permute.xlu0 %1714
        %1716 = vrot.lane.b32.xlu0 %v1668, 122
        %v1717 = vpop.permute.xlu0 %1716
        %1718 = vrot.lane.b32.xlu0 %v1698, 122
        %v1719 = vpop.permute.xlu0 %1718
        %1720 = vrot.lane.b32.xlu0 %v1676, 122
        %v1721 = vpop.permute.xlu0 %1720
        %1722 = vrot.lane.b32.xlu0 %v1679, 122
        %v1723 = vpop.permute.xlu0 %1722
        %1724 = vrot.lane.b32.xlu0 %v1699, 122
        %v1725 = vpop.permute.xlu0 %1724
        %1726 = vrot.lane.b32.xlu0 %v1686, 122
        %v1727 = vpop.permute.xlu0 %1726
        %1728 = vrot.lane.b32.xlu0 %v978, 122
        %v1729 = vpop.permute.xlu0 %1728
        %1730 = vrot.lane.b32.xlu0 %v1700, 122
        %v1731 = vpop.permute.xlu0 %1730
        %1732 = vrot.lane.b32.xlu0 %v1691, 122
        %v1733 = vpop.permute.xlu0 %1732
        %1734 = vrot.lane.b32.xlu0 %v1694, 122
        %v1735 = vpop.permute.xlu0 %1734
        %1736 = vrot.lane.b32.xlu0 %v1696, 122
        %v1737 = vpop.permute.xlu0 %1736
        %vm1751 = vcmask 883712
        %v1753 = vsel %vm1751, %v626, 0
        %v1755 = vsel %vm1658, %v1737, 0
        %1757 = vmatprep.subr.mxu0 0.0
        %1758 = vmatpush1.msra.mxu0 %v1711
        %1759 = vmatprep.subr.mxu0 0.0
        %1760 = vmatpush1.msra.mxu0 %v1713
        %1761 = vmatprep.subr.mxu0 0.0
        %1762 = vmatpush1.msra.mxu0 %v1715
        %1763 = vmatprep.subr.mxu0 0.0
        %1764 = vmatpush1.msra.mxu0 %v1717
        %1765 = vmatprep.subr.mxu0 0.0
        %1766 = vmatpush1.msra.mxu0 %v1719
        %1767 = vmatprep.subr.mxu0 0.0
        %1768 = vmatpush1.msra.mxu0 %v1721
        %1769 = vmatprep.subr.mxu0 0.0
        %1770 = vmatpush1.msra.mxu0 %v1723
        %1771 = vmatprep.subr.mxu0 0.0
        %1772 = vmatpush1.msra.mxu0 %v1725
        %1773 = vmatprep.subr.mxu0 0.0
        %1774 = vmatpush1.msra.mxu0 %v1727
        %1775 = vmatprep.subr.mxu0 0.0
        %1776 = vmatpush1.msra.mxu0 %v1729
        %1777 = vmatprep.subr.mxu0 0.0
        %1778 = vmatpush1.msra.mxu0 %v1731
        %1779 = vmatprep.subr.mxu0 0.0
        %1780 = vmatpush1.msra.mxu0 %v1733
        %1781 = vmatprep.subr.mxu0 0.0
        %1782 = vmatpush1.msra.mxu0 %v1735
        %1783 = vmatprep.subr.mxu0 0.0
        %1784 = vmatpush1.msra.mxu0 %v1755
        %1785 = vmatprep.subr.mxu0 0.0
        %1786 = vmatpush1.msra.mxu0 0.0
        %1787 = vmatprep.subr.mxu0 0.0
        %1788 = vmatpush1.msra.mxu0 0.0
        %1789 = vmatprep.subr.mxu0 0.0
        %1790 = vmatpush1.msra.mxu0 0.0
        %1791 = vmatprep.subr.mxu0 0.0
        %1792 = vmatpush1.msra.mxu0 0.0
        %1793 = vmatprep.subr.mxu0 0.0
        %1794 = vmatpush1.msra.mxu0 0.0
        %1795 = vmatprep.subr.mxu0 0.0
        %1796 = vmatpush1.msra.mxu0 0.0
        %1797 = vmatprep.subr.mxu0 0.0
        %1798 = vmatpush1.msra.mxu0 0.0
        %1799 = vmatprep.subr.mxu0 0.0
        %1800 = vmatpush1.msra.mxu0 0.0
        %1801 = vmatprep.subr.mxu0 0.0
        %1802 = vmatpush1.msra.mxu0 0.0
        %1803 = vmatprep.subr.mxu0 0.0
        %1804 = vmatpush1.msra.mxu0 0.0
        %1805 = vmatprep.subr.mxu0 0.0
        %1806 = vmatpush1.msra.mxu0 0.0
        %1807 = vmatprep.subr.mxu0 0.0
        %1808 = vmatpush1.msra.mxu0 0.0
        %1809 = vmatprep.subr.mxu0 0.0
        %1810 = vmatpush1.msra.mxu0 0.0
        %1811 = vmatprep.subr.mxu0 0.0
        %1812 = vmatpush1.msra.mxu0 0.0
        %1813 = vmatprep.subr.mxu0 0.0
        %1814 = vmatpush1.msra.mxu0 0.0
        %1815 = vmatprep.subr.mxu0 0.0
        %1816 = vmatpush1.msra.mxu0 0.0
        %1817 = vmatprep.subr.mxu0 0.0
        %1818 = vmatpush1.msra.mxu0 0.0
        %1819 = vmatprep.subr.mxu0 0.0
        %1820 = vmatpush1.msra.mxu0 0.0
        %1821 = vmatprep.mubr.f32.mxu0 0.0
        %1822 = vmatmul.mubr.f32.gmra.mrb[0].mxu0 %v1753
        %v1823 = vpop.f32.mrb[0].mxu0
        %v1824 = vadd.f32 %v1704, %v1823
        %v1825 = vpop.f32.mrb[0].mxu0
        %1826 = vdwg.mxu0
        %v1828 = vcombine.high %v1824, %v1824
        %v1830 = vunpack.c.l.s4 1966171168
        %v1831 = vunpack.c.0.s8 %v1830
        %v1832 = vlaneseq
        %v1833 = vshrl.u32 %v1832, 7
        %v1834 = vsub.s32 %v1831, %v1833
        %v1835 = vrot.slane %v1824, %v1834
        %v1837 = vunpack.c.l.s4 1966171168
        %v1838 = vunpack.c.0.s8 %v1837
        %v1839 = vlaneseq
        %v1840 = vshrl.u32 %v1839, 7
        %v1841 = vsub.s32 %v1838, %v1840
        %v1842 = vrot.slane %v1828, %v1841
        %v1843 = vcombine.high %v1835, %v1835
        %v1844 = vcombine.high %v1842, %v1842
        %v1846 = vunpack.c.l.s4 1966171168
        %v1847 = vunpack.c.0.s8 %v1846
        %v1848 = vlaneseq
        %v1849 = vshrl.u32 %v1848, 7
        %v1850 = vsub.s32 %v1847, %v1849
        %v1851 = vrot.slane %v1835, %v1850
        %v1853 = vunpack.c.l.s4 1966171168
        %v1854 = vunpack.c.0.s8 %v1853
        %v1855 = vlaneseq
        %v1856 = vshrl.u32 %v1855, 7
        %v1857 = vsub.s32 %v1854, %v1856
        %v1858 = vrot.slane %v1842, %v1857
        %v1860 = vunpack.c.l.s4 1966171168
        %v1861 = vunpack.c.0.s8 %v1860
        %v1862 = vlaneseq
        %v1863 = vshrl.u32 %v1862, 7
        %v1864 = vsub.s32 %v1861, %v1863
        %v1865 = vrot.slane %v1843, %v1864
        %v1867 = vunpack.c.l.s4 1966171168
        %v1868 = vunpack.c.0.s8 %v1867
        %v1869 = vlaneseq
        %v1870 = vshrl.u32 %v1869, 7
        %v1871 = vsub.s32 %v1868, %v1870
        %v1872 = vrot.slane %v1844, %v1871
        %v1873 = vcombine.high %v1851, %v1851
        %v1874 = vcombine.high %v1858, %v1858
        %v1875 = vcombine.high %v1865, %v1865
        %v1876 = vcombine.high %v1872, %v1872
        %v1877 = vlaneseq
        %v1878 = vshrl.u32 %v1877, 7
        %v1879 = vsub.s32 0, %v1878
        %v1880 = vrot.slane %v1851, %v1879
        %v1881 = vlaneseq
        %v1882 = vshrl.u32 %v1881, 7
        %v1883 = vsub.s32 0, %v1882
        %v1884 = vrot.slane %v1865, %v1883
        %v1885 = vlaneseq
        %v1886 = vshrl.u32 %v1885, 7
        %v1887 = vsub.s32 0, %v1886
        %v1888 = vrot.slane %v1873, %v1887
        %v1889 = vlaneseq
        %v1890 = vshrl.u32 %v1889, 7
        %v1891 = vsub.s32 0, %v1890
        %v1892 = vrot.slane %v1875, %v1891
        %v1893 = vlaneseq
        %v1894 = vshrl.u32 %v1893, 7
        %v1895 = vsub.s32 0, %v1894
        %v1896 = vrot.slane %v1858, %v1895
        %v1897 = vlaneseq
        %v1898 = vshrl.u32 %v1897, 7
        %v1899 = vsub.s32 0, %v1898
        %v1900 = vrot.slane %v1872, %v1899
        %v1901 = vlaneseq
        %v1902 = vshrl.u32 %v1901, 7
        %v1903 = vsub.s32 0, %v1902
        %v1904 = vrot.slane %v1874, %v1903
        %v1905 = vlaneseq
        %v1906 = vshrl.u32 %v1905, 7
        %v1907 = vsub.s32 0, %v1906
        %v1908 = vrot.slane %v1876, %v1907
        %vm1917 = vcmask 517120
        %1918 = vst.msk [vmem:[%s554] sm:$0x3] %vm1917, %v1880
        %1919 = vst.msk [vmem:[%s554 + $0x20] sm:$0x3] %vm1917, %v1884
        %1920 = vst.msk [vmem:[%s554 + $0x40] sm:$0x3] %vm1917, %v1888
        %1921 = vst.msk [vmem:[%s554 + $0x60] sm:$0x3] %vm1917, %v1892
        %1922 = vst.msk [vmem:[%s554 + $0x80] sm:$0x3] %vm1917, %v1896
        %1923 = vst.msk [vmem:[%s554 + $0xa0] sm:$0x3] %vm1917, %v1900
        %1924 = vst.msk [vmem:[%s554 + $0xc0] sm:$0x3] %vm1917, %v1904
        %1925 = vst.msk [vmem:[%s554 + $0xe0] sm:$0x3] %vm1917, %v1908
        %v1927 = vsel %vm1658, %v1696, %v1674
        %1929 = vrot.lane.b32.xlu0 %v1927, 122
        %v1930 = vpop.permute.xlu0 %1929
        %1932 = vmatprep.subr.mxu0 0.0
        %1933 = vmatpush1.msra.mxu0 %v1729
        %1934 = vmatprep.subr.mxu0 0.0
        %1935 = vmatpush1.msra.mxu0 %v1731
        %1936 = vmatprep.subr.mxu0 0.0
        %1937 = vmatpush1.msra.mxu0 %v1733
        %1938 = vmatprep.subr.mxu0 0.0
        %1939 = vmatpush1.msra.mxu0 %v1735
        %1940 = vmatprep.subr.mxu0 0.0
        %1941 = vmatpush1.msra.mxu0 %v1930
        %1942 = vmatprep.subr.mxu0 0.0
        %1943 = vmatpush1.msra.mxu0 %v1721
        %1944 = vmatprep.subr.mxu0 0.0
        %1945 = vmatpush1.msra.mxu0 %v1723
        %1946 = vmatprep.subr.mxu0 0.0
        %1947 = vmatpush1.msra.mxu0 %v1725
        %1948 = vmatprep.subr.mxu0 0.0
        %1949 = vmatpush1.msra.mxu0 %v1727
        %1950 = vmatprep.subr.mxu0 0.0
        %1951 = vmatpush1.msra.mxu0 %v1729
        %1952 = vmatprep.subr.mxu0 0.0
        %1953 = vmatpush1.msra.mxu0 %v1731
        %1954 = vmatprep.subr.mxu0 0.0
        %1955 = vmatpush1.msra.mxu0 %v1733
        %1956 = vmatprep.subr.mxu0 0.0
        %1957 = vmatpush1.msra.mxu0 %v1735
        %1958 = vmatprep.subr.mxu0 0.0
        %1959 = vmatpush1.msra.mxu0 %v1755
        %1960 = vmatprep.subr.mxu0 0.0
        %1961 = vmatpush1.msra.mxu0 0.0
        %1962 = vmatprep.subr.mxu0 0.0
        %1963 = vmatpush1.msra.mxu0 0.0
        %1964 = vmatprep.subr.mxu0 0.0
        %1965 = vmatpush1.msra.mxu0 0.0
        %1966 = vmatprep.subr.mxu0 0.0
        %1967 = vmatpush1.msra.mxu0 0.0
        %1968 = vmatprep.subr.mxu0 0.0
        %1969 = vmatpush1.msra.mxu0 0.0
        %1970 = vmatprep.subr.mxu0 0.0
        %1971 = vmatpush1.msra.mxu0 0.0
        %1972 = vmatprep.subr.mxu0 0.0
        %1973 = vmatpush1.msra.mxu0 0.0
        %1974 = vmatprep.subr.mxu0 0.0
        %1975 = vmatpush1.msra.mxu0 0.0
        %1976 = vmatprep.subr.mxu0 0.0
        %1977 = vmatpush1.msra.mxu0 0.0
        %1978 = vmatprep.subr.mxu0 0.0
        %1979 = vmatpush1.msra.mxu0 0.0
        %1980 = vmatprep.subr.mxu0 0.0
        %1981 = vmatpush1.msra.mxu0 0.0
        %1982 = vmatprep.subr.mxu0 0.0
        %1983 = vmatpush1.msra.mxu0 0.0
        %1984 = vmatprep.subr.mxu0 0.0
        %1985 = vmatpush1.msra.mxu0 0.0
        %1986 = vmatprep.subr.mxu0 0.0
        %1987 = vmatpush1.msra.mxu0 0.0
        %1988 = vmatprep.subr.mxu0 0.0
        %1989 = vmatpush1.msra.mxu0 0.0
        %1990 = vmatprep.subr.mxu0 0.0
        %1991 = vmatpush1.msra.mxu0 0.0
        %1992 = vmatprep.subr.mxu0 0.0
        %1993 = vmatpush1.msra.mxu0 0.0
        %1994 = vmatprep.subr.mxu0 0.0
        %1995 = vmatpush1.msra.mxu0 0.0
        %1996 = vmatprep.mubr.f32.mxu0 0.0
        %1997 = vmatmul.mubr.f32.gmra.mrb[0].mxu0 %v1753
        %v1998 = vpop.f32.mrb[0].mxu0
        %v1999 = vadd.f32 %v1704, %v1998
        %v2000 = vpop.f32.mrb[0].mxu0
        %2001 = vdwg.mxu0
        %v2003 = vcombine.high %v1999, %v1999
        %v2005 = vunpack.c.l.s4 1966171168
        %v2006 = vunpack.c.0.s8 %v2005
        %v2007 = vlaneseq
        %v2008 = vshrl.u32 %v2007, 7
        %v2009 = vsub.s32 %v2006, %v2008
        %v2010 = vrot.slane %v1999, %v2009
        %v2012 = vunpack.c.l.s4 1966171168
        %v2013 = vunpack.c.0.s8 %v2012
        %v2014 = vlaneseq
        %v2015 = vshrl.u32 %v2014, 7
        %v2016 = vsub.s32 %v2013, %v2015
        %v2017 = vrot.slane %v2003, %v2016
        %v2018 = vcombine.high %v2010, %v2010
        %v2019 = vcombine.high %v2017, %v2017
        %v2021 = vunpack.c.l.s4 1966171168
        %v2022 = vunpack.c.0.s8 %v2021
        %v2023 = vlaneseq
        %v2024 = vshrl.u32 %v2023, 7
        %v2025 = vsub.s32 %v2022, %v2024
        %v2026 = vrot.slane %v2010, %v2025
        %v2028 = vunpack.c.l.s4 1966171168
        %v2029 = vunpack.c.0.s8 %v2028
        %v2030 = vlaneseq
        %v2031 = vshrl.u32 %v2030, 7
        %v2032 = vsub.s32 %v2029, %v2031
        %v2033 = vrot.slane %v2017, %v2032
        %v2035 = vunpack.c.l.s4 1966171168
        %v2036 = vunpack.c.0.s8 %v2035
        %v2037 = vlaneseq
        %v2038 = vshrl.u32 %v2037, 7
        %v2039 = vsub.s32 %v2036, %v2038
        %v2040 = vrot.slane %v2018, %v2039
        %v2042 = vunpack.c.l.s4 1966171168
        %v2043 = vunpack.c.0.s8 %v2042
        %v2044 = vlaneseq
        %v2045 = vshrl.u32 %v2044, 7
        %v2046 = vsub.s32 %v2043, %v2045
        %v2047 = vrot.slane %v2019, %v2046
        %v2048 = vcombine.high %v2026, %v2026
        %v2049 = vcombine.high %v2033, %v2033
        %v2050 = vcombine.high %v2040, %v2040
        %v2051 = vcombine.high %v2047, %v2047
        %v2052 = vlaneseq
        %v2053 = vshrl.u32 %v2052, 7
        %v2054 = vsub.s32 0, %v2053
        %v2055 = vrot.slane %v2026, %v2054
        %v2056 = vlaneseq
        %v2057 = vshrl.u32 %v2056, 7
        %v2058 = vsub.s32 0, %v2057
        %v2059 = vrot.slane %v2040, %v2058
        %v2060 = vlaneseq
        %v2061 = vshrl.u32 %v2060, 7
        %v2062 = vsub.s32 0, %v2061
        %v2063 = vrot.slane %v2048, %v2062
        %v2064 = vlaneseq
        %v2065 = vshrl.u32 %v2064, 7
        %v2066 = vsub.s32 0, %v2065
        %v2067 = vrot.slane %v2050, %v2066
        %v2068 = vlaneseq
        %v2069 = vshrl.u32 %v2068, 7
        %v2070 = vsub.s32 0, %v2069
        %v2071 = vrot.slane %v2033, %v2070
        %v2072 = vlaneseq
        %v2073 = vshrl.u32 %v2072, 7
        %v2074 = vsub.s32 0, %v2073
        %v2075 = vrot.slane %v2047, %v2074
        %v2076 = vlaneseq
        %v2077 = vshrl.u32 %v2076, 7
        %v2078 = vsub.s32 0, %v2077
        %v2079 = vrot.slane %v2049, %v2078
        %v2080 = vlaneseq
        %v2081 = vshrl.u32 %v2080, 7
        %v2082 = vsub.s32 0, %v2081
        %v2083 = vrot.slane %v2051, %v2082
        %2092 = vst.msk [vmem:[%s554 + $0x2] sm:$0x3] %vm1917, %v2055
        %2093 = vst.msk [vmem:[%s554 + $0x22] sm:$0x3] %vm1917, %v2059
        %2094 = vst.msk [vmem:[%s554 + $0x42] sm:$0x3] %vm1917, %v2063
        %2095 = vst.msk [vmem:[%s554 + $0x62] sm:$0x3] %vm1917, %v2067
        %2096 = vst.msk [vmem:[%s554 + $0x82] sm:$0x3] %vm1917, %v2071
        %2097 = vst.msk [vmem:[%s554 + $0xa2] sm:$0x3] %vm1917, %v2075
        %2098 = vst.msk [vmem:[%s554 + $0xc2] sm:$0x3] %vm1917, %v2079
        %2099 = vst.msk [vmem:[%s554 + $0xe2] sm:$0x3] %vm1917, %v2083
        %2100 = vst.msk [vmem:[%s554 + $0x4] sm:$0x3] %vm1917, %v2055
        %2101 = vst.msk [vmem:[%s554 + $0x24] sm:$0x3] %vm1917, %v2059
        %2102 = vst.msk [vmem:[%s554 + $0x44] sm:$0x3] %vm1917, %v2063
        %2103 = vst.msk [vmem:[%s554 + $0x64] sm:$0x3] %vm1917, %v2067
        %2104 = vst.msk [vmem:[%s554 + $0x84] sm:$0x3] %vm1917, %v2071
        %2105 = vst.msk [vmem:[%s554 + $0xa4] sm:$0x3] %vm1917, %v2075
        %2106 = vst.msk [vmem:[%s554 + $0xc4] sm:$0x3] %vm1917, %v2079
        %2107 = vst.msk [vmem:[%s554 + $0xe4] sm:$0x3] %vm1917, %v2083
        %v2110 = vrot.slane %v1146, 4
        %v2111 = vrot.slane %v1151, 4
        %v2112 = vsel %vm1658, %v2110, %v2111
        %2113 = vrot.lane.b32.xlu0 %v2110, 126
        %v2114 = vpop.permute.xlu0 %2113
        %2115 = vrot.lane.b32.xlu0 %v2112, 126
        %v2116 = vpop.permute.xlu0 %2115
        %2118 = vrot.lane.b32.xlu0 %v1146, 124
        %v2119 = vpop.permute.xlu0 %2118
        %2120 = vrot.lane.b32.xlu0 %v1151, 124
        %v2121 = vpop.permute.xlu0 %2120
        %v2122 = vsel %vm1658, %v1151, %v2114
        %2124 = vrot.lane.b32.xlu0 %v1146, 122
        %v2125 = vpop.permute.xlu0 %2124
        %2126 = vrot.lane.b32.xlu0 %v2122, 122
        %v2127 = vpop.permute.xlu0 %2126
        %2128 = vrot.lane.b32.xlu0 %v2116, 122
        %v2129 = vpop.permute.xlu0 %2128
        %2130 = vrot.lane.b32.xlu0 %v2119, 122
        %v2131 = vpop.permute.xlu0 %2130
        %2132 = vrot.lane.b32.xlu0 %v2121, 122
        %v2133 = vpop.permute.xlu0 %2132
        %v2138 = vsel %vm1658, %v2133, 0
        %2140 = vmatprep.subr.mxu0 0.0
        %2141 = vmatpush1.msra.mxu0 %v1729
        %2142 = vmatprep.subr.mxu0 0.0
        %2143 = vmatpush1.msra.mxu0 %v1731
        %2144 = vmatprep.subr.mxu0 0.0
        %2145 = vmatpush1.msra.mxu0 %v1733
        %2146 = vmatprep.subr.mxu0 0.0
        %2147 = vmatpush1.msra.mxu0 %v1735
        %2148 = vmatprep.subr.mxu0 0.0
        %2149 = vmatpush1.msra.mxu0 %v1930
        %2150 = vmatprep.subr.mxu0 0.0
        %2151 = vmatpush1.msra.mxu0 %v1721
        %2152 = vmatprep.subr.mxu0 0.0
        %2153 = vmatpush1.msra.mxu0 %v1723
        %2154 = vmatprep.subr.mxu0 0.0
        %2155 = vmatpush1.msra.mxu0 %v1725
        %2156 = vmatprep.subr.mxu0 0.0
        %2157 = vmatpush1.msra.mxu0 %v1727
        %2158 = vmatprep.subr.mxu0 0.0
        %2159 = vmatpush1.msra.mxu0 %v2125
        %2160 = vmatprep.subr.mxu0 0.0
        %2161 = vmatpush1.msra.mxu0 %v2127
        %2162 = vmatprep.subr.mxu0 0.0
        %2163 = vmatpush1.msra.mxu0 %v2129
        %2164 = vmatprep.subr.mxu0 0.0
        %2165 = vmatpush1.msra.mxu0 %v2131
        %2166 = vmatprep.subr.mxu0 0.0
        %2167 = vmatpush1.msra.mxu0 %v2138
        %2168 = vmatprep.subr.mxu0 0.0
        %2169 = vmatpush1.msra.mxu0 0.0
        %2170 = vmatprep.subr.mxu0 0.0
        %2171 = vmatpush1.msra.mxu0 0.0
        %2172 = vmatprep.subr.mxu0 0.0
        %2173 = vmatpush1.msra.mxu0 0.0
        %2174 = vmatprep.subr.mxu0 0.0
        %2175 = vmatpush1.msra.mxu0 0.0
        %2176 = vmatprep.subr.mxu0 0.0
        %2177 = vmatpush1.msra.mxu0 0.0
        %2178 = vmatprep.subr.mxu0 0.0
        %2179 = vmatpush1.msra.mxu0 0.0
        %2180 = vmatprep.subr.mxu0 0.0
        %2181 = vmatpush1.msra.mxu0 0.0
        %2182 = vmatprep.subr.mxu0 0.0
        %2183 = vmatpush1.msra.mxu0 0.0
        %2184 = vmatprep.subr.mxu0 0.0
        %2185 = vmatpush1.msra.mxu0 0.0
        %2186 = vmatprep.subr.mxu0 0.0
        %2187 = vmatpush1.msra.mxu0 0.0
        %2188 = vmatprep.subr.mxu0 0.0
        %2189 = vmatpush1.msra.mxu0 0.0
        %2190 = vmatprep.subr.mxu0 0.0
        %2191 = vmatpush1.msra.mxu0 0.0
        %2192 = vmatprep.subr.mxu0 0.0
        %2193 = vmatpush1.msra.mxu0 0.0
        %2194 = vmatprep.subr.mxu0 0.0
        %2195 = vmatpush1.msra.mxu0 0.0
        %2196 = vmatprep.subr.mxu0 0.0
        %2197 = vmatpush1.msra.mxu0 0.0
        %2198 = vmatprep.subr.mxu0 0.0
        %2199 = vmatpush1.msra.mxu0 0.0
        %2200 = vmatprep.subr.mxu0 0.0
        %2201 = vmatpush1.msra.mxu0 0.0
        %2202 = vmatprep.subr.mxu0 0.0
        %2203 = vmatpush1.msra.mxu0 0.0
        %2204 = vmatprep.mubr.f32.mxu0 0.0
        %2205 = vmatmul.mubr.f32.gmra.mrb[0].mxu0 %v1753
        %v2206 = vpop.f32.mrb[0].mxu0
        %v2207 = vadd.f32 %v1704, %v2206
        %v2208 = vpop.f32.mrb[0].mxu0
        %2209 = vdwg.mxu0
        %v2211 = vcombine.high %v2207, %v2207
        %v2213 = vunpack.c.l.s4 1966171168
        %v2214 = vunpack.c.0.s8 %v2213
        %v2215 = vlaneseq
        %v2216 = vshrl.u32 %v2215, 7
        %v2217 = vsub.s32 %v2214, %v2216
        %v2218 = vrot.slane %v2207, %v2217
        %v2220 = vunpack.c.l.s4 1966171168
        %v2221 = vunpack.c.0.s8 %v2220
        %v2222 = vlaneseq
        %v2223 = vshrl.u32 %v2222, 7
        %v2224 = vsub.s32 %v2221, %v2223
        %v2225 = vrot.slane %v2211, %v2224
        %v2226 = vcombine.high %v2218, %v2218
        %v2227 = vcombine.high %v2225, %v2225
        %v2229 = vunpack.c.l.s4 1966171168
        %v2230 = vunpack.c.0.s8 %v2229
        %v2231 = vlaneseq
        %v2232 = vshrl.u32 %v2231, 7
        %v2233 = vsub.s32 %v2230, %v2232
        %v2234 = vrot.slane %v2218, %v2233
        %v2236 = vunpack.c.l.s4 1966171168
        %v2237 = vunpack.c.0.s8 %v2236
        %v2238 = vlaneseq
        %v2239 = vshrl.u32 %v2238, 7
        %v2240 = vsub.s32 %v2237, %v2239
        %v2241 = vrot.slane %v2225, %v2240
        %v2243 = vunpack.c.l.s4 1966171168
        %v2244 = vunpack.c.0.s8 %v2243
        %v2245 = vlaneseq
        %v2246 = vshrl.u32 %v2245, 7
        %v2247 = vsub.s32 %v2244, %v2246
        %v2248 = vrot.slane %v2226, %v2247
        %v2250 = vunpack.c.l.s4 1966171168
        %v2251 = vunpack.c.0.s8 %v2250
        %v2252 = vlaneseq
        %v2253 = vshrl.u32 %v2252, 7
        %v2254 = vsub.s32 %v2251, %v2253
        %v2255 = vrot.slane %v2227, %v2254
        %v2256 = vcombine.high %v2234, %v2234
        %v2257 = vcombine.high %v2241, %v2241
        %v2258 = vcombine.high %v2248, %v2248
        %v2259 = vcombine.high %v2255, %v2255
        %v2260 = vlaneseq
        %v2261 = vshrl.u32 %v2260, 7
        %v2262 = vsub.s32 0, %v2261
        %v2263 = vrot.slane %v2234, %v2262
        %v2264 = vlaneseq
        %v2265 = vshrl.u32 %v2264, 7
        %v2266 = vsub.s32 0, %v2265
        %v2267 = vrot.slane %v2248, %v2266
        %v2268 = vlaneseq
        %v2269 = vshrl.u32 %v2268, 7
        %v2270 = vsub.s32 0, %v2269
        %v2271 = vrot.slane %v2256, %v2270
        %v2272 = vlaneseq
        %v2273 = vshrl.u32 %v2272, 7
        %v2274 = vsub.s32 0, %v2273
        %v2275 = vrot.slane %v2258, %v2274
        %v2276 = vlaneseq
        %v2277 = vshrl.u32 %v2276, 7
        %v2278 = vsub.s32 0, %v2277
        %v2279 = vrot.slane %v2241, %v2278
        %v2280 = vlaneseq
        %v2281 = vshrl.u32 %v2280, 7
        %v2282 = vsub.s32 0, %v2281
        %v2283 = vrot.slane %v2255, %v2282
        %v2284 = vlaneseq
        %v2285 = vshrl.u32 %v2284, 7
        %v2286 = vsub.s32 0, %v2285
        %v2287 = vrot.slane %v2257, %v2286
        %v2288 = vlaneseq
        %v2289 = vshrl.u32 %v2288, 7
        %v2290 = vsub.s32 0, %v2289
        %v2291 = vrot.slane %v2259, %v2290
        %2300 = vst.msk [vmem:[%s554 + $0x6] sm:$0x3] %vm1917, %v2263
        %2301 = vst.msk [vmem:[%s554 + $0x26] sm:$0x3] %vm1917, %v2267
        %2302 = vst.msk [vmem:[%s554 + $0x46] sm:$0x3] %vm1917, %v2271
        %2303 = vst.msk [vmem:[%s554 + $0x66] sm:$0x3] %vm1917, %v2275
        %2304 = vst.msk [vmem:[%s554 + $0x86] sm:$0x3] %vm1917, %v2279
        %2305 = vst.msk [vmem:[%s554 + $0xa6] sm:$0x3] %vm1917, %v2283
        %2306 = vst.msk [vmem:[%s554 + $0xc6] sm:$0x3] %vm1917, %v2287
        %2307 = vst.msk [vmem:[%s554 + $0xe6] sm:$0x3] %vm1917, %v2291
        %2309 = vrot.lane.b32.xlu0 %v1146, 126
        %v2310 = vpop.permute.xlu0 %2309
        %2311 = vrot.lane.b32.xlu0 %v1151, 126
        %v2312 = vpop.permute.xlu0 %2311
        %2314 = vrot.lane.b32.xlu0 %v2110, 124
        %v2315 = vpop.permute.xlu0 %2314
        %2316 = vrot.lane.b32.xlu0 %v2112, 124
        %v2317 = vpop.permute.xlu0 %2316
        %v2319 = vsel %vm1658, %v1696, %v2110
        %v2320 = vsel %vm1658, %v2312, %v2315
        %2323 = vrot.lane.b32.xlu0 %v2319, 122
        %v2324 = vpop.permute.xlu0 %2323
        %2325 = vrot.lane.b32.xlu0 %v2112, 122
        %v2326 = vpop.permute.xlu0 %2325
        %2327 = vrot.lane.b32.xlu0 %v2310, 122
        %v2328 = vpop.permute.xlu0 %2327
        %2329 = vrot.lane.b32.xlu0 %v2320, 122
        %v2330 = vpop.permute.xlu0 %2329
        %2331 = vrot.lane.b32.xlu0 %v2317, 122
        %v2332 = vpop.permute.xlu0 %2331
        %2338 = vmatprep.subr.mxu0 0.0
        %2339 = vmatpush1.msra.mxu0 %v1729
        %2340 = vmatprep.subr.mxu0 0.0
        %2341 = vmatpush1.msra.mxu0 %v1731
        %2342 = vmatprep.subr.mxu0 0.0
        %2343 = vmatpush1.msra.mxu0 %v1733
        %2344 = vmatprep.subr.mxu0 0.0
        %2345 = vmatpush1.msra.mxu0 %v1735
        %2346 = vmatprep.subr.mxu0 0.0
        %2347 = vmatpush1.msra.mxu0 %v2324
        %2348 = vmatprep.subr.mxu0 0.0
        %2349 = vmatpush1.msra.mxu0 %v2326
        %2350 = vmatprep.subr.mxu0 0.0
        %2351 = vmatpush1.msra.mxu0 %v2328
        %2352 = vmatprep.subr.mxu0 0.0
        %2353 = vmatpush1.msra.mxu0 %v2330
        %2354 = vmatprep.subr.mxu0 0.0
        %2355 = vmatpush1.msra.mxu0 %v2332
        %2356 = vmatprep.subr.mxu0 0.0
        %2357 = vmatpush1.msra.mxu0 %v2125
        %2358 = vmatprep.subr.mxu0 0.0
        %2359 = vmatpush1.msra.mxu0 %v2127
        %2360 = vmatprep.subr.mxu0 0.0
        %2361 = vmatpush1.msra.mxu0 %v2129
        %2362 = vmatprep.subr.mxu0 0.0
        %2363 = vmatpush1.msra.mxu0 %v2131
        %2364 = vmatprep.subr.mxu0 0.0
        %2365 = vmatpush1.msra.mxu0 %v2138
        %2366 = vmatprep.subr.mxu0 0.0
        %2367 = vmatpush1.msra.mxu0 0.0
        %2368 = vmatprep.subr.mxu0 0.0
        %2369 = vmatpush1.msra.mxu0 0.0
        %2370 = vmatprep.subr.mxu0 0.0
        %2371 = vmatpush1.msra.mxu0 0.0
        %2372 = vmatprep.subr.mxu0 0.0
        %2373 = vmatpush1.msra.mxu0 0.0
        %2374 = vmatprep.subr.mxu0 0.0
        %2375 = vmatpush1.msra.mxu0 0.0
        %2376 = vmatprep.subr.mxu0 0.0
        %2377 = vmatpush1.msra.mxu0 0.0
        %2378 = vmatprep.subr.mxu0 0.0
        %2379 = vmatpush1.msra.mxu0 0.0
        %2380 = vmatprep.subr.mxu0 0.0
        %2381 = vmatpush1.msra.mxu0 0.0
        %2382 = vmatprep.subr.mxu0 0.0
        %2383 = vmatpush1.msra.mxu0 0.0
        %2384 = vmatprep.subr.mxu0 0.0
        %2385 = vmatpush1.msra.mxu0 0.0
        %2386 = vmatprep.subr.mxu0 0.0
        %2387 = vmatpush1.msra.mxu0 0.0
        %2388 = vmatprep.subr.mxu0 0.0
        %2389 = vmatpush1.msra.mxu0 0.0
        %2390 = vmatprep.subr.mxu0 0.0
        %2391 = vmatpush1.msra.mxu0 0.0
        %2392 = vmatprep.subr.mxu0 0.0
        %2393 = vmatpush1.msra.mxu0 0.0
        %2394 = vmatprep.subr.mxu0 0.0
        %2395 = vmatpush1.msra.mxu0 0.0
        %2396 = vmatprep.subr.mxu0 0.0
        %2397 = vmatpush1.msra.mxu0 0.0
        %2398 = vmatprep.subr.mxu0 0.0
        %2399 = vmatpush1.msra.mxu0 0.0
        %2400 = vmatprep.subr.mxu0 0.0
        %2401 = vmatpush1.msra.mxu0 0.0
        %2402 = vmatprep.mubr.f32.mxu0 0.0
        %2403 = vmatmul.mubr.f32.gmra.mrb[0].mxu0 %v1753
        %v2404 = vpop.f32.mrb[0].mxu0
        %v2405 = vadd.f32 %v1704, %v2404
        %v2406 = vpop.f32.mrb[0].mxu0
        %2407 = vdwg.mxu0
        %v2409 = vcombine.high %v2405, %v2405
        %v2411 = vunpack.c.l.s4 1966171168
        %v2412 = vunpack.c.0.s8 %v2411
        %v2413 = vlaneseq
        %v2414 = vshrl.u32 %v2413, 7
        %v2415 = vsub.s32 %v2412, %v2414
        %v2416 = vrot.slane %v2405, %v2415
        %v2418 = vunpack.c.l.s4 1966171168
        %v2419 = vunpack.c.0.s8 %v2418
        %v2420 = vlaneseq
        %v2421 = vshrl.u32 %v2420, 7
        %v2422 = vsub.s32 %v2419, %v2421
        %v2423 = vrot.slane %v2409, %v2422
        %v2424 = vcombine.high %v2416, %v2416
        %v2425 = vcombine.high %v2423, %v2423
        %v2427 = vunpack.c.l.s4 1966171168
        %v2428 = vunpack.c.0.s8 %v2427
        %v2429 = vlaneseq
        %v2430 = vshrl.u32 %v2429, 7
        %v2431 = vsub.s32 %v2428, %v2430
        %v2432 = vrot.slane %v2416, %v2431
        %v2434 = vunpack.c.l.s4 1966171168
        %v2435 = vunpack.c.0.s8 %v2434
        %v2436 = vlaneseq
        %v2437 = vshrl.u32 %v2436, 7
        %v2438 = vsub.s32 %v2435, %v2437
        %v2439 = vrot.slane %v2423, %v2438
        %v2441 = vunpack.c.l.s4 1966171168
        %v2442 = vunpack.c.0.s8 %v2441
        %v2443 = vlaneseq
        %v2444 = vshrl.u32 %v2443, 7
        %v2445 = vsub.s32 %v2442, %v2444
        %v2446 = vrot.slane %v2424, %v2445
        %v2448 = vunpack.c.l.s4 1966171168
        %v2449 = vunpack.c.0.s8 %v2448
        %v2450 = vlaneseq
        %v2451 = vshrl.u32 %v2450, 7
        %v2452 = vsub.s32 %v2449, %v2451
        %v2453 = vrot.slane %v2425, %v2452
        %v2454 = vcombine.high %v2432, %v2432
        %v2455 = vcombine.high %v2439, %v2439
        %v2456 = vcombine.high %v2446, %v2446
        %v2457 = vcombine.high %v2453, %v2453
        %v2458 = vlaneseq
        %v2459 = vshrl.u32 %v2458, 7
        %v2460 = vsub.s32 0, %v2459
        %v2461 = vrot.slane %v2432, %v2460
        %v2462 = vlaneseq
        %v2463 = vshrl.u32 %v2462, 7
        %v2464 = vsub.s32 0, %v2463
        %v2465 = vrot.slane %v2446, %v2464
        %v2466 = vlaneseq
        %v2467 = vshrl.u32 %v2466, 7
        %v2468 = vsub.s32 0, %v2467
        %v2469 = vrot.slane %v2454, %v2468
        %v2470 = vlaneseq
        %v2471 = vshrl.u32 %v2470, 7
        %v2472 = vsub.s32 0, %v2471
        %v2473 = vrot.slane %v2456, %v2472
        %v2474 = vlaneseq
        %v2475 = vshrl.u32 %v2474, 7
        %v2476 = vsub.s32 0, %v2475
        %v2477 = vrot.slane %v2439, %v2476
        %v2478 = vlaneseq
        %v2479 = vshrl.u32 %v2478, 7
        %v2480 = vsub.s32 0, %v2479
        %v2481 = vrot.slane %v2453, %v2480
        %v2482 = vlaneseq
        %v2483 = vshrl.u32 %v2482, 7
        %v2484 = vsub.s32 0, %v2483
        %v2485 = vrot.slane %v2455, %v2484
        %v2486 = vlaneseq
        %v2487 = vshrl.u32 %v2486, 7
        %v2488 = vsub.s32 0, %v2487
        %v2489 = vrot.slane %v2457, %v2488
        %2498 = vst.msk [vmem:[%s554 + $0x8] sm:$0x3] %vm1917, %v2461
        %2499 = vst.msk [vmem:[%s554 + $0x28] sm:$0x3] %vm1917, %v2465
        %2500 = vst.msk [vmem:[%s554 + $0x48] sm:$0x3] %vm1917, %v2469
        %2501 = vst.msk [vmem:[%s554 + $0x68] sm:$0x3] %vm1917, %v2473
        %2502 = vst.msk [vmem:[%s554 + $0x88] sm:$0x3] %vm1917, %v2477
        %2503 = vst.msk [vmem:[%s554 + $0xa8] sm:$0x3] %vm1917, %v2481
        %2504 = vst.msk [vmem:[%s554 + $0xc8] sm:$0x3] %vm1917, %v2485
        %2505 = vst.msk [vmem:[%s554 + $0xe8] sm:$0x3] %vm1917, %v2489
        %v2507 = vsel %vm1658, %v2121, %v2110
        %2509 = vrot.lane.b32.xlu0 %v2507, 122
        %v2510 = vpop.permute.xlu0 %2509
        %2512 = vmatprep.subr.mxu0 0.0
        %2513 = vmatpush1.msra.mxu0 %v2125
        %2514 = vmatprep.subr.mxu0 0.0
        %2515 = vmatpush1.msra.mxu0 %v2127
        %2516 = vmatprep.subr.mxu0 0.0
        %2517 = vmatpush1.msra.mxu0 %v2129
        %2518 = vmatprep.subr.mxu0 0.0
        %2519 = vmatpush1.msra.mxu0 %v2131
        %2520 = vmatprep.subr.mxu0 0.0
        %2521 = vmatpush1.msra.mxu0 %v2510
        %2522 = vmatprep.subr.mxu0 0.0
        %2523 = vmatpush1.msra.mxu0 %v2326
        %2524 = vmatprep.subr.mxu0 0.0
        %2525 = vmatpush1.msra.mxu0 %v2328
        %2526 = vmatprep.subr.mxu0 0.0
        %2527 = vmatpush1.msra.mxu0 %v2330
        %2528 = vmatprep.subr.mxu0 0.0
        %2529 = vmatpush1.msra.mxu0 %v2332
        %2530 = vmatprep.subr.mxu0 0.0
        %2531 = vmatpush1.msra.mxu0 %v2125
        %2532 = vmatprep.subr.mxu0 0.0
        %2533 = vmatpush1.msra.mxu0 %v2127
        %2534 = vmatprep.subr.mxu0 0.0
        %2535 = vmatpush1.msra.mxu0 %v2129
        %2536 = vmatprep.subr.mxu0 0.0
        %2537 = vmatpush1.msra.mxu0 %v2131
        %2538 = vmatprep.subr.mxu0 0.0
        %2539 = vmatpush1.msra.mxu0 %v2138
        %2540 = vmatprep.subr.mxu0 0.0
        %2541 = vmatpush1.msra.mxu0 0.0
        %2542 = vmatprep.subr.mxu0 0.0
        %2543 = vmatpush1.msra.mxu0 0.0
        %2544 = vmatprep.subr.mxu0 0.0
        %2545 = vmatpush1.msra.mxu0 0.0
        %2546 = vmatprep.subr.mxu0 0.0
        %2547 = vmatpush1.msra.mxu0 0.0
        %2548 = vmatprep.subr.mxu0 0.0
        %2549 = vmatpush1.msra.mxu0 0.0
        %2550 = vmatprep.subr.mxu0 0.0
        %2551 = vmatpush1.msra.mxu0 0.0
        %2552 = vmatprep.subr.mxu0 0.0
        %2553 = vmatpush1.msra.mxu0 0.0
        %2554 = vmatprep.subr.mxu0 0.0
        %2555 = vmatpush1.msra.mxu0 0.0
        %2556 = vmatprep.subr.mxu0 0.0
        %2557 = vmatpush1.msra.mxu0 0.0
        %2558 = vmatprep.subr.mxu0 0.0
        %2559 = vmatpush1.msra.mxu0 0.0
        %2560 = vmatprep.subr.mxu0 0.0
        %2561 = vmatpush1.msra.mxu0 0.0
        %2562 = vmatprep.subr.mxu0 0.0
        %2563 = vmatpush1.msra.mxu0 0.0
        %2564 = vmatprep.subr.mxu0 0.0
        %2565 = vmatpush1.msra.mxu0 0.0
        %2566 = vmatprep.subr.mxu0 0.0
        %2567 = vmatpush1.msra.mxu0 0.0
        %2568 = vmatprep.subr.mxu0 0.0
        %2569 = vmatpush1.msra.mxu0 0.0
        %2570 = vmatprep.subr.mxu0 0.0
        %2571 = vmatpush1.msra.mxu0 0.0
        %2572 = vmatprep.subr.mxu0 0.0
        %2573 = vmatpush1.msra.mxu0 0.0
        %2574 = vmatprep.subr.mxu0 0.0
        %2575 = vmatpush1.msra.mxu0 0.0
        %2576 = vmatprep.mubr.f32.mxu0 0.0
        %2577 = vmatmul.mubr.f32.gmra.mrb[0].mxu0 %v1753
        %v2578 = vpop.f32.mrb[0].mxu0
        %v2579 = vadd.f32 %v1704, %v2578
        %v2580 = vpop.f32.mrb[0].mxu0
        %2581 = vdwg.mxu0
        %v2583 = vcombine.high %v2579, %v2579
        %v2585 = vunpack.c.l.s4 1966171168
        %v2586 = vunpack.c.0.s8 %v2585
        %v2587 = vlaneseq
        %v2588 = vshrl.u32 %v2587, 7
        %v2589 = vsub.s32 %v2586, %v2588
        %v2590 = vrot.slane %v2579, %v2589
        %v2592 = vunpack.c.l.s4 1966171168
        %v2593 = vunpack.c.0.s8 %v2592
        %v2594 = vlaneseq
        %v2595 = vshrl.u32 %v2594, 7
        %v2596 = vsub.s32 %v2593, %v2595
        %v2597 = vrot.slane %v2583, %v2596
        %v2598 = vcombine.high %v2590, %v2590
        %v2599 = vcombine.high %v2597, %v2597
        %v2601 = vunpack.c.l.s4 1966171168
        %v2602 = vunpack.c.0.s8 %v2601
        %v2603 = vlaneseq
        %v2604 = vshrl.u32 %v2603, 7
        %v2605 = vsub.s32 %v2602, %v2604
        %v2606 = vrot.slane %v2590, %v2605
        %v2608 = vunpack.c.l.s4 1966171168
        %v2609 = vunpack.c.0.s8 %v2608
        %v2610 = vlaneseq
        %v2611 = vshrl.u32 %v2610, 7
        %v2612 = vsub.s32 %v2609, %v2611
        %v2613 = vrot.slane %v2597, %v2612
        %v2615 = vunpack.c.l.s4 1966171168
        %v2616 = vunpack.c.0.s8 %v2615
        %v2617 = vlaneseq
        %v2618 = vshrl.u32 %v2617, 7
        %v2619 = vsub.s32 %v2616, %v2618
        %v2620 = vrot.slane %v2598, %v2619
        %v2622 = vunpack.c.l.s4 1966171168
        %v2623 = vunpack.c.0.s8 %v2622
        %v2624 = vlaneseq
        %v2625 = vshrl.u32 %v2624, 7
        %v2626 = vsub.s32 %v2623, %v2625
        %v2627 = vrot.slane %v2599, %v2626
        %v2628 = vcombine.high %v2606, %v2606
        %v2629 = vcombine.high %v2613, %v2613
        %v2630 = vcombine.high %v2620, %v2620
        %v2631 = vcombine.high %v2627, %v2627
        %v2632 = vlaneseq
        %v2633 = vshrl.u32 %v2632, 7
        %v2634 = vsub.s32 0, %v2633
        %v2635 = vrot.slane %v2606, %v2634
        %v2636 = vlaneseq
        %v2637 = vshrl.u32 %v2636, 7
        %v2638 = vsub.s32 0, %v2637
        %v2639 = vrot.slane %v2620, %v2638
        %v2640 = vlaneseq
        %v2641 = vshrl.u32 %v2640, 7
        %v2642 = vsub.s32 0, %v2641
        %v2643 = vrot.slane %v2628, %v2642
        %v2644 = vlaneseq
        %v2645 = vshrl.u32 %v2644, 7
        %v2646 = vsub.s32 0, %v2645
        %v2647 = vrot.slane %v2630, %v2646
        %v2648 = vlaneseq
        %v2649 = vshrl.u32 %v2648, 7
        %v2650 = vsub.s32 0, %v2649
        %v2651 = vrot.slane %v2613, %v2650
        %v2652 = vlaneseq
        %v2653 = vshrl.u32 %v2652, 7
        %v2654 = vsub.s32 0, %v2653
        %v2655 = vrot.slane %v2627, %v2654
        %v2656 = vlaneseq
        %v2657 = vshrl.u32 %v2656, 7
        %v2658 = vsub.s32 0, %v2657
        %v2659 = vrot.slane %v2629, %v2658
        %v2660 = vlaneseq
        %v2661 = vshrl.u32 %v2660, 7
        %v2662 = vsub.s32 0, %v2661
        %v2663 = vrot.slane %v2631, %v2662
        %2672 = vst.msk [vmem:[%s554 + $0xa] sm:$0x3] %vm1917, %v2635
        %2673 = vst.msk [vmem:[%s554 + $0x2a] sm:$0x3] %vm1917, %v2639
        %2674 = vst.msk [vmem:[%s554 + $0x4a] sm:$0x3] %vm1917, %v2643
        %2675 = vst.msk [vmem:[%s554 + $0x6a] sm:$0x3] %vm1917, %v2647
        %2676 = vst.msk [vmem:[%s554 + $0x8a] sm:$0x3] %vm1917, %v2651
        %2677 = vst.msk [vmem:[%s554 + $0xaa] sm:$0x3] %vm1917, %v2655
        %2678 = vst.msk [vmem:[%s554 + $0xca] sm:$0x3] %vm1917, %v2659
        %2679 = vst.msk [vmem:[%s554 + $0xea] sm:$0x3] %vm1917, %v2663
        %2680 = vst.msk [vmem:[%s554 + $0xc] sm:$0x3] %vm1917, %v2635
        %2681 = vst.msk [vmem:[%s554 + $0x2c] sm:$0x3] %vm1917, %v2639
        %2682 = vst.msk [vmem:[%s554 + $0x4c] sm:$0x3] %vm1917, %v2643
        %2683 = vst.msk [vmem:[%s554 + $0x6c] sm:$0x3] %vm1917, %v2647
        %2684 = vst.msk [vmem:[%s554 + $0x8c] sm:$0x3] %vm1917, %v2651
        %2685 = vst.msk [vmem:[%s554 + $0xac] sm:$0x3] %vm1917, %v2655
        %2686 = vst.msk [vmem:[%s554 + $0xcc] sm:$0x3] %vm1917, %v2659
        %2687 = vst.msk [vmem:[%s554 + $0xec] sm:$0x3] %vm1917, %v2663
        %v2690 = vrot.slane %v1314, 4
        %v2691 = vrot.slane %v1319, 4
        %v2692 = vsel %vm1658, %v2690, %v2691
        %2693 = vrot.lane.b32.xlu0 %v2690, 126
        %v2694 = vpop.permute.xlu0 %2693
        %2695 = vrot.lane.b32.xlu0 %v2692, 126
        %v2696 = vpop.permute.xlu0 %2695
        %2698 = vrot.lane.b32.xlu0 %v1314, 124
        %v2699 = vpop.permute.xlu0 %2698
        %2700 = vrot.lane.b32.xlu0 %v1319, 124
        %v2701 = vpop.permute.xlu0 %2700
        %v2702 = vsel %vm1658, %v1319, %v2694
        %2704 = vrot.lane.b32.xlu0 %v1314, 122
        %v2705 = vpop.permute.xlu0 %2704
        %2706 = vrot.lane.b32.xlu0 %v2702, 122
        %v2707 = vpop.permute.xlu0 %2706
        %2708 = vrot.lane.b32.xlu0 %v2696, 122
        %v2709 = vpop.permute.xlu0 %2708
        %2710 = vrot.lane.b32.xlu0 %v2699, 122
        %v2711 = vpop.permute.xlu0 %2710
        %2712 = vrot.lane.b32.xlu0 %v2701, 122
        %v2713 = vpop.permute.xlu0 %2712
        %v2718 = vsel %vm1658, %v2713, 0
        %2720 = vmatprep.subr.mxu0 0.0
        %2721 = vmatpush1.msra.mxu0 %v2125
        %2722 = vmatprep.subr.mxu0 0.0
        %2723 = vmatpush1.msra.mxu0 %v2127
        %2724 = vmatprep.subr.mxu0 0.0
        %2725 = vmatpush1.msra.mxu0 %v2129
        %2726 = vmatprep.subr.mxu0 0.0
        %2727 = vmatpush1.msra.mxu0 %v2131
        %2728 = vmatprep.subr.mxu0 0.0
        %2729 = vmatpush1.msra.mxu0 %v2510
        %2730 = vmatprep.subr.mxu0 0.0
        %2731 = vmatpush1.msra.mxu0 %v2326
        %2732 = vmatprep.subr.mxu0 0.0
        %2733 = vmatpush1.msra.mxu0 %v2328
        %2734 = vmatprep.subr.mxu0 0.0
        %2735 = vmatpush1.msra.mxu0 %v2330
        %2736 = vmatprep.subr.mxu0 0.0
        %2737 = vmatpush1.msra.mxu0 %v2332
        %2738 = vmatprep.subr.mxu0 0.0
        %2739 = vmatpush1.msra.mxu0 %v2705
        %2740 = vmatprep.subr.mxu0 0.0
        %2741 = vmatpush1.msra.mxu0 %v2707
        %2742 = vmatprep.subr.mxu0 0.0
        %2743 = vmatpush1.msra.mxu0 %v2709
        %2744 = vmatprep.subr.mxu0 0.0
        %2745 = vmatpush1.msra.mxu0 %v2711
        %2746 = vmatprep.subr.mxu0 0.0
        %2747 = vmatpush1.msra.mxu0 %v2718
        %2748 = vmatprep.subr.mxu0 0.0
        %2749 = vmatpush1.msra.mxu0 0.0
        %2750 = vmatprep.subr.mxu0 0.0
        %2751 = vmatpush1.msra.mxu0 0.0
        %2752 = vmatprep.subr.mxu0 0.0
        %2753 = vmatpush1.msra.mxu0 0.0
        %2754 = vmatprep.subr.mxu0 0.0
        %2755 = vmatpush1.msra.mxu0 0.0
        %2756 = vmatprep.subr.mxu0 0.0
        %2757 = vmatpush1.msra.mxu0 0.0
        %2758 = vmatprep.subr.mxu0 0.0
        %2759 = vmatpush1.msra.mxu0 0.0
        %2760 = vmatprep.subr.mxu0 0.0
        %2761 = vmatpush1.msra.mxu0 0.0
        %2762 = vmatprep.subr.mxu0 0.0
        %2763 = vmatpush1.msra.mxu0 0.0
        %2764 = vmatprep.subr.mxu0 0.0
        %2765 = vmatpush1.msra.mxu0 0.0
        %2766 = vmatprep.subr.mxu0 0.0
        %2767 = vmatpush1.msra.mxu0 0.0
        %2768 = vmatprep.subr.mxu0 0.0
        %2769 = vmatpush1.msra.mxu0 0.0
        %2770 = vmatprep.subr.mxu0 0.0
        %2771 = vmatpush1.msra.mxu0 0.0
        %2772 = vmatprep.subr.mxu0 0.0
        %2773 = vmatpush1.msra.mxu0 0.0
        %2774 = vmatprep.subr.mxu0 0.0
        %2775 = vmatpush1.msra.mxu0 0.0
        %2776 = vmatprep.subr.mxu0 0.0
        %2777 = vmatpush1.msra.mxu0 0.0
        %2778 = vmatprep.subr.mxu0 0.0
        %2779 = vmatpush1.msra.mxu0 0.0
        %2780 = vmatprep.subr.mxu0 0.0
        %2781 = vmatpush1.msra.mxu0 0.0
        %2782 = vmatprep.subr.mxu0 0.0
        %2783 = vmatpush1.msra.mxu0 0.0
        %2784 = vmatprep.mubr.f32.mxu0 0.0
        %2785 = vmatmul.mubr.f32.gmra.mrb[0].mxu0 %v1753
        %v2786 = vpop.f32.mrb[0].mxu0
        %v2787 = vadd.f32 %v1704, %v2786
        %v2788 = vpop.f32.mrb[0].mxu0
        %2789 = vdwg.mxu0
        %v2791 = vcombine.high %v2787, %v2787
        %v2793 = vunpack.c.l.s4 1966171168
        %v2794 = vunpack.c.0.s8 %v2793
        %v2795 = vlaneseq
        %v2796 = vshrl.u32 %v2795, 7
        %v2797 = vsub.s32 %v2794, %v2796
        %v2798 = vrot.slane %v2787, %v2797
        %v2800 = vunpack.c.l.s4 1966171168
        %v2801 = vunpack.c.0.s8 %v2800
        %v2802 = vlaneseq
        %v2803 = vshrl.u32 %v2802, 7
        %v2804 = vsub.s32 %v2801, %v2803
        %v2805 = vrot.slane %v2791, %v2804
        %v2806 = vcombine.high %v2798, %v2798
        %v2807 = vcombine.high %v2805, %v2805
        %v2809 = vunpack.c.l.s4 1966171168
        %v2810 = vunpack.c.0.s8 %v2809
        %v2811 = vlaneseq
        %v2812 = vshrl.u32 %v2811, 7
        %v2813 = vsub.s32 %v2810, %v2812
        %v2814 = vrot.slane %v2798, %v2813
        %v2816 = vunpack.c.l.s4 1966171168
        %v2817 = vunpack.c.0.s8 %v2816
        %v2818 = vlaneseq
        %v2819 = vshrl.u32 %v2818, 7
        %v2820 = vsub.s32 %v2817, %v2819
        %v2821 = vrot.slane %v2805, %v2820
        %v2823 = vunpack.c.l.s4 1966171168
        %v2824 = vunpack.c.0.s8 %v2823
        %v2825 = vlaneseq
        %v2826 = vshrl.u32 %v2825, 7
        %v2827 = vsub.s32 %v2824, %v2826
        %v2828 = vrot.slane %v2806, %v2827
        %v2830 = vunpack.c.l.s4 1966171168
        %v2831 = vunpack.c.0.s8 %v2830
        %v2832 = vlaneseq
        %v2833 = vshrl.u32 %v2832, 7
        %v2834 = vsub.s32 %v2831, %v2833
        %v2835 = vrot.slane %v2807, %v2834
        %v2836 = vcombine.high %v2814, %v2814
        %v2837 = vcombine.high %v2821, %v2821
        %v2838 = vcombine.high %v2828, %v2828
        %v2839 = vcombine.high %v2835, %v2835
        %v2840 = vlaneseq
        %v2841 = vshrl.u32 %v2840, 7
        %v2842 = vsub.s32 0, %v2841
        %v2843 = vrot.slane %v2814, %v2842
        %v2844 = vlaneseq
        %v2845 = vshrl.u32 %v2844, 7
        %v2846 = vsub.s32 0, %v2845
        %v2847 = vrot.slane %v2828, %v2846
        %v2848 = vlaneseq
        %v2849 = vshrl.u32 %v2848, 7
        %v2850 = vsub.s32 0, %v2849
        %v2851 = vrot.slane %v2836, %v2850
        %v2852 = vlaneseq
        %v2853 = vshrl.u32 %v2852, 7
        %v2854 = vsub.s32 0, %v2853
        %v2855 = vrot.slane %v2838, %v2854
        %v2856 = vlaneseq
        %v2857 = vshrl.u32 %v2856, 7
        %v2858 = vsub.s32 0, %v2857
        %v2859 = vrot.slane %v2821, %v2858
        %v2860 = vlaneseq
        %v2861 = vshrl.u32 %v2860, 7
        %v2862 = vsub.s32 0, %v2861
        %v2863 = vrot.slane %v2835, %v2862
        %v2864 = vlaneseq
        %v2865 = vshrl.u32 %v2864, 7
        %v2866 = vsub.s32 0, %v2865
        %v2867 = vrot.slane %v2837, %v2866
        %v2868 = vlaneseq
        %v2869 = vshrl.u32 %v2868, 7
        %v2870 = vsub.s32 0, %v2869
        %v2871 = vrot.slane %v2839, %v2870
        %2880 = vst.msk [vmem:[%s554 + $0xe] sm:$0x3] %vm1917, %v2843
        %2881 = vst.msk [vmem:[%s554 + $0x2e] sm:$0x3] %vm1917, %v2847
        %2882 = vst.msk [vmem:[%s554 + $0x4e] sm:$0x3] %vm1917, %v2851
        %2883 = vst.msk [vmem:[%s554 + $0x6e] sm:$0x3] %vm1917, %v2855
        %2884 = vst.msk [vmem:[%s554 + $0x8e] sm:$0x3] %vm1917, %v2859
        %2885 = vst.msk [vmem:[%s554 + $0xae] sm:$0x3] %vm1917, %v2863
        %2886 = vst.msk [vmem:[%s554 + $0xce] sm:$0x3] %vm1917, %v2867
        %2887 = vst.msk [vmem:[%s554 + $0xee] sm:$0x3] %vm1917, %v2871
        %2889 = vrot.lane.b32.xlu0 %v1314, 126
        %v2890 = vpop.permute.xlu0 %2889
        %2891 = vrot.lane.b32.xlu0 %v1319, 126
        %v2892 = vpop.permute.xlu0 %2891
        %2894 = vrot.lane.b32.xlu0 %v2690, 124
        %v2895 = vpop.permute.xlu0 %2894
        %2896 = vrot.lane.b32.xlu0 %v2692, 124
        %v2897 = vpop.permute.xlu0 %2896
        %v2899 = vsel %vm1658, %v2121, %v2690
        %v2900 = vsel %vm1658, %v2892, %v2895
        %2903 = vrot.lane.b32.xlu0 %v2899, 122
        %v2904 = vpop.permute.xlu0 %2903
        %2905 = vrot.lane.b32.xlu0 %v2692, 122
        %v2906 = vpop.permute.xlu0 %2905
        %2907 = vrot.lane.b32.xlu0 %v2890, 122
        %v2908 = vpop.permute.xlu0 %2907
        %2909 = vrot.lane.b32.xlu0 %v2900, 122
        %v2910 = vpop.permute.xlu0 %2909
        %2911 = vrot.lane.b32.xlu0 %v2897, 122
        %v2912 = vpop.permute.xlu0 %2911
        %2918 = vmatprep.subr.mxu0 0.0
        %2919 = vmatpush1.msra.mxu0 %v2125
        %2920 = vmatprep.subr.mxu0 0.0
        %2921 = vmatpush1.msra.mxu0 %v2127
        %2922 = vmatprep.subr.mxu0 0.0
        %2923 = vmatpush1.msra.mxu0 %v2129
        %2924 = vmatprep.subr.mxu0 0.0
        %2925 = vmatpush1.msra.mxu0 %v2131
        %2926 = vmatprep.subr.mxu0 0.0
        %2927 = vmatpush1.msra.mxu0 %v2904
        %2928 = vmatprep.subr.mxu0 0.0
        %2929 = vmatpush1.msra.mxu0 %v2906
        %2930 = vmatprep.subr.mxu0 0.0
        %2931 = vmatpush1.msra.mxu0 %v2908
        %2932 = vmatprep.subr.mxu0 0.0
        %2933 = vmatpush1.msra.mxu0 %v2910
        %2934 = vmatprep.subr.mxu0 0.0
        %2935 = vmatpush1.msra.mxu0 %v2912
        %2936 = vmatprep.subr.mxu0 0.0
        %2937 = vmatpush1.msra.mxu0 %v2705
        %2938 = vmatprep.subr.mxu0 0.0
        %2939 = vmatpush1.msra.mxu0 %v2707
        %2940 = vmatprep.subr.mxu0 0.0
        %2941 = vmatpush1.msra.mxu0 %v2709
        %2942 = vmatprep.subr.mxu0 0.0
        %2943 = vmatpush1.msra.mxu0 %v2711
        %2944 = vmatprep.subr.mxu0 0.0
        %2945 = vmatpush1.msra.mxu0 %v2718
        %2946 = vmatprep.subr.mxu0 0.0
        %2947 = vmatpush1.msra.mxu0 0.0
        %2948 = vmatprep.subr.mxu0 0.0
        %2949 = vmatpush1.msra.mxu0 0.0
        %2950 = vmatprep.subr.mxu0 0.0
        %2951 = vmatpush1.msra.mxu0 0.0
        %2952 = vmatprep.subr.mxu0 0.0
        %2953 = vmatpush1.msra.mxu0 0.0
        %2954 = vmatprep.subr.mxu0 0.0
        %2955 = vmatpush1.msra.mxu0 0.0
        %2956 = vmatprep.subr.mxu0 0.0
        %2957 = vmatpush1.msra.mxu0 0.0
        %2958 = vmatprep.subr.mxu0 0.0
        %2959 = vmatpush1.msra.mxu0 0.0
        %2960 = vmatprep.subr.mxu0 0.0
        %2961 = vmatpush1.msra.mxu0 0.0
        %2962 = vmatprep.subr.mxu0 0.0
        %2963 = vmatpush1.msra.mxu0 0.0
        %2964 = vmatprep.subr.mxu0 0.0
        %2965 = vmatpush1.msra.mxu0 0.0
        %2966 = vmatprep.subr.mxu0 0.0
        %2967 = vmatpush1.msra.mxu0 0.0
        %2968 = vmatprep.subr.mxu0 0.0
        %2969 = vmatpush1.msra.mxu0 0.0
        %2970 = vmatprep.subr.mxu0 0.0
        %2971 = vmatpush1.msra.mxu0 0.0
        %2972 = vmatprep.subr.mxu0 0.0
        %2973 = vmatpush1.msra.mxu0 0.0
        %2974 = vmatprep.subr.mxu0 0.0
        %2975 = vmatpush1.msra.mxu0 0.0
        %2976 = vmatprep.subr.mxu0 0.0
        %2977 = vmatpush1.msra.mxu0 0.0
        %2978 = vmatprep.subr.mxu0 0.0
        %2979 = vmatpush1.msra.mxu0 0.0
        %2980 = vmatprep.subr.mxu0 0.0
        %2981 = vmatpush1.msra.mxu0 0.0
        %2982 = vmatprep.mubr.f32.mxu0 0.0
        %2983 = vmatmul.mubr.f32.gmra.mrb[0].mxu0 %v1753
        %v2984 = vpop.f32.mrb[0].mxu0
        %v2985 = vadd.f32 %v1704, %v2984
        %v2986 = vpop.f32.mrb[0].mxu0
        %2987 = vdwg.mxu0
        %v2989 = vcombine.high %v2985, %v2985
        %v2991 = vunpack.c.l.s4 1966171168
        %v2992 = vunpack.c.0.s8 %v2991
        %v2993 = vlaneseq
        %v2994 = vshrl.u32 %v2993, 7
        %v2995 = vsub.s32 %v2992, %v2994
        %v2996 = vrot.slane %v2985, %v2995
        %v2998 = vunpack.c.l.s4 1966171168
        %v2999 = vunpack.c.0.s8 %v2998
        %v3000 = vlaneseq
        %v3001 = vshrl.u32 %v3000, 7
        %v3002 = vsub.s32 %v2999, %v3001
        %v3003 = vrot.slane %v2989, %v3002
        %v3004 = vcombine.high %v2996, %v2996
        %v3005 = vcombine.high %v3003, %v3003
        %v3007 = vunpack.c.l.s4 1966171168
        %v3008 = vunpack.c.0.s8 %v3007
        %v3009 = vlaneseq
        %v3010 = vshrl.u32 %v3009, 7
        %v3011 = vsub.s32 %v3008, %v3010
        %v3012 = vrot.slane %v2996, %v3011
        %v3014 = vunpack.c.l.s4 1966171168
        %v3015 = vunpack.c.0.s8 %v3014
        %v3016 = vlaneseq
        %v3017 = vshrl.u32 %v3016, 7
        %v3018 = vsub.s32 %v3015, %v3017
        %v3019 = vrot.slane %v3003, %v3018
        %v3021 = vunpack.c.l.s4 1966171168
        %v3022 = vunpack.c.0.s8 %v3021
        %v3023 = vlaneseq
        %v3024 = vshrl.u32 %v3023, 7
        %v3025 = vsub.s32 %v3022, %v3024
        %v3026 = vrot.slane %v3004, %v3025
        %v3028 = vunpack.c.l.s4 1966171168
        %v3029 = vunpack.c.0.s8 %v3028
        %v3030 = vlaneseq
        %v3031 = vshrl.u32 %v3030, 7
        %v3032 = vsub.s32 %v3029, %v3031
        %v3033 = vrot.slane %v3005, %v3032
        %v3034 = vcombine.high %v3012, %v3012
        %v3035 = vcombine.high %v3019, %v3019
        %v3036 = vcombine.high %v3026, %v3026
        %v3037 = vcombine.high %v3033, %v3033
        %v3038 = vlaneseq
        %v3039 = vshrl.u32 %v3038, 7
        %v3040 = vsub.s32 0, %v3039
        %v3041 = vrot.slane %v3012, %v3040
        %v3042 = vlaneseq
        %v3043 = vshrl.u32 %v3042, 7
        %v3044 = vsub.s32 0, %v3043
        %v3045 = vrot.slane %v3026, %v3044
        %v3046 = vlaneseq
        %v3047 = vshrl.u32 %v3046, 7
        %v3048 = vsub.s32 0, %v3047
        %v3049 = vrot.slane %v3034, %v3048
        %v3050 = vlaneseq
        %v3051 = vshrl.u32 %v3050, 7
        %v3052 = vsub.s32 0, %v3051
        %v3053 = vrot.slane %v3036, %v3052
        %v3054 = vlaneseq
        %v3055 = vshrl.u32 %v3054, 7
        %v3056 = vsub.s32 0, %v3055
        %v3057 = vrot.slane %v3019, %v3056
        %v3058 = vlaneseq
        %v3059 = vshrl.u32 %v3058, 7
        %v3060 = vsub.s32 0, %v3059
        %v3061 = vrot.slane %v3033, %v3060
        %v3062 = vlaneseq
        %v3063 = vshrl.u32 %v3062, 7
        %v3064 = vsub.s32 0, %v3063
        %v3065 = vrot.slane %v3035, %v3064
        %v3066 = vlaneseq
        %v3067 = vshrl.u32 %v3066, 7
        %v3068 = vsub.s32 0, %v3067
        %v3069 = vrot.slane %v3037, %v3068
        %3078 = vst.msk [vmem:[%s554 + $0x10] sm:$0x3] %vm1917, %v3041
        %3079 = vst.msk [vmem:[%s554 + $0x30] sm:$0x3] %vm1917, %v3045
        %3080 = vst.msk [vmem:[%s554 + $0x50] sm:$0x3] %vm1917, %v3049
        %3081 = vst.msk [vmem:[%s554 + $0x70] sm:$0x3] %vm1917, %v3053
        %3082 = vst.msk [vmem:[%s554 + $0x90] sm:$0x3] %vm1917, %v3057
        %3083 = vst.msk [vmem:[%s554 + $0xb0] sm:$0x3] %vm1917, %v3061
        %3084 = vst.msk [vmem:[%s554 + $0xd0] sm:$0x3] %vm1917, %v3065
        %3085 = vst.msk [vmem:[%s554 + $0xf0] sm:$0x3] %vm1917, %v3069
        %v3087 = vsel %vm1658, %v2701, %v2690
        %3089 = vrot.lane.b32.xlu0 %v3087, 122
        %v3090 = vpop.permute.xlu0 %3089
        %3092 = vmatprep.subr.mxu0 0.0
        %3093 = vmatpush1.msra.mxu0 %v2705
        %3094 = vmatprep.subr.mxu0 0.0
        %3095 = vmatpush1.msra.mxu0 %v2707
        %3096 = vmatprep.subr.mxu0 0.0
        %3097 = vmatpush1.msra.mxu0 %v2709
        %3098 = vmatprep.subr.mxu0 0.0
        %3099 = vmatpush1.msra.mxu0 %v2711
        %3100 = vmatprep.subr.mxu0 0.0
        %3101 = vmatpush1.msra.mxu0 %v3090
        %3102 = vmatprep.subr.mxu0 0.0
        %3103 = vmatpush1.msra.mxu0 %v2906
        %3104 = vmatprep.subr.mxu0 0.0
        %3105 = vmatpush1.msra.mxu0 %v2908
        %3106 = vmatprep.subr.mxu0 0.0
        %3107 = vmatpush1.msra.mxu0 %v2910
        %3108 = vmatprep.subr.mxu0 0.0
        %3109 = vmatpush1.msra.mxu0 %v2912
        %3110 = vmatprep.subr.mxu0 0.0
        %3111 = vmatpush1.msra.mxu0 %v2705
        %3112 = vmatprep.subr.mxu0 0.0
        %3113 = vmatpush1.msra.mxu0 %v2707
        %3114 = vmatprep.subr.mxu0 0.0
        %3115 = vmatpush1.msra.mxu0 %v2709
        %3116 = vmatprep.subr.mxu0 0.0
        %3117 = vmatpush1.msra.mxu0 %v2711
        %3118 = vmatprep.subr.mxu0 0.0
        %3119 = vmatpush1.msra.mxu0 %v2718
        %3120 = vmatprep.subr.mxu0 0.0
        %3121 = vmatpush1.msra.mxu0 0.0
        %3122 = vmatprep.subr.mxu0 0.0
        %3123 = vmatpush1.msra.mxu0 0.0
        %3124 = vmatprep.subr.mxu0 0.0
        %3125 = vmatpush1.msra.mxu0 0.0
        %3126 = vmatprep.subr.mxu0 0.0
        %3127 = vmatpush1.msra.mxu0 0.0
        %3128 = vmatprep.subr.mxu0 0.0
        %3129 = vmatpush1.msra.mxu0 0.0
        %3130 = vmatprep.subr.mxu0 0.0
        %3131 = vmatpush1.msra.mxu0 0.0
        %3132 = vmatprep.subr.mxu0 0.0
        %3133 = vmatpush1.msra.mxu0 0.0
        %3134 = vmatprep.subr.mxu0 0.0
        %3135 = vmatpush1.msra.mxu0 0.0
        %3136 = vmatprep.subr.mxu0 0.0
        %3137 = vmatpush1.msra.mxu0 0.0
        %3138 = vmatprep.subr.mxu0 0.0
        %3139 = vmatpush1.msra.mxu0 0.0
        %3140 = vmatprep.subr.mxu0 0.0
        %3141 = vmatpush1.msra.mxu0 0.0
        %3142 = vmatprep.subr.mxu0 0.0
        %3143 = vmatpush1.msra.mxu0 0.0
        %3144 = vmatprep.subr.mxu0 0.0
        %3145 = vmatpush1.msra.mxu0 0.0
        %3146 = vmatprep.subr.mxu0 0.0
        %3147 = vmatpush1.msra.mxu0 0.0
        %3148 = vmatprep.subr.mxu0 0.0
        %3149 = vmatpush1.msra.mxu0 0.0
        %3150 = vmatprep.subr.mxu0 0.0
        %3151 = vmatpush1.msra.mxu0 0.0
        %3152 = vmatprep.subr.mxu0 0.0
        %3153 = vmatpush1.msra.mxu0 0.0
        %3154 = vmatprep.subr.mxu0 0.0
        %3155 = vmatpush1.msra.mxu0 0.0
        %3156 = vmatprep.mubr.f32.mxu0 0.0
        %3157 = vmatmul.mubr.f32.gmra.mrb[0].mxu0 %v1753
        %v3158 = vpop.f32.mrb[0].mxu0
        %v3159 = vadd.f32 %v1704, %v3158
        %v3160 = vpop.f32.mrb[0].mxu0
        %3161 = vdwg.mxu0
        %v3163 = vcombine.high %v3159, %v3159
        %v3165 = vunpack.c.l.s4 1966171168
        %v3166 = vunpack.c.0.s8 %v3165
        %v3167 = vlaneseq
        %v3168 = vshrl.u32 %v3167, 7
        %v3169 = vsub.s32 %v3166, %v3168
        %v3170 = vrot.slane %v3159, %v3169
        %v3172 = vunpack.c.l.s4 1966171168
        %v3173 = vunpack.c.0.s8 %v3172
        %v3174 = vlaneseq
        %v3175 = vshrl.u32 %v3174, 7
        %v3176 = vsub.s32 %v3173, %v3175
        %v3177 = vrot.slane %v3163, %v3176
        %v3178 = vcombine.high %v3170, %v3170
        %v3179 = vcombine.high %v3177, %v3177
        %v3181 = vunpack.c.l.s4 1966171168
        %v3182 = vunpack.c.0.s8 %v3181
        %v3183 = vlaneseq
        %v3184 = vshrl.u32 %v3183, 7
        %v3185 = vsub.s32 %v3182, %v3184
        %v3186 = vrot.slane %v3170, %v3185
        %v3188 = vunpack.c.l.s4 1966171168
        %v3189 = vunpack.c.0.s8 %v3188
        %v3190 = vlaneseq
        %v3191 = vshrl.u32 %v3190, 7
        %v3192 = vsub.s32 %v3189, %v3191
        %v3193 = vrot.slane %v3177, %v3192
        %v3195 = vunpack.c.l.s4 1966171168
        %v3196 = vunpack.c.0.s8 %v3195
        %v3197 = vlaneseq
        %v3198 = vshrl.u32 %v3197, 7
        %v3199 = vsub.s32 %v3196, %v3198
        %v3200 = vrot.slane %v3178, %v3199
        %v3202 = vunpack.c.l.s4 1966171168
        %v3203 = vunpack.c.0.s8 %v3202
        %v3204 = vlaneseq
        %v3205 = vshrl.u32 %v3204, 7
        %v3206 = vsub.s32 %v3203, %v3205
        %v3207 = vrot.slane %v3179, %v3206
        %v3208 = vcombine.high %v3186, %v3186
        %v3209 = vcombine.high %v3193, %v3193
        %v3210 = vcombine.high %v3200, %v3200
        %v3211 = vcombine.high %v3207, %v3207
        %v3212 = vlaneseq
        %v3213 = vshrl.u32 %v3212, 7
        %v3214 = vsub.s32 0, %v3213
        %v3215 = vrot.slane %v3186, %v3214
        %v3216 = vlaneseq
        %v3217 = vshrl.u32 %v3216, 7
        %v3218 = vsub.s32 0, %v3217
        %v3219 = vrot.slane %v3200, %v3218
        %v3220 = vlaneseq
        %v3221 = vshrl.u32 %v3220, 7
        %v3222 = vsub.s32 0, %v3221
        %v3223 = vrot.slane %v3208, %v3222
        %v3224 = vlaneseq
        %v3225 = vshrl.u32 %v3224, 7
        %v3226 = vsub.s32 0, %v3225
        %v3227 = vrot.slane %v3210, %v3226
        %v3228 = vlaneseq
        %v3229 = vshrl.u32 %v3228, 7
        %v3230 = vsub.s32 0, %v3229
        %v3231 = vrot.slane %v3193, %v3230
        %v3232 = vlaneseq
        %v3233 = vshrl.u32 %v3232, 7
        %v3234 = vsub.s32 0, %v3233
        %v3235 = vrot.slane %v3207, %v3234
        %v3236 = vlaneseq
        %v3237 = vshrl.u32 %v3236, 7
        %v3238 = vsub.s32 0, %v3237
        %v3239 = vrot.slane %v3209, %v3238
        %v3240 = vlaneseq
        %v3241 = vshrl.u32 %v3240, 7
        %v3242 = vsub.s32 0, %v3241
        %v3243 = vrot.slane %v3211, %v3242
        %3252 = vst.msk [vmem:[%s554 + $0x12] sm:$0x3] %vm1917, %v3215
        %3253 = vst.msk [vmem:[%s554 + $0x32] sm:$0x3] %vm1917, %v3219
        %3254 = vst.msk [vmem:[%s554 + $0x52] sm:$0x3] %vm1917, %v3223
        %3255 = vst.msk [vmem:[%s554 + $0x72] sm:$0x3] %vm1917, %v3227
        %3256 = vst.msk [vmem:[%s554 + $0x92] sm:$0x3] %vm1917, %v3231
        %3257 = vst.msk [vmem:[%s554 + $0xb2] sm:$0x3] %vm1917, %v3235
        %3258 = vst.msk [vmem:[%s554 + $0xd2] sm:$0x3] %vm1917, %v3239
        %3259 = vst.msk [vmem:[%s554 + $0xf2] sm:$0x3] %vm1917, %v3243
        %3260 = vst.msk [vmem:[%s554 + $0x14] sm:$0x3] %vm1917, %v3215
        %3261 = vst.msk [vmem:[%s554 + $0x34] sm:$0x3] %vm1917, %v3219
        %3262 = vst.msk [vmem:[%s554 + $0x54] sm:$0x3] %vm1917, %v3223
        %3263 = vst.msk [vmem:[%s554 + $0x74] sm:$0x3] %vm1917, %v3227
        %3264 = vst.msk [vmem:[%s554 + $0x94] sm:$0x3] %vm1917, %v3231
        %3265 = vst.msk [vmem:[%s554 + $0xb4] sm:$0x3] %vm1917, %v3235
        %3266 = vst.msk [vmem:[%s554 + $0xd4] sm:$0x3] %vm1917, %v3239
        %3267 = vst.msk [vmem:[%s554 + $0xf4] sm:$0x3] %vm1917, %v3243
        %v3270 = vrot.slane %v1480, 4
        %v3271 = vrot.slane %v1485, 4
        %v3272 = vsel %vm1658, %v3270, %v3271
        %3273 = vrot.lane.b32.xlu0 %v3270, 126
        %v3274 = vpop.permute.xlu0 %3273
        %3275 = vrot.lane.b32.xlu0 %v3272, 126
        %v3276 = vpop.permute.xlu0 %3275
        %3278 = vrot.lane.b32.xlu0 %v1480, 124
        %v3279 = vpop.permute.xlu0 %3278
        %3280 = vrot.lane.b32.xlu0 %v1485, 124
        %v3281 = vpop.permute.xlu0 %3280
        %v3282 = vsel %vm1658, %v1485, %v3274
        %3284 = vrot.lane.b32.xlu0 %v1480, 122
        %v3285 = vpop.permute.xlu0 %3284
        %3286 = vrot.lane.b32.xlu0 %v3282, 122
        %v3287 = vpop.permute.xlu0 %3286
        %3288 = vrot.lane.b32.xlu0 %v3276, 122
        %v3289 = vpop.permute.xlu0 %3288
        %3290 = vrot.lane.b32.xlu0 %v3279, 122
        %v3291 = vpop.permute.xlu0 %3290
        %3292 = vrot.lane.b32.xlu0 %v3281, 122
        %v3293 = vpop.permute.xlu0 %3292
        %v3298 = vsel %vm1658, %v3293, 0
        %3300 = vmatprep.subr.mxu0 0.0
        %3301 = vmatpush1.msra.mxu0 %v2705
        %3302 = vmatprep.subr.mxu0 0.0
        %3303 = vmatpush1.msra.mxu0 %v2707
        %3304 = vmatprep.subr.mxu0 0.0
        %3305 = vmatpush1.msra.mxu0 %v2709
        %3306 = vmatprep.subr.mxu0 0.0
        %3307 = vmatpush1.msra.mxu0 %v2711
        %3308 = vmatprep.subr.mxu0 0.0
        %3309 = vmatpush1.msra.mxu0 %v3090
        %3310 = vmatprep.subr.mxu0 0.0
        %3311 = vmatpush1.msra.mxu0 %v2906
        %3312 = vmatprep.subr.mxu0 0.0
        %3313 = vmatpush1.msra.mxu0 %v2908
        %3314 = vmatprep.subr.mxu0 0.0
        %3315 = vmatpush1.msra.mxu0 %v2910
        %3316 = vmatprep.subr.mxu0 0.0
        %3317 = vmatpush1.msra.mxu0 %v2912
        %3318 = vmatprep.subr.mxu0 0.0
        %3319 = vmatpush1.msra.mxu0 %v3285
        %3320 = vmatprep.subr.mxu0 0.0
        %3321 = vmatpush1.msra.mxu0 %v3287
        %3322 = vmatprep.subr.mxu0 0.0
        %3323 = vmatpush1.msra.mxu0 %v3289
        %3324 = vmatprep.subr.mxu0 0.0
        %3325 = vmatpush1.msra.mxu0 %v3291
        %3326 = vmatprep.subr.mxu0 0.0
        %3327 = vmatpush1.msra.mxu0 %v3298
        %3328 = vmatprep.subr.mxu0 0.0
        %3329 = vmatpush1.msra.mxu0 0.0
        %3330 = vmatprep.subr.mxu0 0.0
        %3331 = vmatpush1.msra.mxu0 0.0
        %3332 = vmatprep.subr.mxu0 0.0
        %3333 = vmatpush1.msra.mxu0 0.0
        %3334 = vmatprep.subr.mxu0 0.0
        %3335 = vmatpush1.msra.mxu0 0.0
        %3336 = vmatprep.subr.mxu0 0.0
        %3337 = vmatpush1.msra.mxu0 0.0
        %3338 = vmatprep.subr.mxu0 0.0
        %3339 = vmatpush1.msra.mxu0 0.0
        %3340 = vmatprep.subr.mxu0 0.0
        %3341 = vmatpush1.msra.mxu0 0.0
        %3342 = vmatprep.subr.mxu0 0.0
        %3343 = vmatpush1.msra.mxu0 0.0
        %3344 = vmatprep.subr.mxu0 0.0
        %3345 = vmatpush1.msra.mxu0 0.0
        %3346 = vmatprep.subr.mxu0 0.0
        %3347 = vmatpush1.msra.mxu0 0.0
        %3348 = vmatprep.subr.mxu0 0.0
        %3349 = vmatpush1.msra.mxu0 0.0
        %3350 = vmatprep.subr.mxu0 0.0
        %3351 = vmatpush1.msra.mxu0 0.0
        %3352 = vmatprep.subr.mxu0 0.0
        %3353 = vmatpush1.msra.mxu0 0.0
        %3354 = vmatprep.subr.mxu0 0.0
        %3355 = vmatpush1.msra.mxu0 0.0
        %3356 = vmatprep.subr.mxu0 0.0
        %3357 = vmatpush1.msra.mxu0 0.0
        %3358 = vmatprep.subr.mxu0 0.0
        %3359 = vmatpush1.msra.mxu0 0.0
        %3360 = vmatprep.subr.mxu0 0.0
        %3361 = vmatpush1.msra.mxu0 0.0
        %3362 = vmatprep.subr.mxu0 0.0
        %3363 = vmatpush1.msra.mxu0 0.0
        %3364 = vmatprep.mubr.f32.mxu0 0.0
        %3365 = vmatmul.mubr.f32.gmra.mrb[0].mxu0 %v1753
        %v3366 = vpop.f32.mrb[0].mxu0
        %v3367 = vadd.f32 %v1704, %v3366
        %v3368 = vpop.f32.mrb[0].mxu0
        %3369 = vdwg.mxu0
        %v3371 = vcombine.high %v3367, %v3367
        %v3373 = vunpack.c.l.s4 1966171168
        %v3374 = vunpack.c.0.s8 %v3373
        %v3375 = vlaneseq
        %v3376 = vshrl.u32 %v3375, 7
        %v3377 = vsub.s32 %v3374, %v3376
        %v3378 = vrot.slane %v3367, %v3377
        %v3380 = vunpack.c.l.s4 1966171168
        %v3381 = vunpack.c.0.s8 %v3380
        %v3382 = vlaneseq
        %v3383 = vshrl.u32 %v3382, 7
        %v3384 = vsub.s32 %v3381, %v3383
        %v3385 = vrot.slane %v3371, %v3384
        %v3386 = vcombine.high %v3378, %v3378
        %v3387 = vcombine.high %v3385, %v3385
        %v3389 = vunpack.c.l.s4 1966171168
        %v3390 = vunpack.c.0.s8 %v3389
        %v3391 = vlaneseq
        %v3392 = vshrl.u32 %v3391, 7
        %v3393 = vsub.s32 %v3390, %v3392
        %v3394 = vrot.slane %v3378, %v3393
        %v3396 = vunpack.c.l.s4 1966171168
        %v3397 = vunpack.c.0.s8 %v3396
        %v3398 = vlaneseq
        %v3399 = vshrl.u32 %v3398, 7
        %v3400 = vsub.s32 %v3397, %v3399
        %v3401 = vrot.slane %v3385, %v3400
        %v3403 = vunpack.c.l.s4 1966171168
        %v3404 = vunpack.c.0.s8 %v3403
        %v3405 = vlaneseq
        %v3406 = vshrl.u32 %v3405, 7
        %v3407 = vsub.s32 %v3404, %v3406
        %v3408 = vrot.slane %v3386, %v3407
        %v3410 = vunpack.c.l.s4 1966171168
        %v3411 = vunpack.c.0.s8 %v3410
        %v3412 = vlaneseq
        %v3413 = vshrl.u32 %v3412, 7
        %v3414 = vsub.s32 %v3411, %v3413
        %v3415 = vrot.slane %v3387, %v3414
        %v3416 = vcombine.high %v3394, %v3394
        %v3417 = vcombine.high %v3401, %v3401
        %v3418 = vcombine.high %v3408, %v3408
        %v3419 = vcombine.high %v3415, %v3415
        %v3420 = vlaneseq
        %v3421 = vshrl.u32 %v3420, 7
        %v3422 = vsub.s32 0, %v3421
        %v3423 = vrot.slane %v3394, %v3422
        %v3424 = vlaneseq
        %v3425 = vshrl.u32 %v3424, 7
        %v3426 = vsub.s32 0, %v3425
        %v3427 = vrot.slane %v3408, %v3426
        %v3428 = vlaneseq
        %v3429 = vshrl.u32 %v3428, 7
        %v3430 = vsub.s32 0, %v3429
        %v3431 = vrot.slane %v3416, %v3430
        %v3432 = vlaneseq
        %v3433 = vshrl.u32 %v3432, 7
        %v3434 = vsub.s32 0, %v3433
        %v3435 = vrot.slane %v3418, %v3434
        %v3436 = vlaneseq
        %v3437 = vshrl.u32 %v3436, 7
        %v3438 = vsub.s32 0, %v3437
        %v3439 = vrot.slane %v3401, %v3438
        %v3440 = vlaneseq
        %v3441 = vshrl.u32 %v3440, 7
        %v3442 = vsub.s32 0, %v3441
        %v3443 = vrot.slane %v3415, %v3442
        %v3444 = vlaneseq
        %v3445 = vshrl.u32 %v3444, 7
        %v3446 = vsub.s32 0, %v3445
        %v3447 = vrot.slane %v3417, %v3446
        %v3448 = vlaneseq
        %v3449 = vshrl.u32 %v3448, 7
        %v3450 = vsub.s32 0, %v3449
        %v3451 = vrot.slane %v3419, %v3450
        %3460 = vst.msk [vmem:[%s554 + $0x16] sm:$0x3] %vm1917, %v3423
        %3461 = vst.msk [vmem:[%s554 + $0x36] sm:$0x3] %vm1917, %v3427
        %3462 = vst.msk [vmem:[%s554 + $0x56] sm:$0x3] %vm1917, %v3431
        %3463 = vst.msk [vmem:[%s554 + $0x76] sm:$0x3] %vm1917, %v3435
        %3464 = vst.msk [vmem:[%s554 + $0x96] sm:$0x3] %vm1917, %v3439
        %3465 = vst.msk [vmem:[%s554 + $0xb6] sm:$0x3] %vm1917, %v3443
        %3466 = vst.msk [vmem:[%s554 + $0xd6] sm:$0x3] %vm1917, %v3447
        %3467 = vst.msk [vmem:[%s554 + $0xf6] sm:$0x3] %vm1917, %v3451
        %3469 = vrot.lane.b32.xlu0 %v1480, 126
        %v3470 = vpop.permute.xlu0 %3469
        %3471 = vrot.lane.b32.xlu0 %v1485, 126
        %v3472 = vpop.permute.xlu0 %3471
        %3474 = vrot.lane.b32.xlu0 %v3270, 124
        %v3475 = vpop.permute.xlu0 %3474
        %3476 = vrot.lane.b32.xlu0 %v3272, 124
        %v3477 = vpop.permute.xlu0 %3476
        %v3479 = vsel %vm1658, %v2701, %v3270
        %v3480 = vsel %vm1658, %v3472, %v3475
        %3483 = vrot.lane.b32.xlu0 %v3479, 122
        %v3484 = vpop.permute.xlu0 %3483
        %3485 = vrot.lane.b32.xlu0 %v3272, 122
        %v3486 = vpop.permute.xlu0 %3485
        %3487 = vrot.lane.b32.xlu0 %v3470, 122
        %v3488 = vpop.permute.xlu0 %3487
        %3489 = vrot.lane.b32.xlu0 %v3480, 122
        %v3490 = vpop.permute.xlu0 %3489
        %3491 = vrot.lane.b32.xlu0 %v3477, 122
        %v3492 = vpop.permute.xlu0 %3491
        %3498 = vmatprep.subr.mxu0 0.0
        %3499 = vmatpush1.msra.mxu0 %v2705
        %3500 = vmatprep.subr.mxu0 0.0
        %3501 = vmatpush1.msra.mxu0 %v2707
        %3502 = vmatprep.subr.mxu0 0.0
        %3503 = vmatpush1.msra.mxu0 %v2709
        %3504 = vmatprep.subr.mxu0 0.0
        %3505 = vmatpush1.msra.mxu0 %v2711
        %3506 = vmatprep.subr.mxu0 0.0
        %3507 = vmatpush1.msra.mxu0 %v3484
        %3508 = vmatprep.subr.mxu0 0.0
        %3509 = vmatpush1.msra.mxu0 %v3486
        %3510 = vmatprep.subr.mxu0 0.0
        %3511 = vmatpush1.msra.mxu0 %v3488
        %3512 = vmatprep.subr.mxu0 0.0
        %3513 = vmatpush1.msra.mxu0 %v3490
        %3514 = vmatprep.subr.mxu0 0.0
        %3515 = vmatpush1.msra.mxu0 %v3492
        %3516 = vmatprep.subr.mxu0 0.0
        %3517 = vmatpush1.msra.mxu0 %v3285
        %3518 = vmatprep.subr.mxu0 0.0
        %3519 = vmatpush1.msra.mxu0 %v3287
        %3520 = vmatprep.subr.mxu0 0.0
        %3521 = vmatpush1.msra.mxu0 %v3289
        %3522 = vmatprep.subr.mxu0 0.0
        %3523 = vmatpush1.msra.mxu0 %v3291
        %3524 = vmatprep.subr.mxu0 0.0
        %3525 = vmatpush1.msra.mxu0 %v3298
        %3526 = vmatprep.subr.mxu0 0.0
        %3527 = vmatpush1.msra.mxu0 0.0
        %3528 = vmatprep.subr.mxu0 0.0
        %3529 = vmatpush1.msra.mxu0 0.0
        %3530 = vmatprep.subr.mxu0 0.0
        %3531 = vmatpush1.msra.mxu0 0.0
        %3532 = vmatprep.subr.mxu0 0.0
        %3533 = vmatpush1.msra.mxu0 0.0
        %3534 = vmatprep.subr.mxu0 0.0
        %3535 = vmatpush1.msra.mxu0 0.0
        %3536 = vmatprep.subr.mxu0 0.0
        %3537 = vmatpush1.msra.mxu0 0.0
        %3538 = vmatprep.subr.mxu0 0.0
        %3539 = vmatpush1.msra.mxu0 0.0
        %3540 = vmatprep.subr.mxu0 0.0
        %3541 = vmatpush1.msra.mxu0 0.0
        %3542 = vmatprep.subr.mxu0 0.0
        %3543 = vmatpush1.msra.mxu0 0.0
        %3544 = vmatprep.subr.mxu0 0.0
        %3545 = vmatpush1.msra.mxu0 0.0
        %3546 = vmatprep.subr.mxu0 0.0
        %3547 = vmatpush1.msra.mxu0 0.0
        %3548 = vmatprep.subr.mxu0 0.0
        %3549 = vmatpush1.msra.mxu0 0.0
        %3550 = vmatprep.subr.mxu0 0.0
        %3551 = vmatpush1.msra.mxu0 0.0
        %3552 = vmatprep.subr.mxu0 0.0
        %3553 = vmatpush1.msra.mxu0 0.0
        %3554 = vmatprep.subr.mxu0 0.0
        %3555 = vmatpush1.msra.mxu0 0.0
        %3556 = vmatprep.subr.mxu0 0.0
        %3557 = vmatpush1.msra.mxu0 0.0
        %3558 = vmatprep.subr.mxu0 0.0
        %3559 = vmatpush1.msra.mxu0 0.0
        %3560 = vmatprep.subr.mxu0 0.0
        %3561 = vmatpush1.msra.mxu0 0.0
        %3562 = vmatprep.mubr.f32.mxu0 0.0
        %3563 = vmatmul.mubr.f32.gmra.mrb[0].mxu0 %v1753
        %v3564 = vpop.f32.mrb[0].mxu0
        %v3565 = vadd.f32 %v1704, %v3564
        %v3566 = vpop.f32.mrb[0].mxu0
        %3567 = vdwg.mxu0
        %v3569 = vcombine.high %v3565, %v3565
        %v3571 = vunpack.c.l.s4 1966171168
        %v3572 = vunpack.c.0.s8 %v3571
        %v3573 = vlaneseq
        %v3574 = vshrl.u32 %v3573, 7
        %v3575 = vsub.s32 %v3572, %v3574
        %v3576 = vrot.slane %v3565, %v3575
        %v3578 = vunpack.c.l.s4 1966171168
        %v3579 = vunpack.c.0.s8 %v3578
        %v3580 = vlaneseq
        %v3581 = vshrl.u32 %v3580, 7
        %v3582 = vsub.s32 %v3579, %v3581
        %v3583 = vrot.slane %v3569, %v3582
        %v3584 = vcombine.high %v3576, %v3576
        %v3585 = vcombine.high %v3583, %v3583
        %v3587 = vunpack.c.l.s4 1966171168
        %v3588 = vunpack.c.0.s8 %v3587
        %v3589 = vlaneseq
        %v3590 = vshrl.u32 %v3589, 7
        %v3591 = vsub.s32 %v3588, %v3590
        %v3592 = vrot.slane %v3576, %v3591
        %v3594 = vunpack.c.l.s4 1966171168
        %v3595 = vunpack.c.0.s8 %v3594
        %v3596 = vlaneseq
        %v3597 = vshrl.u32 %v3596, 7
        %v3598 = vsub.s32 %v3595, %v3597
        %v3599 = vrot.slane %v3583, %v3598
        %v3601 = vunpack.c.l.s4 1966171168
        %v3602 = vunpack.c.0.s8 %v3601
        %v3603 = vlaneseq
        %v3604 = vshrl.u32 %v3603, 7
        %v3605 = vsub.s32 %v3602, %v3604
        %v3606 = vrot.slane %v3584, %v3605
        %v3608 = vunpack.c.l.s4 1966171168
        %v3609 = vunpack.c.0.s8 %v3608
        %v3610 = vlaneseq
        %v3611 = vshrl.u32 %v3610, 7
        %v3612 = vsub.s32 %v3609, %v3611
        %v3613 = vrot.slane %v3585, %v3612
        %v3614 = vcombine.high %v3592, %v3592
        %v3615 = vcombine.high %v3599, %v3599
        %v3616 = vcombine.high %v3606, %v3606
        %v3617 = vcombine.high %v3613, %v3613
        %v3618 = vlaneseq
        %v3619 = vshrl.u32 %v3618, 7
        %v3620 = vsub.s32 0, %v3619
        %v3621 = vrot.slane %v3592, %v3620
        %v3622 = vlaneseq
        %v3623 = vshrl.u32 %v3622, 7
        %v3624 = vsub.s32 0, %v3623
        %v3625 = vrot.slane %v3606, %v3624
        %v3626 = vlaneseq
        %v3627 = vshrl.u32 %v3626, 7
        %v3628 = vsub.s32 0, %v3627
        %v3629 = vrot.slane %v3614, %v3628
        %v3630 = vlaneseq
        %v3631 = vshrl.u32 %v3630, 7
        %v3632 = vsub.s32 0, %v3631
        %v3633 = vrot.slane %v3616, %v3632
        %v3634 = vlaneseq
        %v3635 = vshrl.u32 %v3634, 7
        %v3636 = vsub.s32 0, %v3635
        %v3637 = vrot.slane %v3599, %v3636
        %v3638 = vlaneseq
        %v3639 = vshrl.u32 %v3638, 7
        %v3640 = vsub.s32 0, %v3639
        %v3641 = vrot.slane %v3613, %v3640
        %v3642 = vlaneseq
        %v3643 = vshrl.u32 %v3642, 7
        %v3644 = vsub.s32 0, %v3643
        %v3645 = vrot.slane %v3615, %v3644
        %v3646 = vlaneseq
        %v3647 = vshrl.u32 %v3646, 7
        %v3648 = vsub.s32 0, %v3647
        %v3649 = vrot.slane %v3617, %v3648
        %3658 = vst.msk [vmem:[%s554 + $0x18] sm:$0x3] %vm1917, %v3621
        %3659 = vst.msk [vmem:[%s554 + $0x38] sm:$0x3] %vm1917, %v3625
        %3660 = vst.msk [vmem:[%s554 + $0x58] sm:$0x3] %vm1917, %v3629
        %3661 = vst.msk [vmem:[%s554 + $0x78] sm:$0x3] %vm1917, %v3633
        %3662 = vst.msk [vmem:[%s554 + $0x98] sm:$0x3] %vm1917, %v3637
        %3663 = vst.msk [vmem:[%s554 + $0xb8] sm:$0x3] %vm1917, %v3641
        %3664 = vst.msk [vmem:[%s554 + $0xd8] sm:$0x3] %vm1917, %v3645
        %3665 = vst.msk [vmem:[%s554 + $0xf8] sm:$0x3] %vm1917, %v3649
        %v3667 = vsel %vm1658, %v3281, %v3270
        %3669 = vrot.lane.b32.xlu0 %v3667, 122
        %v3670 = vpop.permute.xlu0 %3669
        %3672 = vmatprep.subr.mxu0 0.0
        %3673 = vmatpush1.msra.mxu0 %v3285
        %3674 = vmatprep.subr.mxu0 0.0
        %3675 = vmatpush1.msra.mxu0 %v3287
        %3676 = vmatprep.subr.mxu0 0.0
        %3677 = vmatpush1.msra.mxu0 %v3289
        %3678 = vmatprep.subr.mxu0 0.0
        %3679 = vmatpush1.msra.mxu0 %v3291
        %3680 = vmatprep.subr.mxu0 0.0
        %3681 = vmatpush1.msra.mxu0 %v3670
        %3682 = vmatprep.subr.mxu0 0.0
        %3683 = vmatpush1.msra.mxu0 %v3486
        %3684 = vmatprep.subr.mxu0 0.0
        %3685 = vmatpush1.msra.mxu0 %v3488
        %3686 = vmatprep.subr.mxu0 0.0
        %3687 = vmatpush1.msra.mxu0 %v3490
        %3688 = vmatprep.subr.mxu0 0.0
        %3689 = vmatpush1.msra.mxu0 %v3492
        %3690 = vmatprep.subr.mxu0 0.0
        %3691 = vmatpush1.msra.mxu0 %v3285
        %3692 = vmatprep.subr.mxu0 0.0
        %3693 = vmatpush1.msra.mxu0 %v3287
        %3694 = vmatprep.subr.mxu0 0.0
        %3695 = vmatpush1.msra.mxu0 %v3289
        %3696 = vmatprep.subr.mxu0 0.0
        %3697 = vmatpush1.msra.mxu0 %v3291
        %3698 = vmatprep.subr.mxu0 0.0
        %3699 = vmatpush1.msra.mxu0 %v3298
        %3700 = vmatprep.subr.mxu0 0.0
        %3701 = vmatpush1.msra.mxu0 0.0
        %3702 = vmatprep.subr.mxu0 0.0
        %3703 = vmatpush1.msra.mxu0 0.0
        %3704 = vmatprep.subr.mxu0 0.0
        %3705 = vmatpush1.msra.mxu0 0.0
        %3706 = vmatprep.subr.mxu0 0.0
        %3707 = vmatpush1.msra.mxu0 0.0
        %3708 = vmatprep.subr.mxu0 0.0
        %3709 = vmatpush1.msra.mxu0 0.0
        %3710 = vmatprep.subr.mxu0 0.0
        %3711 = vmatpush1.msra.mxu0 0.0
        %3712 = vmatprep.subr.mxu0 0.0
        %3713 = vmatpush1.msra.mxu0 0.0
        %3714 = vmatprep.subr.mxu0 0.0
        %3715 = vmatpush1.msra.mxu0 0.0
        %3716 = vmatprep.subr.mxu0 0.0
        %3717 = vmatpush1.msra.mxu0 0.0
        %3718 = vmatprep.subr.mxu0 0.0
        %3719 = vmatpush1.msra.mxu0 0.0
        %3720 = vmatprep.subr.mxu0 0.0
        %3721 = vmatpush1.msra.mxu0 0.0
        %3722 = vmatprep.subr.mxu0 0.0
        %3723 = vmatpush1.msra.mxu0 0.0
        %3724 = vmatprep.subr.mxu0 0.0
        %3725 = vmatpush1.msra.mxu0 0.0
        %3726 = vmatprep.subr.mxu0 0.0
        %3727 = vmatpush1.msra.mxu0 0.0
        %3728 = vmatprep.subr.mxu0 0.0
        %3729 = vmatpush1.msra.mxu0 0.0
        %3730 = vmatprep.subr.mxu0 0.0
        %3731 = vmatpush1.msra.mxu0 0.0
        %3732 = vmatprep.subr.mxu0 0.0
        %3733 = vmatpush1.msra.mxu0 0.0
        %3734 = vmatprep.subr.mxu0 0.0
        %3735 = vmatpush1.msra.mxu0 0.0
        %3736 = vmatprep.mubr.f32.mxu0 0.0
        %3737 = vmatmul.mubr.f32.gmra.mrb[0].mxu0 %v1753
        %v3738 = vpop.f32.mrb[0].mxu0
        %v3739 = vadd.f32 %v1704, %v3738
        %v3740 = vpop.f32.mrb[0].mxu0
        %3741 = vdwg.mxu0
        %v3743 = vcombine.high %v3739, %v3739
        %v3745 = vunpack.c.l.s4 1966171168
        %v3746 = vunpack.c.0.s8 %v3745
        %v3747 = vlaneseq
        %v3748 = vshrl.u32 %v3747, 7
        %v3749 = vsub.s32 %v3746, %v3748
        %v3750 = vrot.slane %v3739, %v3749
        %v3752 = vunpack.c.l.s4 1966171168
        %v3753 = vunpack.c.0.s8 %v3752
        %v3754 = vlaneseq
        %v3755 = vshrl.u32 %v3754, 7
        %v3756 = vsub.s32 %v3753, %v3755
        %v3757 = vrot.slane %v3743, %v3756
        %v3758 = vcombine.high %v3750, %v3750
        %v3759 = vcombine.high %v3757, %v3757
        %v3761 = vunpack.c.l.s4 1966171168
        %v3762 = vunpack.c.0.s8 %v3761
        %v3763 = vlaneseq
        %v3764 = vshrl.u32 %v3763, 7
        %v3765 = vsub.s32 %v3762, %v3764
        %v3766 = vrot.slane %v3750, %v3765
        %v3768 = vunpack.c.l.s4 1966171168
        %v3769 = vunpack.c.0.s8 %v3768
        %v3770 = vlaneseq
        %v3771 = vshrl.u32 %v3770, 7
        %v3772 = vsub.s32 %v3769, %v3771
        %v3773 = vrot.slane %v3757, %v3772
        %v3775 = vunpack.c.l.s4 1966171168
        %v3776 = vunpack.c.0.s8 %v3775
        %v3777 = vlaneseq
        %v3778 = vshrl.u32 %v3777, 7
        %v3779 = vsub.s32 %v3776, %v3778
        %v3780 = vrot.slane %v3758, %v3779
        %v3782 = vunpack.c.l.s4 1966171168
        %v3783 = vunpack.c.0.s8 %v3782
        %v3784 = vlaneseq
        %v3785 = vshrl.u32 %v3784, 7
        %v3786 = vsub.s32 %v3783, %v3785
        %v3787 = vrot.slane %v3759, %v3786
        %v3788 = vcombine.high %v3766, %v3766
        %v3789 = vcombine.high %v3773, %v3773
        %v3790 = vcombine.high %v3780, %v3780
        %v3791 = vcombine.high %v3787, %v3787
        %v3792 = vlaneseq
        %v3793 = vshrl.u32 %v3792, 7
        %v3794 = vsub.s32 0, %v3793
        %v3795 = vrot.slane %v3766, %v3794
        %v3796 = vlaneseq
        %v3797 = vshrl.u32 %v3796, 7
        %v3798 = vsub.s32 0, %v3797
        %v3799 = vrot.slane %v3780, %v3798
        %v3800 = vlaneseq
        %v3801 = vshrl.u32 %v3800, 7
        %v3802 = vsub.s32 0, %v3801
        %v3803 = vrot.slane %v3788, %v3802
        %v3804 = vlaneseq
        %v3805 = vshrl.u32 %v3804, 7
        %v3806 = vsub.s32 0, %v3805
        %v3807 = vrot.slane %v3790, %v3806
        %v3808 = vlaneseq
        %v3809 = vshrl.u32 %v3808, 7
        %v3810 = vsub.s32 0, %v3809
        %v3811 = vrot.slane %v3773, %v3810
        %v3812 = vlaneseq
        %v3813 = vshrl.u32 %v3812, 7
        %v3814 = vsub.s32 0, %v3813
        %v3815 = vrot.slane %v3787, %v3814
        %v3816 = vlaneseq
        %v3817 = vshrl.u32 %v3816, 7
        %v3818 = vsub.s32 0, %v3817
        %v3819 = vrot.slane %v3789, %v3818
        %v3820 = vlaneseq
        %v3821 = vshrl.u32 %v3820, 7
        %v3822 = vsub.s32 0, %v3821
        %v3823 = vrot.slane %v3791, %v3822
        %3832 = vst.msk [vmem:[%s554 + $0x1a] sm:$0x3] %vm1917, %v3795
        %3833 = vst.msk [vmem:[%s554 + $0x3a] sm:$0x3] %vm1917, %v3799
        %3834 = vst.msk [vmem:[%s554 + $0x5a] sm:$0x3] %vm1917, %v3803
        %3835 = vst.msk [vmem:[%s554 + $0x7a] sm:$0x3] %vm1917, %v3807
        %3836 = vst.msk [vmem:[%s554 + $0x9a] sm:$0x3] %vm1917, %v3811
        %3837 = vst.msk [vmem:[%s554 + $0xba] sm:$0x3] %vm1917, %v3815
        %3838 = vst.msk [vmem:[%s554 + $0xda] sm:$0x3] %vm1917, %v3819
        %3839 = vst.msk [vmem:[%s554 + $0xfa] sm:$0x3] %vm1917, %v3823
        %3840 = vst.msk [vmem:[%s554 + $0x1c] sm:$0x3] %vm1917, %v3795
        %3841 = vst.msk [vmem:[%s554 + $0x3c] sm:$0x3] %vm1917, %v3799
        %3842 = vst.msk [vmem:[%s554 + $0x5c] sm:$0x3] %vm1917, %v3803
        %3843 = vst.msk [vmem:[%s554 + $0x7c] sm:$0x3] %vm1917, %v3807
        %3844 = vst.msk [vmem:[%s554 + $0x9c] sm:$0x3] %vm1917, %v3811
        %3845 = vst.msk [vmem:[%s554 + $0xbc] sm:$0x3] %vm1917, %v3815
        %3846 = vst.msk [vmem:[%s554 + $0xdc] sm:$0x3] %vm1917, %v3819
        %3847 = vst.msk [vmem:[%s554 + $0xfc] sm:$0x3] %vm1917, %v3823
        %v3850 = vrot.slane %v1648, 4
        %v3851 = vrot.slane %v1653, 4
        %v3852 = vsel %vm1658, %v3850, %v3851
        %3853 = vrot.lane.b32.xlu0 %v3850, 126
        %v3854 = vpop.permute.xlu0 %3853
        %3855 = vrot.lane.b32.xlu0 %v3852, 126
        %v3856 = vpop.permute.xlu0 %3855
        %3858 = vrot.lane.b32.xlu0 %v1648, 124
        %v3859 = vpop.permute.xlu0 %3858
        %3860 = vrot.lane.b32.xlu0 %v1653, 124
        %v3861 = vpop.permute.xlu0 %3860
        %v3862 = vsel %vm1658, %v1653, %v3854
        %3864 = vrot.lane.b32.xlu0 %v1648, 122
        %v3865 = vpop.permute.xlu0 %3864
        %3866 = vrot.lane.b32.xlu0 %v3862, 122
        %v3867 = vpop.permute.xlu0 %3866
        %3868 = vrot.lane.b32.xlu0 %v3856, 122
        %v3869 = vpop.permute.xlu0 %3868
        %3870 = vrot.lane.b32.xlu0 %v3859, 122
        %v3871 = vpop.permute.xlu0 %3870
        %3872 = vrot.lane.b32.xlu0 %v3861, 122
        %v3873 = vpop.permute.xlu0 %3872
        %v3878 = vsel %vm1658, %v3873, 0
        %3880 = vmatprep.subr.mxu0 0.0
        %3881 = vmatpush1.msra.mxu0 %v3285
        %3882 = vmatprep.subr.mxu0 0.0
        %3883 = vmatpush1.msra.mxu0 %v3287
        %3884 = vmatprep.subr.mxu0 0.0
        %3885 = vmatpush1.msra.mxu0 %v3289
        %3886 = vmatprep.subr.mxu0 0.0
        %3887 = vmatpush1.msra.mxu0 %v3291
        %3888 = vmatprep.subr.mxu0 0.0
        %3889 = vmatpush1.msra.mxu0 %v3670
        %3890 = vmatprep.subr.mxu0 0.0
        %3891 = vmatpush1.msra.mxu0 %v3486
        %3892 = vmatprep.subr.mxu0 0.0
        %3893 = vmatpush1.msra.mxu0 %v3488
        %3894 = vmatprep.subr.mxu0 0.0
        %3895 = vmatpush1.msra.mxu0 %v3490
        %3896 = vmatprep.subr.mxu0 0.0
        %3897 = vmatpush1.msra.mxu0 %v3492
        %3898 = vmatprep.subr.mxu0 0.0
        %3899 = vmatpush1.msra.mxu0 %v3865
        %3900 = vmatprep.subr.mxu0 0.0
        %3901 = vmatpush1.msra.mxu0 %v3867
        %3902 = vmatprep.subr.mxu0 0.0
        %3903 = vmatpush1.msra.mxu0 %v3869
        %3904 = vmatprep.subr.mxu0 0.0
        %3905 = vmatpush1.msra.mxu0 %v3871
        %3906 = vmatprep.subr.mxu0 0.0
        %3907 = vmatpush1.msra.mxu0 %v3878
        %3908 = vmatprep.subr.mxu0 0.0
        %3909 = vmatpush1.msra.mxu0 0.0
        %3910 = vmatprep.subr.mxu0 0.0
        %3911 = vmatpush1.msra.mxu0 0.0
        %3912 = vmatprep.subr.mxu0 0.0
        %3913 = vmatpush1.msra.mxu0 0.0
        %3914 = vmatprep.subr.mxu0 0.0
        %3915 = vmatpush1.msra.mxu0 0.0
        %3916 = vmatprep.subr.mxu0 0.0
        %3917 = vmatpush1.msra.mxu0 0.0
        %3918 = vmatprep.subr.mxu0 0.0
        %3919 = vmatpush1.msra.mxu0 0.0
        %3920 = vmatprep.subr.mxu0 0.0
        %3921 = vmatpush1.msra.mxu0 0.0
        %3922 = vmatprep.subr.mxu0 0.0
        %3923 = vmatpush1.msra.mxu0 0.0
        %3924 = vmatprep.subr.mxu0 0.0
        %3925 = vmatpush1.msra.mxu0 0.0
        %3926 = vmatprep.subr.mxu0 0.0
        %3927 = vmatpush1.msra.mxu0 0.0
        %3928 = vmatprep.subr.mxu0 0.0
        %3929 = vmatpush1.msra.mxu0 0.0
        %3930 = vmatprep.subr.mxu0 0.0
        %3931 = vmatpush1.msra.mxu0 0.0
        %3932 = vmatprep.subr.mxu0 0.0
        %3933 = vmatpush1.msra.mxu0 0.0
        %3934 = vmatprep.subr.mxu0 0.0
        %3935 = vmatpush1.msra.mxu0 0.0
        %3936 = vmatprep.subr.mxu0 0.0
        %3937 = vmatpush1.msra.mxu0 0.0
        %3938 = vmatprep.subr.mxu0 0.0
        %3939 = vmatpush1.msra.mxu0 0.0
        %3940 = vmatprep.subr.mxu0 0.0
        %3941 = vmatpush1.msra.mxu0 0.0
        %3942 = vmatprep.subr.mxu0 0.0
        %3943 = vmatpush1.msra.mxu0 0.0
        %3944 = vmatprep.mubr.f32.mxu0 0.0
        %3945 = vmatmul.mubr.f32.gmra.mrb[0].mxu0 %v1753
        %v3946 = vpop.f32.mrb[0].mxu0
        %v3947 = vadd.f32 %v1704, %v3946
        %v3948 = vpop.f32.mrb[0].mxu0
        %3949 = vdwg.mxu0
        %v3951 = vcombine.high %v3947, %v3947
        %v3953 = vunpack.c.l.s4 1966171168
        %v3954 = vunpack.c.0.s8 %v3953
        %v3955 = vlaneseq
        %v3956 = vshrl.u32 %v3955, 7
        %v3957 = vsub.s32 %v3954, %v3956
        %v3958 = vrot.slane %v3947, %v3957
        %v3960 = vunpack.c.l.s4 1966171168
        %v3961 = vunpack.c.0.s8 %v3960
        %v3962 = vlaneseq
        %v3963 = vshrl.u32 %v3962, 7
        %v3964 = vsub.s32 %v3961, %v3963
        %v3965 = vrot.slane %v3951, %v3964
        %v3966 = vcombine.high %v3958, %v3958
        %v3967 = vcombine.high %v3965, %v3965
        %v3969 = vunpack.c.l.s4 1966171168
        %v3970 = vunpack.c.0.s8 %v3969
        %v3971 = vlaneseq
        %v3972 = vshrl.u32 %v3971, 7
        %v3973 = vsub.s32 %v3970, %v3972
        %v3974 = vrot.slane %v3958, %v3973
        %v3976 = vunpack.c.l.s4 1966171168
        %v3977 = vunpack.c.0.s8 %v3976
        %v3978 = vlaneseq
        %v3979 = vshrl.u32 %v3978, 7
        %v3980 = vsub.s32 %v3977, %v3979
        %v3981 = vrot.slane %v3965, %v3980
        %v3983 = vunpack.c.l.s4 1966171168
        %v3984 = vunpack.c.0.s8 %v3983
        %v3985 = vlaneseq
        %v3986 = vshrl.u32 %v3985, 7
        %v3987 = vsub.s32 %v3984, %v3986
        %v3988 = vrot.slane %v3966, %v3987
        %v3990 = vunpack.c.l.s4 1966171168
        %v3991 = vunpack.c.0.s8 %v3990
        %v3992 = vlaneseq
        %v3993 = vshrl.u32 %v3992, 7
        %v3994 = vsub.s32 %v3991, %v3993
        %v3995 = vrot.slane %v3967, %v3994
        %v3996 = vcombine.high %v3974, %v3974
        %v3997 = vcombine.high %v3981, %v3981
        %v3998 = vcombine.high %v3988, %v3988
        %v3999 = vcombine.high %v3995, %v3995
        %v4000 = vlaneseq
        %v4001 = vshrl.u32 %v4000, 7
        %v4002 = vsub.s32 0, %v4001
        %v4003 = vrot.slane %v3974, %v4002
        %v4004 = vlaneseq
        %v4005 = vshrl.u32 %v4004, 7
        %v4006 = vsub.s32 0, %v4005
        %v4007 = vrot.slane %v3988, %v4006
        %v4008 = vlaneseq
        %v4009 = vshrl.u32 %v4008, 7
        %v4010 = vsub.s32 0, %v4009
        %v4011 = vrot.slane %v3996, %v4010
        %v4012 = vlaneseq
        %v4013 = vshrl.u32 %v4012, 7
        %v4014 = vsub.s32 0, %v4013
        %v4015 = vrot.slane %v3998, %v4014
        %v4016 = vlaneseq
        %v4017 = vshrl.u32 %v4016, 7
        %v4018 = vsub.s32 0, %v4017
        %v4019 = vrot.slane %v3981, %v4018
        %v4020 = vlaneseq
        %v4021 = vshrl.u32 %v4020, 7
        %v4022 = vsub.s32 0, %v4021
        %v4023 = vrot.slane %v3995, %v4022
        %v4024 = vlaneseq
        %v4025 = vshrl.u32 %v4024, 7
        %v4026 = vsub.s32 0, %v4025
        %v4027 = vrot.slane %v3997, %v4026
        %v4028 = vlaneseq
        %v4029 = vshrl.u32 %v4028, 7
        %v4030 = vsub.s32 0, %v4029
        %v4031 = vrot.slane %v3999, %v4030
        %4040 = vst.msk [vmem:[%s554 + $0x1e] sm:$0x3] %vm1917, %v4003
        %4041 = vst.msk [vmem:[%s554 + $0x3e] sm:$0x3] %vm1917, %v4007
        %4042 = vst.msk [vmem:[%s554 + $0x5e] sm:$0x3] %vm1917, %v4011
        %4043 = vst.msk [vmem:[%s554 + $0x7e] sm:$0x3] %vm1917, %v4015
        %4044 = vst.msk [vmem:[%s554 + $0x9e] sm:$0x3] %vm1917, %v4019
        %4045 = vst.msk [vmem:[%s554 + $0xbe] sm:$0x3] %vm1917, %v4023
        %4046 = vst.msk [vmem:[%s554 + $0xde] sm:$0x3] %vm1917, %v4027
        %4047 = vst.msk [vmem:[%s554 + $0xfe] sm:$0x3] %vm1917, %v4031
        %s4048 = sand.u32 %s328, 1
        %s4049 = scalar_lea.sflag [#allocation3], %s4048
        %s4050 = sand.u32 %s328, 1
        %s4051 = smul.addr %s4050, 256
        %s4052 = scalar_lea.vmem [#allocation2], %s4051
        // Predicated region
        $region65: #{tpu_custom_call.1} parent=63 // pred_check
          %p4053 = pneg %p338
        $region66: #{tpu_custom_call.1} parent=63 // pred_check_branch
          %4055 = sbr.rel (%p4053) target = $region68
        $region67: #{tpu_custom_call.1} parent=63 // pred_region
          #allocation5 [shape = 'u32[6]{0}', space=smem, size = 0x18, scoped, tag = 'DMA stride descriptor']
          %s4056 = smul.u32 4, %s30
          %s4058 = ssub.s32 4096, 4096
          %4059 = vsyncadd %s4049, %s4058
          %s4060 = smul.addr %s29, 64
          %s4061 = sadd.s32 %s4056, %s4060
          %s4062 = smul.addr %s4061, 128
          %s4063 = scalar_lea.hbm %s11, %s4062
          %s4065 = sshll.u32 1, 14
          %s4066 = sxor.u32 4294967295, %s4065
          %s4069 = sshll.u32 7, 18
          %s4070 = sxor.u32 4294967295, %s4069
          %s4071 = sand.u32 0, %s4070
          %s4073 = sor.u32 %s4071, 0
          %s4075 = sshll.u32 3, 24
          %s4076 = sxor.u32 4294967295, %s4075
          %s4077 = sand.u32 %s4073, %s4076
          %s4079 = sor.u32 %s4077, 0
          %s4080 = sshll.u32 %s4052, 4
          %s4081 = int_to_ptr.vmem [resolvable:$true] %s4080
          %4087 = sst [smem:[#allocation5]] 512
          %s4088 = scalar_lea.smem [#allocation5], 1
          %4089 = sst [smem:[%s4088]] 1024
          %s4090 = scalar_lea.smem [#allocation5], 2
          %4091 = sst [smem:[%s4090]] 4
          %s4092 = scalar_lea.smem [#allocation5], 3
          %4093 = sst [smem:[%s4092]] 128
          %s4094 = scalar_lea.smem [#allocation5], 4
          %4095 = sst [smem:[%s4094]] 128
          %s4096 = scalar_lea.smem [#allocation5], 5
          %4097 = sst [smem:[%s4096]] 8
          %4099 = dma.general %s4081, 4096, %s4063, %s4049, [#allocation4], [#allocation5], %s4079, 0
        $region68: #{tpu_custom_call.1} parent=63 // pred_fallthru
          _
      $region64: #{tpu_custom_call.1} parent=5 // pred_fallthru
        _
      %p4100 = scmp.le.s32.totalorder 2, %s20
      // Predicated region
      $region69: #{tpu_custom_call.1} parent=5 // pred_check
        %p4101 = pneg %p4100
      $region70: #{tpu_custom_call.1} parent=5 // pred_check_branch
        %4103 = sbr.rel (%p4101) target = $region72
      $region71: #{tpu_custom_call.1} parent=5 // pred_region
        %s4104 = ssub.s32 %s20, 2
        // Predicated region
        $region73: #{tpu_custom_call.1} parent=71 // pred_check
          %p4105 = pneg %p344
        $region74: #{tpu_custom_call.1} parent=71 // pred_check_branch
          %4107 = sbr.rel (%p4105) target = $region76
        $region75: #{tpu_custom_call.1} parent=71 // pred_region
          %s4108 = sand.u32 %s329, 1
          %s4109 = scalar_lea.sflag [#allocation3], %s4108
          %s4110 = sand.u32 %s329, 1
          %s4111 = smul.addr %s4110, 256
          %s4112 = scalar_lea.vmem [#allocation2], %s4111
          %4113 = dma.done %s4109, 4096
        $region76: #{tpu_custom_call.1} parent=71 // pred_fallthru
          _
      $region72: #{tpu_custom_call.1} parent=5 // pred_fallthru
        _
    $region6: #{tpu_custom_call.1} parent=1 // loop_footer
      %s24 = sadd.s32 1, %s20
    $region7: #{tpu_custom_call.1} parent=1 // loop_footer_branch
      %19 = sbr.rel target = $region3
    $region8: #{tpu_custom_call.1} parent=1 // loop_exit
      _
    %4114 = vsyncpa [#allocation3], 1
    %s4115 = scalar_lea.sflag [#allocation3], 1
    %4116 = vsyncpa %s4115, 1

</llo_original>
